<compile_context>
chip_gen: v6e
topology: v6e:2x2x1
jax: 0.10.0
libtpu: 0.0.40
codegen_flags: <defaults>
</compile_context>

<pallas_src>
import jax
import jax.numpy as jnp
from jax import lax
from jax.experimental import pallas as pl
from jax.experimental.pallas import tpu as pltpu


# ------------------------- static problem geometry -------------------------
H_IN = 16                 # input spatial (channels are fixed at 256 by the module)
H1 = H_IN // 2            # conv1 output spatial (pad=1, k=3, s=2) = 8
H2 = H1 // 2              # conv2 output spatial = 4
M1 = H1 * H1              # conv1 output pixels per image = 64
M2 = H2 * H2              # conv2 output pixels per image = 16
C_IN, C1, C2, N_CLS = 256, 128, 32, 2


# ---------------------------------------------------------------------------
# Fused kernel: conv1-matmul + bias + ReLU  ->  conv2 (9 in-VMEM tap matmuls)
#               + bias + ReLU  ->  global avg-pool  ->  fc(32 -> 2)
# One grid step == one image.
# ---------------------------------------------------------------------------
def _netd_fused_kernel(xcol_ref, w1_ref, b1_ref, w2_ref, b2_ref,
                       fcw_ref, fcb_ref, o_ref, y1_ref, lhs_ref):
    # ---- conv1 as one MXU matmul (bf16 operands, f32 accumulate) ------------
    y1 = jnp.dot(xcol_ref[0], w1_ref[...], preferred_element_type=jnp.float32)
    y1 = jnp.maximum(y1 + b1_ref[...], 0.0)          # folded-BN bias + ReLU (f32)
    y1_ref[...] = y1                                  # (M1, C1), parity-grouped rows

    # ---- conv2: 9 tap matmuls against the VMEM-resident conv1 output --------
    # conv1 rows are ordered  row = ci*M2 + u*H2 + v  with output pixel
    # (oh, ow) = (2u+p, 2v+q), ci = 2p+q.  conv2 output pixel (oh2, ow2) with
    # tap (kh, kw) needs conv1 pixel (2*oh2+kh-1, 2*ow2+kw-1)  (zero if outside),
    # which for a fixed tap lives in a single parity class and is a contiguous
    # 4-row block per (oh2).
    acc2 = jnp.zeros((M2, C2), jnp.float32)
    for kh in range(3):
        p = (kh + 1) % 2
        du = (kh - 1 - p) // 2                        # kh=0 -> -1, else 0
        for kw in range(3):
            q = (kw + 1) % 2
            dv = (kw - 1 - q) // 2                    # kw=0 -> -1, else 0
            ci = 2 * p + q
            tap = kh * 3 + kw

            if du == 0 and dv == 0:
                # whole parity-class block maps 1:1 onto the tap's lhs
                lhs = y1_ref[ci * M2:(ci + 1) * M2, :]
            else:
                lhs_ref[...] = jnp.zeros(lhs_ref.shape, lhs_ref.dtype)  # padding rows
                v_lo = max(0, -dv)                    # first valid ow2
                v_hi = min(H2 - 1, H2 - 1 - dv)       # last valid ow2
                nr = v_hi - v_lo + 1
                for oh2 in range(H2):
                    u = oh2 + du
                    if 0 <= u < H2:
                        src = ci * M2 + u * H2 + (v_lo + dv)
                        dst = oh2 * H2 + v_lo
                        lhs_ref[dst:dst + nr, :] = y1_ref[src:src + nr, :]
                lhs = lhs_ref[...]

            acc2 = acc2 + jnp.dot(
                lhs.astype(jnp.bfloat16),
                w2_ref[tap * C1:(tap + 1) * C1, :],
                preferred_element_type=jnp.float32)

    # ---- folded-BN bias + ReLU, global avg-pool, fc(32 -> 2) -----------------
    y2 = jnp.maximum(acc2 + b2_ref[...], 0.0)                     # (M2, C2) f32
    pooled = jnp.sum(y2, axis=0, keepdims=True) * (1.0 / M2)      # (1, C2)
    logits = jnp.dot(pooled, fcw_ref[...],
                     preferred_element_type=jnp.float32) + fcb_ref[...]
    o_ref[0] = logits                                             # (1, N_CLS)


# ---------------------------------------------------------------------------
# Host-side glue
# ---------------------------------------------------------------------------
def _im2col_conv1_parity(x_nhwc):
    """3x3 / stride-2 / pad-1 im2col. Per image, output-pixel rows are grouped by
    the (row, col) parity class of the output pixel so that the in-kernel conv2
    tap gather is contiguous.  Returns (N, H1*H1, 9*C_IN)."""
    N, H, W, C = x_nhwc.shape
    Ho, Wo = H // 2, W // 2
    xp = jnp.pad(x_nhwc, ((0, 0), (1, 1), (1, 1), (0, 0)))
    taps = [xp[:, kh:kh + 2 * Ho:2, kw:kw + 2 * Wo:2, :]
            for kh in range(3) for kw in range(3)]
    cols = jnp.stack(taps, axis=3)                    # (N, Ho, Wo, 9, C)
    groups = [cols[:, p::2, q::2].reshape(N, (Ho // 2) * (Wo // 2), 9 * C)
              for p in range(2) for q in range(2)]    # class order ci = 2p+q
    return jnp.concatenate(groups, axis=1)            # (N, Ho*Wo, 9*C)


def _fold_bn(gamma, beta, mean, var, eps=1e-5):
    scale = gamma / jnp.sqrt(var + eps)
    return scale, beta - mean * scale


def init_params(key):
    ks = jax.random.split(key, 12)
    conv1_w = jax.random.normal(ks[0], (C1, C_IN, 3, 3), jnp.float32) * (2.0 / (C_IN * 9)) ** 0.5
    conv2_w = jax.random.normal(ks[1], (C2, C1, 3, 3), jnp.float32) * (2.0 / (C1 * 9)) ** 0.5

    g1 = 1.0 + 0.1 * jax.random.normal(ks[2], (C1,), jnp.float32)
    b1 = 0.1 * jax.random.normal(ks[3], (C1,), jnp.float32)
    m1 = 0.05 * jax.random.normal(ks[4], (C1,), jnp.float32)
    v1 = 1.0 + 0.1 * jnp.abs(jax.random.normal(ks[5], (C1,), jnp.float32))
    s1, o1 = _fold_bn(g1, b1, m1, v1)

    g2 = 1.0 + 0.1 * jax.random.normal(ks[6], (C2,), jnp.float32)
    b2 = 0.1 * jax.random.normal(ks[7], (C2,), jnp.float32)
    m2 = 0.05 * jax.random.normal(ks[8], (C2,), jnp.float32)
    v2 = 1.0 + 0.1 * jnp.abs(jax.random.normal(ks[9], (C2,), jnp.float32))
    s2, o2 = _fold_bn(g2, b2, m2, v2)

    bound = 1.0 / (C2 ** 0.5)
    fc_w_t = jax.random.uniform(ks[10], (C2, N_CLS), jnp.float32, -bound, bound)  # (in, out)
    fc_b = jax.random.uniform(ks[11], (N_CLS,), jnp.float32, -bound, bound)

    return dict(conv1_w=conv1_w, conv2_w=conv2_w,
                bn1_scale=s1, bn1_bias=o1,
                bn2_scale=s2, bn2_bias=o2,
                fc_w_t=fc_w_t, fc_b=fc_b)


def netd_forward(x_nchw, params):
    x = jnp.transpose(x_nchw, (0, 2, 3, 1))           # NCHW -> NHWC
    N, H, W, Cin = x.shape
    assert (H, W, Cin) == (H_IN, H_IN, C_IN)

    x_col = _im2col_conv1_parity(x).astype(jnp.bfloat16)        # (N, M1, 9*C_IN)

    # Fold eval-mode BN scales into the conv weights (host-side constants).
    w1 = jnp.transpose(params["conv1_w"], (2, 3, 1, 0)).reshape(9 * C_IN, C1)
    w1 = (w1 * params["bn1_scale"][None, :]).astype(jnp.bfloat16)
    w2 = jnp.transpose(params["conv2_w"], (2, 3, 1, 0)).reshape(9 * C1, C2)
    w2 = (w2 * params["bn2_scale"][None, :]).astype(jnp.bfloat16)
    b1 = params["bn1_bias"].reshape(1, C1).astype(jnp.float32)
    b2 = params["bn2_bias"].reshape(1, C2).astype(jnp.float32)
    fcw = params["fc_w_t"].astype(jnp.float32)                   # (C2, N_CLS)
    fcb = params["fc_b"].reshape(1, N_CLS).astype(jnp.float32)

    out = pl.pallas_call(
        _netd_fused_kernel,
        out_shape=jax.ShapeDtypeStruct((N, 1, N_CLS), jnp.float32),
        grid_spec=pltpu.PrefetchScalarGridSpec(
            num_scalar_prefetch=0,
            grid=(N,),
            in_specs=[
                pl.BlockSpec((1, M1, 9 * C_IN), lambda n: (n, 0, 0)),   # im2col (per image)
                pl.BlockSpec((9 * C_IN, C1), lambda n: (0, 0)),         # w1 (BN folded)
                pl.BlockSpec((1, C1), lambda n: (0, 0)),                # bn1 bias
                pl.BlockSpec((9 * C1, C2), lambda n: (0, 0)),           # w2 (BN folded)
                pl.BlockSpec((1, C2), lambda n: (0, 0)),                # bn2 bias
                pl.BlockSpec((C2, N_CLS), lambda n: (0, 0)),            # fc weight (in,out)
                pl.BlockSpec((1, N_CLS), lambda n: (0, 0)),             # fc bias
            ],
            out_specs=pl.BlockSpec((1, 1, N_CLS), lambda n: (n, 0, 0)),
            scratch_shapes=[
                pltpu.VMEM((M1, C1), jnp.float32),    # conv1 output (parity-grouped rows)
                pltpu.VMEM((M2, C1), jnp.float32),    # per-tap conv2 im2col slice
            ],
        ),
        compiler_params=pltpu.CompilerParams(
            dimension_semantics=("parallel",)),       # batch-parallel (v7x 2 TCs)
    )(x_col, w1, b1, w2, b2, fcw, fcb)
    return out.reshape(N, N_CLS)


def ref_forward(x_nchw, params):
    """Pure-JAX f32 reference (XLA convs) for correctness checking."""
    def conv(x, w):
        return lax.conv_general_dilated(
            x, w, window_strides=(2, 2), padding=((1, 1), (1, 1)),
            dimension_numbers=("NCHW", "OIHW", "NCHW"))
    y = conv(x_nchw, params["conv1_w"])
    y = y * params["bn1_scale"][None, :, None, None] + params["bn1_bias"][None, :, None, None]
    y = jnp.maximum(y, 0.0)
    y = conv(y, params["conv2_w"])
    y = y * params["bn2_scale"][None, :, None, None] + params["bn2_bias"][None, :, None, None]
    y = jnp.maximum(y, 0.0)
    y = jnp.mean(y, axis=(2, 3))                      # (N, 32)
    return y @ params["fc_w_t"] + params["fc_b"]


if __name__ == "__main__":
    key = jax.random.PRNGKey(0)
    pkey, xkey = jax.random.split(key)
    params = init_params(pkey)
    # Channels are fixed by the module (input must be 256); small batch/spatial.
    x = jax.random.normal(xkey, (2, 256, 16, 16), jnp.float32)

    out = jax.jit(netd_forward)(x, params)
    out = jax.block_until_ready(out)

    ref = ref_forward(x, params)
    assert out.shape == (2, 2), out.shape
    assert jnp.all(jnp.isfinite(out))
    # bf16 MXU operands (f32 accumulation) vs the pure-f32 XLA reference.
    assert jnp.allclose(out, ref, atol=2e-2, rtol=2e-2), (out, ref)
    print("KERNEL_OK")
</pallas_src>

<mosaic_0001>
module attributes {stable_mosaic.version = 11 : i64} {
  func.func @_netd_fused_kernel(%arg0: i32, %arg1: memref<1x64x2304xbf16, #tpu.memory_space<vmem>>, %arg2: memref<2304x128xbf16, #tpu.memory_space<vmem>>, %arg3: memref<1x128xf32, #tpu.memory_space<vmem>>, %arg4: memref<1152x32xbf16, #tpu.memory_space<vmem>>, %arg5: memref<1x32xf32, #tpu.memory_space<vmem>>, %arg6: memref<32x2xf32, #tpu.memory_space<vmem>>, %arg7: memref<1x2xf32, #tpu.memory_space<vmem>>, %arg8: memref<1x1x2xf32, #tpu.memory_space<vmem>>, %arg9: memref<64x128xf32, #tpu.memory_space<vmem>>, %arg10: memref<16x128xf32, #tpu.memory_space<vmem>>) attributes {dimension_semantics = [#tpu.dimension_semantics<parallel>], iteration_bounds = array<i64: 2>, scalar_prefetch = 0 : i64, scratch_operands = 2 : i64, tpu.core_type = #tpu.core_type<tc>, window_params = [{transform_indices = @transform_0, window_bounds = array<i64: 1, 64, 2304>}, {pipeline_mode = #tpu.pipeline_mode<synchronous>, transform_indices = @transform_1, window_bounds = array<i64: 2304, 128>}, {pipeline_mode = #tpu.pipeline_mode<synchronous>, transform_indices = @transform_2, window_bounds = array<i64: 1, 128>}, {pipeline_mode = #tpu.pipeline_mode<synchronous>, transform_indices = @transform_3, window_bounds = array<i64: 1152, 32>}, {pipeline_mode = #tpu.pipeline_mode<synchronous>, transform_indices = @transform_4, window_bounds = array<i64: 1, 32>}, {pipeline_mode = #tpu.pipeline_mode<synchronous>, transform_indices = @transform_5, window_bounds = array<i64: 32, 2>}, {pipeline_mode = #tpu.pipeline_mode<synchronous>, transform_indices = @transform_6, window_bounds = array<i64: 1, 2>}, {transform_indices = @transform_7, window_bounds = array<i64: 1, 1, 2>}]} {
    %c0 = arith.constant 0 : index
    %c0_0 = arith.constant 0 : index
    %c0_1 = arith.constant 0 : index
    %0 = vector.load %arg1[%c0, %c0_0, %c0_1] : memref<1x64x2304xbf16, #tpu.memory_space<vmem>>, vector<1x64x2304xbf16>
    %1 = vector.shape_cast %0 : vector<1x64x2304xbf16> to vector<64x2304xbf16>
    %c0_2 = arith.constant 0 : index
    %c0_3 = arith.constant 0 : index
    %2 = vector.load %arg2[%c0_2, %c0_3] : memref<2304x128xbf16, #tpu.memory_space<vmem>>, vector<2304x128xbf16>
    %cst = arith.constant dense<0.000000e+00> : vector<64x128xf32>
    %3 = tpu.matmul %1, %2, %cst {dimension_numbers = #tpu.dot_dimension_numbers<[1], [0], [0], [1], [0, 0, 1, 1], [], []>} : vector<64x2304xbf16>, vector<2304x128xbf16>, vector<64x128xf32> -> vector<64x128xf32>
    %c0_4 = arith.constant 0 : index
    %c0_5 = arith.constant 0 : index
    %4 = vector.load %arg3[%c0_4, %c0_5] : memref<1x128xf32, #tpu.memory_space<vmem>>, vector<1x128xf32>
    %5 = vector.broadcast %4 : vector<1x128xf32> to vector<64x128xf32>
    %6 = arith.addf %3, %5 : vector<64x128xf32>
    %cst_6 = arith.constant 0.000000e+00 : f32
    %7 = vector.broadcast %cst_6 : f32 to vector<64x128xf32>
    %8 = arith.maximumf %6, %7 : vector<64x128xf32>
    %c0_7 = arith.constant 0 : index
    %c0_8 = arith.constant 0 : index
    %9 = vector.load %arg9[%c0_7, %c0_8] : memref<64x128xf32, #tpu.memory_space<vmem>>, vector<64x128xf32>
    tpu.vector_store %arg9[%c0_7, %c0_8], %8 {strides = array<i32>} : memref<64x128xf32, #tpu.memory_space<vmem>>, vector<64x128xf32>,
    %cst_9 = arith.constant 0.000000e+00 : f32
    %10 = vector.broadcast %cst_9 : f32 to vector<16x32xf32>
    %cst_10 = arith.constant 0.000000e+00 : f32
    %11 = vector.broadcast %cst_10 : f32 to vector<16x128xf32>
    %c0_11 = arith.constant 0 : index
    %c0_12 = arith.constant 0 : index
    %12 = vector.load %arg10[%c0_11, %c0_12] : memref<16x128xf32, #tpu.memory_space<vmem>>, vector<16x128xf32>
    tpu.vector_store %arg10[%c0_11, %c0_12], %11 {strides = array<i32>} : memref<16x128xf32, #tpu.memory_space<vmem>>, vector<16x128xf32>,
    %c48 = arith.constant 48 : index
    %c0_13 = arith.constant 0 : index
    %13 = vector.load %arg9[%c48, %c0_13] : memref<64x128xf32, #tpu.memory_space<vmem>>, vector<3x128xf32>
    %c5 = arith.constant 5 : index
    %c0_14 = arith.constant 0 : index
    %14 = vector.load %arg10[%c5, %c0_14] : memref<16x128xf32, #tpu.memory_space<vmem>>, vector<3x128xf32>
    tpu.vector_store %arg10[%c5, %c0_14], %13 {strides = array<i32>} : memref<16x128xf32, #tpu.memory_space<vmem>>, vector<3x128xf32>,
    %c52 = arith.constant 52 : index
    %c0_15 = arith.constant 0 : index
    %15 = vector.load %arg9[%c52, %c0_15] : memref<64x128xf32, #tpu.memory_space<vmem>>, vector<3x128xf32>
    %c9 = arith.constant 9 : index
    %c0_16 = arith.constant 0 : index
    %16 = vector.load %arg10[%c9, %c0_16] : memref<16x128xf32, #tpu.memory_space<vmem>>, vector<3x128xf32>
    tpu.vector_store %arg10[%c9, %c0_16], %15 {strides = array<i32>} : memref<16x128xf32, #tpu.memory_space<vmem>>, vector<3x128xf32>,
    %c56 = arith.constant 56 : index
    %c0_17 = arith.constant 0 : index
    %17 = vector.load %arg9[%c56, %c0_17] : memref<64x128xf32, #tpu.memory_space<vmem>>, vector<3x128xf32>
    %c13 = arith.constant 13 : index
    %c0_18 = arith.constant 0 : index
    %18 = vector.load %arg10[%c13, %c0_18] : memref<16x128xf32, #tpu.memory_space<vmem>>, vector<3x128xf32>
    tpu.vector_store %arg10[%c13, %c0_18], %17 {strides = array<i32>} : memref<16x128xf32, #tpu.memory_space<vmem>>, vector<3x128xf32>,
    %c0_19 = arith.constant 0 : index
    %c0_20 = arith.constant 0 : index
    %19 = vector.load %arg10[%c0_19, %c0_20] : memref<16x128xf32, #tpu.memory_space<vmem>>, vector<16x128xf32>
    %20 = arith.truncf %19 : vector<16x128xf32> to vector<16x128xbf16>
    %c0_21 = arith.constant 0 : index
    %c0_22 = arith.constant 0 : index
    %21 = vector.load %arg4[%c0_21, %c0_22] : memref<1152x32xbf16, #tpu.memory_space<vmem>>, vector<128x32xbf16>
    %cst_23 = arith.constant dense<0.000000e+00> : vector<16x32xf32>
    %22 = tpu.matmul %20, %21, %cst_23 {dimension_numbers = #tpu.dot_dimension_numbers<[1], [0], [0], [1], [0, 0, 1, 1], [], []>} : vector<16x128xbf16>, vector<128x32xbf16>, vector<16x32xf32> -> vector<16x32xf32>
    %23 = arith.addf %10, %22 : vector<16x32xf32>
    %cst_24 = arith.constant 0.000000e+00 : f32
    %24 = vector.broadcast %cst_24 : f32 to vector<16x128xf32>
    %c0_25 = arith.constant 0 : index
    %c0_26 = arith.constant 0 : index
    %25 = vector.load %arg10[%c0_25, %c0_26] : memref<16x128xf32, #tpu.memory_space<vmem>>, vector<16x128xf32>
    tpu.vector_store %arg10[%c0_25, %c0_26], %24 {strides = array<i32>} : memref<16x128xf32, #tpu.memory_space<vmem>>, vector<16x128xf32>,
    %c32 = arith.constant 32 : index
    %c0_27 = arith.constant 0 : index
    %26 = vector.load %arg9[%c32, %c0_27] : memref<64x128xf32, #tpu.memory_space<vmem>>, vector<4x128xf32>
    %c4 = arith.constant 4 : index
    %c0_28 = arith.constant 0 : index
    %27 = vector.load %arg10[%c4, %c0_28] : memref<16x128xf32, #tpu.memory_space<vmem>>, vector<4x128xf32>
    tpu.vector_store %arg10[%c4, %c0_28], %26 {strides = array<i32>} : memref<16x128xf32, #tpu.memory_space<vmem>>, vector<4x128xf32>,
    %c36 = arith.constant 36 : index
    %c0_29 = arith.constant 0 : index
    %28 = vector.load %arg9[%c36, %c0_29] : memref<64x128xf32, #tpu.memory_space<vmem>>, vector<4x128xf32>
    %c8 = arith.constant 8 : index
    %c0_30 = arith.constant 0 : index
    %29 = vector.load %arg10[%c8, %c0_30] : memref<16x128xf32, #tpu.memory_space<vmem>>, vector<4x128xf32>
    tpu.vector_store %arg10[%c8, %c0_30], %28 {strides = array<i32>} : memref<16x128xf32, #tpu.memory_space<vmem>>, vector<4x128xf32>,
    %c40 = arith.constant 40 : index
    %c0_31 = arith.constant 0 : index
    %30 = vector.load %arg9[%c40, %c0_31] : memref<64x128xf32, #tpu.memory_space<vmem>>, vector<4x128xf32>
    %c12 = arith.constant 12 : index
    %c0_32 = arith.constant 0 : index
    %31 = vector.load %arg10[%c12, %c0_32] : memref<16x128xf32, #tpu.memory_space<vmem>>, vector<4x128xf32>
    tpu.vector_store %arg10[%c12, %c0_32], %30 {strides = array<i32>} : memref<16x128xf32, #tpu.memory_space<vmem>>, vector<4x128xf32>,
    %c0_33 = arith.constant 0 : index
    %c0_34 = arith.constant 0 : index
    %32 = vector.load %arg10[%c0_33, %c0_34] : memref<16x128xf32, #tpu.memory_space<vmem>>, vector<16x128xf32>
    %33 = arith.truncf %32 : vector<16x128xf32> to vector<16x128xbf16>
    %c128 = arith.constant 128 : index
    %c0_35 = arith.constant 0 : index
    %34 = vector.load %arg4[%c128, %c0_35] : memref<1152x32xbf16, #tpu.memory_space<vmem>>, vector<128x32xbf16>
    %cst_36 = arith.constant dense<0.000000e+00> : vector<16x32xf32>
    %35 = tpu.matmul %33, %34, %cst_36 {dimension_numbers = #tpu.dot_dimension_numbers<[1], [0], [0], [1], [0, 0, 1, 1], [], []>} : vector<16x128xbf16>, vector<128x32xbf16>, vector<16x32xf32> -> vector<16x32xf32>
    %36 = arith.addf %23, %35 : vector<16x32xf32>
    %cst_37 = arith.constant 0.000000e+00 : f32
    %37 = vector.broadcast %cst_37 : f32 to vector<16x128xf32>
    %c0_38 = arith.constant 0 : index
    %c0_39 = arith.constant 0 : index
    %38 = vector.load %arg10[%c0_38, %c0_39] : memref<16x128xf32, #tpu.memory_space<vmem>>, vector<16x128xf32>
    tpu.vector_store %arg10[%c0_38, %c0_39], %37 {strides = array<i32>} : memref<16x128xf32, #tpu.memory_space<vmem>>, vector<16x128xf32>,
    %c48_40 = arith.constant 48 : index
    %c0_41 = arith.constant 0 : index
    %39 = vector.load %arg9[%c48_40, %c0_41] : memref<64x128xf32, #tpu.memory_space<vmem>>, vector<4x128xf32>
    %c4_42 = arith.constant 4 : index
    %c0_43 = arith.constant 0 : index
    %40 = vector.load %arg10[%c4_42, %c0_43] : memref<16x128xf32, #tpu.memory_space<vmem>>, vector<4x128xf32>
    tpu.vector_store %arg10[%c4_42, %c0_43], %39 {strides = array<i32>} : memref<16x128xf32, #tpu.memory_space<vmem>>, vector<4x128xf32>,
    %c52_44 = arith.constant 52 : index
    %c0_45 = arith.constant 0 : index
    %41 = vector.load %arg9[%c52_44, %c0_45] : memref<64x128xf32, #tpu.memory_space<vmem>>, vector<4x128xf32>
    %c8_46 = arith.constant 8 : index
    %c0_47 = arith.constant 0 : index
    %42 = vector.load %arg10[%c8_46, %c0_47] : memref<16x128xf32, #tpu.memory_space<vmem>>, vector<4x128xf32>
    tpu.vector_store %arg10[%c8_46, %c0_47], %41 {strides = array<i32>} : memref<16x128xf32, #tpu.memory_space<vmem>>, vector<4x128xf32>,
    %c56_48 = arith.constant 56 : index
    %c0_49 = arith.constant 0 : index
    %43 = vector.load %arg9[%c56_48, %c0_49] : memref<64x128xf32, #tpu.memory_space<vmem>>, vector<4x128xf32>
    %c12_50 = arith.constant 12 : index
    %c0_51 = arith.constant 0 : index
    %44 = vector.load %arg10[%c12_50, %c0_51] : memref<16x128xf32, #tpu.memory_space<vmem>>, vector<4x128xf32>
    tpu.vector_store %arg10[%c12_50, %c0_51], %43 {strides = array<i32>} : memref<16x128xf32, #tpu.memory_space<vmem>>, vector<4x128xf32>,
    %c0_52 = arith.constant 0 : index
    %c0_53 = arith.constant 0 : index
    %45 = vector.load %arg10[%c0_52, %c0_53] : memref<16x128xf32, #tpu.memory_space<vmem>>, vector<16x128xf32>
    %46 = arith.truncf %45 : vector<16x128xf32> to vector<16x128xbf16>
    %c256 = arith.constant 256 : index
    %c0_54 = arith.constant 0 : index
    %47 = vector.load %arg4[%c256, %c0_54] : memref<1152x32xbf16, #tpu.memory_space<vmem>>, vector<128x32xbf16>
    %cst_55 = arith.constant dense<0.000000e+00> : vector<16x32xf32>
    %48 = tpu.matmul %46, %47, %cst_55 {dimension_numbers = #tpu.dot_dimension_numbers<[1], [0], [0], [1], [0, 0, 1, 1], [], []>} : vector<16x128xbf16>, vector<128x32xbf16>, vector<16x32xf32> -> vector<16x32xf32>
    %49 = arith.addf %36, %48 : vector<16x32xf32>
    %cst_56 = arith.constant 0.000000e+00 : f32
    %50 = vector.broadcast %cst_56 : f32 to vector<16x128xf32>
    %c0_57 = arith.constant 0 : index
    %c0_58 = arith.constant 0 : index
    %51 = vector.load %arg10[%c0_57, %c0_58] : memref<16x128xf32, #tpu.memory_space<vmem>>, vector<16x128xf32>
    tpu.vector_store %arg10[%c0_57, %c0_58], %50 {strides = array<i32>} : memref<16x128xf32, #tpu.memory_space<vmem>>, vector<16x128xf32>,
    %c16 = arith.constant 16 : index
    %c0_59 = arith.constant 0 : index
    %52 = vector.load %arg9[%c16, %c0_59] : memref<64x128xf32, #tpu.memory_space<vmem>>, vector<3x128xf32>
    %c1 = arith.constant 1 : index
    %c0_60 = arith.constant 0 : index
    %53 = vector.load %arg10[%c1, %c0_60] : memref<16x128xf32, #tpu.memory_space<vmem>>, vector<3x128xf32>
    tpu.vector_store %arg10[%c1, %c0_60], %52 {strides = array<i32>} : memref<16x128xf32, #tpu.memory_space<vmem>>, vector<3x128xf32>,
    %c20 = arith.constant 20 : index
    %c0_61 = arith.constant 0 : index
    %54 = vector.load %arg9[%c20, %c0_61] : memref<64x128xf32, #tpu.memory_space<vmem>>, vector<3x128xf32>
    %c5_62 = arith.constant 5 : index
    %c0_63 = arith.constant 0 : index
    %55 = vector.load %arg10[%c5_62, %c0_63] : memref<16x128xf32, #tpu.memory_space<vmem>>, vector<3x128xf32>
    tpu.vector_store %arg10[%c5_62, %c0_63], %54 {strides = array<i32>} : memref<16x128xf32, #tpu.memory_space<vmem>>, vector<3x128xf32>,
    %c24 = arith.constant 24 : index
    %c0_64 = arith.constant 0 : index
    %56 = vector.load %arg9[%c24, %c0_64] : memref<64x128xf32, #tpu.memory_space<vmem>>, vector<3x128xf32>
    %c9_65 = arith.constant 9 : index
    %c0_66 = arith.constant 0 : index
    %57 = vector.load %arg10[%c9_65, %c0_66] : memref<16x128xf32, #tpu.memory_space<vmem>>, vector<3x128xf32>
    tpu.vector_store %arg10[%c9_65, %c0_66], %56 {strides = array<i32>} : memref<16x128xf32, #tpu.memory_space<vmem>>, vector<3x128xf32>,
    %c28 = arith.constant 28 : index
    %c0_67 = arith.constant 0 : index
    %58 = vector.load %arg9[%c28, %c0_67] : memref<64x128xf32, #tpu.memory_space<vmem>>, vector<3x128xf32>
    %c13_68 = arith.constant 13 : index
    %c0_69 = arith.constant 0 : index
    %59 = vector.load %arg10[%c13_68, %c0_69] : memref<16x128xf32, #tpu.memory_space<vmem>>, vector<3x128xf32>
    tpu.vector_store %arg10[%c13_68, %c0_69], %58 {strides = array<i32>} : memref<16x128xf32, #tpu.memory_space<vmem>>, vector<3x128xf32>,
    %c0_70 = arith.constant 0 : index
    %c0_71 = arith.constant 0 : index
    %60 = vector.load %arg10[%c0_70, %c0_71] : memref<16x128xf32, #tpu.memory_space<vmem>>, vector<16x128xf32>
    %61 = arith.truncf %60 : vector<16x128xf32> to vector<16x128xbf16>
    %c384 = arith.constant 384 : index
    %c0_72 = arith.constant 0 : index
    %62 = vector.load %arg4[%c384, %c0_72] : memref<1152x32xbf16, #tpu.memory_space<vmem>>, vector<128x32xbf16>
    %cst_73 = arith.constant dense<0.000000e+00> : vector<16x32xf32>
    %63 = tpu.matmul %61, %62, %cst_73 {dimension_numbers = #tpu.dot_dimension_numbers<[1], [0], [0], [1], [0, 0, 1, 1], [], []>} : vector<16x128xbf16>, vector<128x32xbf16>, vector<16x32xf32> -> vector<16x32xf32>
    %64 = arith.addf %49, %63 : vector<16x32xf32>
    %c0_74 = arith.constant 0 : index
    %c0_75 = arith.constant 0 : index
    %65 = vector.load %arg9[%c0_74, %c0_75] : memref<64x128xf32, #tpu.memory_space<vmem>>, vector<16x128xf32>
    %66 = arith.truncf %65 : vector<16x128xf32> to vector<16x128xbf16>
    %c512 = arith.constant 512 : index
    %c0_76 = arith.constant 0 : index
    %67 = vector.load %arg4[%c512, %c0_76] : memref<1152x32xbf16, #tpu.memory_space<vmem>>, vector<128x32xbf16>
    %cst_77 = arith.constant dense<0.000000e+00> : vector<16x32xf32>
    %68 = tpu.matmul %66, %67, %cst_77 {dimension_numbers = #tpu.dot_dimension_numbers<[1], [0], [0], [1], [0, 0, 1, 1], [], []>} : vector<16x128xbf16>, vector<128x32xbf16>, vector<16x32xf32> -> vector<16x32xf32>
    %69 = arith.addf %64, %68 : vector<16x32xf32>
    %c16_78 = arith.constant 16 : index
    %c0_79 = arith.constant 0 : index
    %70 = vector.load %arg9[%c16_78, %c0_79] : memref<64x128xf32, #tpu.memory_space<vmem>>, vector<16x128xf32>
    %71 = arith.truncf %70 : vector<16x128xf32> to vector<16x128xbf16>
    %c640 = arith.constant 640 : index
    %c0_80 = arith.constant 0 : index
    %72 = vector.load %arg4[%c640, %c0_80] : memref<1152x32xbf16, #tpu.memory_space<vmem>>, vector<128x32xbf16>
    %cst_81 = arith.constant dense<0.000000e+00> : vector<16x32xf32>
    %73 = tpu.matmul %71, %72, %cst_81 {dimension_numbers = #tpu.dot_dimension_numbers<[1], [0], [0], [1], [0, 0, 1, 1], [], []>} : vector<16x128xbf16>, vector<128x32xbf16>, vector<16x32xf32> -> vector<16x32xf32>
    %74 = arith.addf %69, %73 : vector<16x32xf32>
    %cst_82 = arith.constant 0.000000e+00 : f32
    %75 = vector.broadcast %cst_82 : f32 to vector<16x128xf32>
    %c0_83 = arith.constant 0 : index
    %c0_84 = arith.constant 0 : index
    %76 = vector.load %arg10[%c0_83, %c0_84] : memref<16x128xf32, #tpu.memory_space<vmem>>, vector<16x128xf32>
    tpu.vector_store %arg10[%c0_83, %c0_84], %75 {strides = array<i32>} : memref<16x128xf32, #tpu.memory_space<vmem>>, vector<16x128xf32>,
    %c48_85 = arith.constant 48 : index
    %c0_86 = arith.constant 0 : index
    %77 = vector.load %arg9[%c48_85, %c0_86] : memref<64x128xf32, #tpu.memory_space<vmem>>, vector<3x128xf32>
    %c1_87 = arith.constant 1 : index
    %c0_88 = arith.constant 0 : index
    %78 = vector.load %arg10[%c1_87, %c0_88] : memref<16x128xf32, #tpu.memory_space<vmem>>, vector<3x128xf32>
    tpu.vector_store %arg10[%c1_87, %c0_88], %77 {strides = array<i32>} : memref<16x128xf32, #tpu.memory_space<vmem>>, vector<3x128xf32>,
    %c52_89 = arith.constant 52 : index
    %c0_90 = arith.constant 0 : index
    %79 = vector.load %arg9[%c52_89, %c0_90] : memref<64x128xf32, #tpu.memory_space<vmem>>, vector<3x128xf32>
    %c5_91 = arith.constant 5 : index
    %c0_92 = arith.constant 0 : index
    %80 = vector.load %arg10[%c5_91, %c0_92] : memref<16x128xf32, #tpu.memory_space<vmem>>, vector<3x128xf32>
    tpu.vector_store %arg10[%c5_91, %c0_92], %79 {strides = array<i32>} : memref<16x128xf32, #tpu.memory_space<vmem>>, vector<3x128xf32>,
    %c56_93 = arith.constant 56 : index
    %c0_94 = arith.constant 0 : index
    %81 = vector.load %arg9[%c56_93, %c0_94] : memref<64x128xf32, #tpu.memory_space<vmem>>, vector<3x128xf32>
    %c9_95 = arith.constant 9 : index
    %c0_96 = arith.constant 0 : index
    %82 = vector.load %arg10[%c9_95, %c0_96] : memref<16x128xf32, #tpu.memory_space<vmem>>, vector<3x128xf32>
    tpu.vector_store %arg10[%c9_95, %c0_96], %81 {strides = array<i32>} : memref<16x128xf32, #tpu.memory_space<vmem>>, vector<3x128xf32>,
    %c60 = arith.constant 60 : index
    %c0_97 = arith.constant 0 : index
    %83 = vector.load %arg9[%c60, %c0_97] : memref<64x128xf32, #tpu.memory_space<vmem>>, vector<3x128xf32>
    %c13_98 = arith.constant 13 : index
    %c0_99 = arith.constant 0 : index
    %84 = vector.load %arg10[%c13_98, %c0_99] : memref<16x128xf32, #tpu.memory_space<vmem>>, vector<3x128xf32>
    tpu.vector_store %arg10[%c13_98, %c0_99], %83 {strides = array<i32>} : memref<16x128xf32, #tpu.memory_space<vmem>>, vector<3x128xf32>,
    %c0_100 = arith.constant 0 : index
    %c0_101 = arith.constant 0 : index
    %85 = vector.load %arg10[%c0_100, %c0_101] : memref<16x128xf32, #tpu.memory_space<vmem>>, vector<16x128xf32>
    %86 = arith.truncf %85 : vector<16x128xf32> to vector<16x128xbf16>
    %c768 = arith.constant 768 : index
    %c0_102 = arith.constant 0 : index
    %87 = vector.load %arg4[%c768, %c0_102] : memref<1152x32xbf16, #tpu.memory_space<vmem>>, vector<128x32xbf16>
    %cst_103 = arith.constant dense<0.000000e+00> : vector<16x32xf32>
    %88 = tpu.matmul %86, %87, %cst_103 {dimension_numbers = #tpu.dot_dimension_numbers<[1], [0], [0], [1], [0, 0, 1, 1], [], []>} : vector<16x128xbf16>, vector<128x32xbf16>, vector<16x32xf32> -> vector<16x32xf32>
    %89 = arith.addf %74, %88 : vector<16x32xf32>
    %c32_104 = arith.constant 32 : index
    %c0_105 = arith.constant 0 : index
    %90 = vector.load %arg9[%c32_104, %c0_105] : memref<64x128xf32, #tpu.memory_space<vmem>>, vector<16x128xf32>
    %91 = arith.truncf %90 : vector<16x128xf32> to vector<16x128xbf16>
    %c896 = arith.constant 896 : index
    %c0_106 = arith.constant 0 : index
    %92 = vector.load %arg4[%c896, %c0_106] : memref<1152x32xbf16, #tpu.memory_space<vmem>>, vector<128x32xbf16>
    %cst_107 = arith.constant dense<0.000000e+00> : vector<16x32xf32>
    %93 = tpu.matmul %91, %92, %cst_107 {dimension_numbers = #tpu.dot_dimension_numbers<[1], [0], [0], [1], [0, 0, 1, 1], [], []>} : vector<16x128xbf16>, vector<128x32xbf16>, vector<16x32xf32> -> vector<16x32xf32>
    %94 = arith.addf %89, %93 : vector<16x32xf32>
    %c48_108 = arith.constant 48 : index
    %c0_109 = arith.constant 0 : index
    %95 = vector.load %arg9[%c48_108, %c0_109] : memref<64x128xf32, #tpu.memory_space<vmem>>, vector<16x128xf32>
    %96 = arith.truncf %95 : vector<16x128xf32> to vector<16x128xbf16>
    %c1024 = arith.constant 1024 : index
    %c0_110 = arith.constant 0 : index
    %97 = vector.load %arg4[%c1024, %c0_110] : memref<1152x32xbf16, #tpu.memory_space<vmem>>, vector<128x32xbf16>
    %cst_111 = arith.constant dense<0.000000e+00> : vector<16x32xf32>
    %98 = tpu.matmul %96, %97, %cst_111 {dimension_numbers = #tpu.dot_dimension_numbers<[1], [0], [0], [1], [0, 0, 1, 1], [], []>} : vector<16x128xbf16>, vector<128x32xbf16>, vector<16x32xf32> -> vector<16x32xf32>
    %99 = arith.addf %94, %98 : vector<16x32xf32>
    %c0_112 = arith.constant 0 : index
    %c0_113 = arith.constant 0 : index
    %100 = vector.load %arg5[%c0_112, %c0_113] : memref<1x32xf32, #tpu.memory_space<vmem>>, vector<1x32xf32>
    %101 = vector.broadcast %100 : vector<1x32xf32> to vector<16x32xf32>
    %102 = arith.addf %99, %101 : vector<16x32xf32>
    %cst_114 = arith.constant 0.000000e+00 : f32
    %103 = vector.broadcast %cst_114 : f32 to vector<16x32xf32>
    %104 = arith.maximumf %102, %103 : vector<16x32xf32>
    %cst_115 = arith.constant dense<0.000000e+00> : vector<32xf32>
    %105 = vector.multi_reduction <add>, %104, %cst_115 [0] : vector<16x32xf32> to vector<32xf32>
    %106 = vector.shape_cast %105 : vector<32xf32> to vector<1x32xf32>
    %cst_116 = arith.constant 6.250000e-02 : f32
    %107 = vector.broadcast %cst_116 : f32 to vector<1x32xf32>
    %108 = arith.mulf %106, %107 : vector<1x32xf32>
    %c0_117 = arith.constant 0 : index
    %c0_118 = arith.constant 0 : index
    %109 = vector.load %arg6[%c0_117, %c0_118] : memref<32x2xf32, #tpu.memory_space<vmem>>, vector<32x2xf32>
    %cst_119 = arith.constant dense<0.000000e+00> : vector<1x2xf32>
    %110 = tpu.matmul %108, %109, %cst_119 {dimension_numbers = #tpu.dot_dimension_numbers<[1], [0], [0], [1], [0, 0, 1, 1], [], []>} : vector<1x32xf32>, vector<32x2xf32>, vector<1x2xf32> -> vector<1x2xf32>
    %c0_120 = arith.constant 0 : index
    %c0_121 = arith.constant 0 : index
    %111 = vector.load %arg7[%c0_120, %c0_121] : memref<1x2xf32, #tpu.memory_space<vmem>>, vector<1x2xf32>
    %112 = arith.addf %110, %111 : vector<1x2xf32>
    %c0_122 = arith.constant 0 : index
    %c0_123 = arith.constant 0 : index
    %c0_124 = arith.constant 0 : index
    %113 = vector.load %arg8[%c0_122, %c0_123, %c0_124] : memref<1x1x2xf32, #tpu.memory_space<vmem>>, vector<1x1x2xf32>
    %114 = vector.shape_cast %113 : vector<1x1x2xf32> to vector<1x2xf32>
    %115 = vector.shape_cast %112 : vector<1x2xf32> to vector<1x1x2xf32>
    tpu.vector_store %arg8[%c0_122, %c0_123, %c0_124], %115 {strides = array<i32>} : memref<1x1x2xf32, #tpu.memory_space<vmem>>, vector<1x1x2xf32>,
    return
  }
  func.func @transform_0(%arg0: i32) -> (i32, i32, i32) {
    %c0_i32 = arith.constant 0 : i32
    %c0_i32_0 = arith.constant 0 : i32
    %c0_i32_1 = arith.constant 0 : i32
    return %arg0, %c0_i32, %c0_i32_0 : i32, i32, i32
  }
  func.func @transform_1(%arg0: i32) -> (i32, i32) {
    %c0_i32 = arith.constant 0 : i32
    %c0_i32_0 = arith.constant 0 : i32
    %c0_i32_1 = arith.constant 0 : i32
    return %c0_i32, %c0_i32_0 : i32, i32
  }
  func.func @transform_2(%arg0: i32) -> (i32, i32) {
    %c0_i32 = arith.constant 0 : i32
    %c0_i32_0 = arith.constant 0 : i32
    %c0_i32_1 = arith.constant 0 : i32
    return %c0_i32, %c0_i32_0 : i32, i32
  }
  func.func @transform_3(%arg0: i32) -> (i32, i32) {
    %c0_i32 = arith.constant 0 : i32
    %c0_i32_0 = arith.constant 0 : i32
    %c0_i32_1 = arith.constant 0 : i32
    return %c0_i32, %c0_i32_0 : i32, i32
  }
  func.func @transform_4(%arg0: i32) -> (i32, i32) {
    %c0_i32 = arith.constant 0 : i32
    %c0_i32_0 = arith.constant 0 : i32
    %c0_i32_1 = arith.constant 0 : i32
    return %c0_i32, %c0_i32_0 : i32, i32
  }
  func.func @transform_5(%arg0: i32) -> (i32, i32) {
    %c0_i32 = arith.constant 0 : i32
    %c0_i32_0 = arith.constant 0 : i32
    %c0_i32_1 = arith.constant 0 : i32
    return %c0_i32, %c0_i32_0 : i32, i32
  }
  func.func @transform_6(%arg0: i32) -> (i32, i32) {
    %c0_i32 = arith.constant 0 : i32
    %c0_i32_0 = arith.constant 0 : i32
    %c0_i32_1 = arith.constant 0 : i32
    return %c0_i32, %c0_i32_0 : i32, i32
  }
  func.func @transform_7(%arg0: i32) -> (i32, i32, i32) {
    %c0_i32 = arith.constant 0 : i32
    %c0_i32_0 = arith.constant 0 : i32
    %c0_i32_1 = arith.constant 0 : i32
    return %arg0, %c0_i32, %c0_i32_0 : i32, i32, i32
  }
}

</mosaic_0001>

<llo_original>
// kernel: netd_forward.1
$region0: #{netd_forward.1}
  #allocation0 [shape = 'u32[]', space=smem, size = 0x4, offset = 0x4, fixed_abs, tag = 'smem constant byte address 0x4 - core index']
  #allocation1 [shape = 'u32[144,128]{1,0:T(1,128)}', space=vmem, size = 0x12000, scoped, tag = 'internal scratch']
  #allocation2 [shape = 'f32[64,128]{1,0:T(8,128)}', space=vmem, size = 0x8000, scoped, tag = 'scratch operand']
  #allocation3 [shape = 'f32[16,128]{1,0:T(8,128)}', space=vmem, size = 0x2000, scoped, tag = 'scratch operand']
  %s0 = inlined_call_operand.vmem [shape: bf16[2,64,2304], index: 0, kind: input, shape index: {}]
  %s1 = inlined_call_operand.vmem [shape: bf16[2304,128], index: 1, kind: input, shape index: {}]
  %s2 = inlined_call_operand.vmem [shape: f32[1,128], index: 2, kind: input, shape index: {}]
  %s3 = inlined_call_operand.vmem [shape: bf16[1152,32], index: 3, kind: input, shape index: {}]
  %s4 = inlined_call_operand.vmem [shape: f32[1,32], index: 4, kind: input, shape index: {}]
  %s5 = inlined_call_operand.vmem [shape: f32[32,2], index: 5, kind: input, shape index: {}]
  %s6 = inlined_call_operand.vmem [shape: f32[1,2], index: 6, kind: input, shape index: {}]
  %s7 = inlined_call_operand.hbm [shape: f32[2,1,2], index: 7, kind: output, shape index: {}]
  %s8 = sld [smem:[#allocation0]]
  $region61: #{netd_forward.1} parent=0
    _
  %s10 = ssub.s32 1, %s8
  %s11 = scalar_select 0, %s10, %s8
  $region1: #{netd_forward.1} parent=0
    #allocation4 [shape = 'u8[1024]{0}', space=vmem, size = 0x400, scoped, tag = 'output window, operand 0']
    #allocation5 [shape = 's32[2]{0}', space=sflag, size = 0x8, scoped, tag = 'scoped memory for netd_forward.1']
    %12 = vsyncpa [#allocation5], 0
    %s13 = scalar_lea.sflag [#allocation5], 1
    %14 = vsyncpa %s13, 0
    loop: start=0, step=1, limit=4
    $region2: #{netd_forward.1} parent=1 // loop_pre_header
      _
    $region3: #{netd_forward.1} parent=1 // loop_header
      %s16 = sphi 0, %s20
      %p17 = scmp.ge.s32.totalorder %s16, 4
      %s26 = sphi 0, %s28
      %s29 = sphi 0, %s26
      %s30 = sphi 0, %s29
      %s46 = sphi 0, %s30
      %s50 = sphi 0, %s50
      %s52 = sphi 0, %s50
      %s53 = sphi 0, %s52
      %s67 = sphi 0, %s53
      %s71 = sphi 0, %s71
      %s73 = sphi 0, %s71
      %s74 = sphi 0, %s73
      %s88 = sphi 0, %s74
      %s92 = sphi 0, %s92
      %s94 = sphi 0, %s92
      %s95 = sphi 0, %s94
      %s109 = sphi 0, %s95
      %s113 = sphi 0, %s113
      %s115 = sphi 0, %s113
      %s116 = sphi 0, %s115
      %s130 = sphi 0, %s116
      %s134 = sphi 0, %s134
      %s136 = sphi 0, %s134
      %s137 = sphi 0, %s136
      %s151 = sphi 0, %s137
      %s155 = sphi 0, %s155
      %s157 = sphi 0, %s155
      %s158 = sphi 0, %s157
      %s172 = sphi 0, %s158
      %s178 = sphi 0, %s180
      %s181 = sphi 0, %s178
      %s182 = sphi 0, %s181
      %s198 = sphi 0, %s182
    $region4: #{netd_forward.1} parent=1 // loop_header_branch
      %19 = sbr.rel (%p17) target = $region8
    $region5: #{netd_forward.1} parent=1 // loop_body
      %s21 = ssub.s32 %s16, 1
      %s22 = ssub.s32 %s16, 2
      %s23 = sadd.s32 %s16, 1
      %s24 = ssub.s32 %s16, %s23
      %p25 = scmp.eq.s32.totalorder %s24, 0
      %s27 = sadd.s32 %s26, 1
      %s28 = scalar_select %p25, %s26, %s27
      %p31 = pneg %p25
      %p32 = scmp.eq.s32.totalorder %s16, 1
      %p33 = por %p31, %p32
      %p34 = scmp.ne.s32.totalorder %s26, %s29
      %p35 = scmp.eq.s32.totalorder %s16, 0
      %p36 = por %p34, %p35
      %p37 = scmp.ne.s32.totalorder %s26, %s29
      %p38 = scmp.eq.s32.totalorder %s21, 1
      %p39 = por %p37, %p38
      %p40 = scmp.ne.s32.totalorder %s29, %s30
      %p41 = scmp.eq.s32.totalorder %s21, 0
      %p42 = por %p40, %p41
      %p43 = scmp.ne.s32.totalorder %s29, %s30
      %p44 = scmp.eq.s32.totalorder %s22, 1
      %p45 = por %p43, %p44
      %p47 = scmp.ne.s32.totalorder %s30, %s46
      %p48 = scmp.eq.s32.totalorder %s22, 0
      %p49 = por %p47, %p48
      %s51 = sadd.s32 %s50, 1
      %p54 = scmp.eq.s32.totalorder %s16, 1
      %p55 = scmp.ne.s32.totalorder %s50, %s52
      %p56 = scmp.eq.s32.totalorder %s16, 0
      %p57 = por %p55, %p56
      %p58 = scmp.ne.s32.totalorder %s50, %s52
      %p59 = scmp.eq.s32.totalorder %s21, 1
      %p60 = por %p58, %p59
      %p61 = scmp.ne.s32.totalorder %s52, %s53
      %p62 = scmp.eq.s32.totalorder %s21, 0
      %p63 = por %p61, %p62
      %p64 = scmp.ne.s32.totalorder %s52, %s53
      %p65 = scmp.eq.s32.totalorder %s22, 1
      %p66 = por %p64, %p65
      %p68 = scmp.ne.s32.totalorder %s53, %s67
      %p69 = scmp.eq.s32.totalorder %s22, 0
      %p70 = por %p68, %p69
      %s72 = sadd.s32 %s71, 1
      %p75 = scmp.eq.s32.totalorder %s16, 1
      %p76 = scmp.ne.s32.totalorder %s71, %s73
      %p77 = scmp.eq.s32.totalorder %s16, 0
      %p78 = por %p76, %p77
      %p79 = scmp.ne.s32.totalorder %s71, %s73
      %p80 = scmp.eq.s32.totalorder %s21, 1
      %p81 = por %p79, %p80
      %p82 = scmp.ne.s32.totalorder %s73, %s74
      %p83 = scmp.eq.s32.totalorder %s21, 0
      %p84 = por %p82, %p83
      %p85 = scmp.ne.s32.totalorder %s73, %s74
      %p86 = scmp.eq.s32.totalorder %s22, 1
      %p87 = por %p85, %p86
      %p89 = scmp.ne.s32.totalorder %s74, %s88
      %p90 = scmp.eq.s32.totalorder %s22, 0
      %p91 = por %p89, %p90
      %s93 = sadd.s32 %s92, 1
      %p96 = scmp.eq.s32.totalorder %s16, 1
      %p97 = scmp.ne.s32.totalorder %s92, %s94
      %p98 = scmp.eq.s32.totalorder %s16, 0
      %p99 = por %p97, %p98
      %p100 = scmp.ne.s32.totalorder %s92, %s94
      %p101 = scmp.eq.s32.totalorder %s21, 1
      %p102 = por %p100, %p101
      %p103 = scmp.ne.s32.totalorder %s94, %s95
      %p104 = scmp.eq.s32.totalorder %s21, 0
      %p105 = por %p103, %p104
      %p106 = scmp.ne.s32.totalorder %s94, %s95
      %p107 = scmp.eq.s32.totalorder %s22, 1
      %p108 = por %p106, %p107
      %p110 = scmp.ne.s32.totalorder %s95, %s109
      %p111 = scmp.eq.s32.totalorder %s22, 0
      %p112 = por %p110, %p111
      %s114 = sadd.s32 %s113, 1
      %p117 = scmp.eq.s32.totalorder %s16, 1
      %p118 = scmp.ne.s32.totalorder %s113, %s115
      %p119 = scmp.eq.s32.totalorder %s16, 0
      %p120 = por %p118, %p119
      %p121 = scmp.ne.s32.totalorder %s113, %s115
      %p122 = scmp.eq.s32.totalorder %s21, 1
      %p123 = por %p121, %p122
      %p124 = scmp.ne.s32.totalorder %s115, %s116
      %p125 = scmp.eq.s32.totalorder %s21, 0
      %p126 = por %p124, %p125
      %p127 = scmp.ne.s32.totalorder %s115, %s116
      %p128 = scmp.eq.s32.totalorder %s22, 1
      %p129 = por %p127, %p128
      %p131 = scmp.ne.s32.totalorder %s116, %s130
      %p132 = scmp.eq.s32.totalorder %s22, 0
      %p133 = por %p131, %p132
      %s135 = sadd.s32 %s134, 1
      %p138 = scmp.eq.s32.totalorder %s16, 1
      %p139 = scmp.ne.s32.totalorder %s134, %s136
      %p140 = scmp.eq.s32.totalorder %s16, 0
      %p141 = por %p139, %p140
      %p142 = scmp.ne.s32.totalorder %s134, %s136
      %p143 = scmp.eq.s32.totalorder %s21, 1
      %p144 = por %p142, %p143
      %p145 = scmp.ne.s32.totalorder %s136, %s137
      %p146 = scmp.eq.s32.totalorder %s21, 0
      %p147 = por %p145, %p146
      %p148 = scmp.ne.s32.totalorder %s136, %s137
      %p149 = scmp.eq.s32.totalorder %s22, 1
      %p150 = por %p148, %p149
      %p152 = scmp.ne.s32.totalorder %s137, %s151
      %p153 = scmp.eq.s32.totalorder %s22, 0
      %p154 = por %p152, %p153
      %s156 = sadd.s32 %s155, 1
      %p159 = scmp.eq.s32.totalorder %s16, 1
      %p160 = scmp.ne.s32.totalorder %s155, %s157
      %p161 = scmp.eq.s32.totalorder %s16, 0
      %p162 = por %p160, %p161
      %p163 = scmp.ne.s32.totalorder %s155, %s157
      %p164 = scmp.eq.s32.totalorder %s21, 1
      %p165 = por %p163, %p164
      %p166 = scmp.ne.s32.totalorder %s157, %s158
      %p167 = scmp.eq.s32.totalorder %s21, 0
      %p168 = por %p166, %p167
      %p169 = scmp.ne.s32.totalorder %s157, %s158
      %p170 = scmp.eq.s32.totalorder %s22, 1
      %p171 = por %p169, %p170
      %p173 = scmp.ne.s32.totalorder %s158, %s172
      %p174 = scmp.eq.s32.totalorder %s22, 0
      %p175 = por %p173, %p174
      %s176 = ssub.s32 %s16, %s23
      %p177 = scmp.eq.s32.totalorder %s176, 0
      %s179 = sadd.s32 %s178, 1
      %s180 = scalar_select %p177, %s178, %s179
      %p183 = pneg %p177
      %p184 = scmp.eq.s32.totalorder %s16, 1
      %p185 = por %p183, %p184
      %p186 = scmp.ne.s32.totalorder %s178, %s181
      %p187 = scmp.eq.s32.totalorder %s16, 0
      %p188 = por %p186, %p187
      %p189 = scmp.ne.s32.totalorder %s178, %s181
      %p190 = scmp.eq.s32.totalorder %s21, 1
      %p191 = por %p189, %p190
      %p192 = scmp.ne.s32.totalorder %s181, %s182
      %p193 = scmp.eq.s32.totalorder %s21, 0
      %p194 = por %p192, %p193
      %p195 = scmp.ne.s32.totalorder %s181, %s182
      %p196 = scmp.eq.s32.totalorder %s22, 1
      %p197 = por %p195, %p196
      %p199 = scmp.ne.s32.totalorder %s182, %s198
      %p200 = scmp.eq.s32.totalorder %s22, 0
      %p201 = por %p199, %p200
      %p202 = scmp.le.s32.totalorder 1, %s16
      %p203 = scmp.lt.s32.totalorder %s16, 3
      %p204 = pnand %p202, %p203
      %p205 = pneg %p204
      // Predicated region
      $region9: #{netd_forward.1} parent=5 // pred_check
        _
      $region10: #{netd_forward.1} parent=5 // pred_check_branch
        %207 = sbr.rel (%p204) target = $region12
      $region11: #{netd_forward.1} parent=5 // pred_region
        %s208 = ssub.s32 %s16, 1
        // Predicated region
        $region13: #{netd_forward.1} parent=11 // pred_check
          %p209 = pneg %p63
        $region14: #{netd_forward.1} parent=11 // pred_check_branch
          %211 = sbr.rel (%p209) target = $region16
        $region15: #{netd_forward.1} parent=11 // pred_region
          _
        $region16: #{netd_forward.1} parent=11 // pred_fallthru
          _
        // Predicated region
        $region17: #{netd_forward.1} parent=11 // pred_check
          %p212 = pneg %p84
        $region18: #{netd_forward.1} parent=11 // pred_check_branch
          %214 = sbr.rel (%p212) target = $region20
        $region19: #{netd_forward.1} parent=11 // pred_region
          _
        $region20: #{netd_forward.1} parent=11 // pred_fallthru
          _
        // Predicated region
        $region21: #{netd_forward.1} parent=11 // pred_check
          %p215 = pneg %p105
        $region22: #{netd_forward.1} parent=11 // pred_check_branch
          %217 = sbr.rel (%p215) target = $region24
        $region23: #{netd_forward.1} parent=11 // pred_region
          _
        $region24: #{netd_forward.1} parent=11 // pred_fallthru
          _
        // Predicated region
        $region25: #{netd_forward.1} parent=11 // pred_check
          %p218 = pneg %p126
        $region26: #{netd_forward.1} parent=11 // pred_check_branch
          %220 = sbr.rel (%p218) target = $region28
        $region27: #{netd_forward.1} parent=11 // pred_region
          _
        $region28: #{netd_forward.1} parent=11 // pred_fallthru
          _
        // Predicated region
        $region29: #{netd_forward.1} parent=11 // pred_check
          %p221 = pneg %p147
        $region30: #{netd_forward.1} parent=11 // pred_check_branch
          %223 = sbr.rel (%p221) target = $region32
        $region31: #{netd_forward.1} parent=11 // pred_region
          _
        $region32: #{netd_forward.1} parent=11 // pred_fallthru
          _
        // Predicated region
        $region33: #{netd_forward.1} parent=11 // pred_check
          %p224 = pneg %p168
        $region34: #{netd_forward.1} parent=11 // pred_check_branch
          %226 = sbr.rel (%p224) target = $region36
        $region35: #{netd_forward.1} parent=11 // pred_region
          _
        $region36: #{netd_forward.1} parent=11 // pred_fallthru
          _
      $region12: #{netd_forward.1} parent=5 // pred_fallthru
        _
      %p227 = scmp.lt.s32.totalorder %s16, 2
      // Predicated region
      $region37: #{netd_forward.1} parent=5 // pred_check
        %p228 = pneg %p227
      $region38: #{netd_forward.1} parent=5 // pred_check_branch
        %230 = sbr.rel (%p228) target = $region40
      $region39: #{netd_forward.1} parent=5 // pred_region
        // Predicated region
        $region41: #{netd_forward.1} parent=39 // pred_check
          %p231 = pneg %p36
        $region42: #{netd_forward.1} parent=39 // pred_check_branch
          %233 = sbr.rel (%p231) target = $region44
        $region43: #{netd_forward.1} parent=39 // pred_region
          %p234 = scmp.lt.s32.totalorder %s16, 1
          %s235 = scalar_select %p234, %s16, 1
          %s236 = smul.addr %s235, 144
          %s237 = smul.addr %s236, 4
          %s238 = scalar_lea.vmem %s0, %s237
        $region44: #{netd_forward.1} parent=39 // pred_fallthru
          _
      $region40: #{netd_forward.1} parent=5 // pred_fallthru
        _
      %p239 = scmp.le.s32.totalorder 1, %s16
      %p240 = scmp.lt.s32.totalorder %s16, 3
      %p241 = pnand %p239, %p240
      %p242 = pneg %p241
      // Predicated region
      $region45: #{netd_forward.1} parent=5 // pred_check
        _
      $region46: #{netd_forward.1} parent=5 // pred_check_branch
        %244 = sbr.rel (%p241) target = $region48
      $region47: #{netd_forward.1} parent=5 // pred_region
        %s245 = ssub.s32 %s16, 1
        %p246 = scmp.lt.s32.totalorder %s21, 1
        %s247 = scalar_select %p246, %s21, 1
        %s248 = smul.addr %s247, 144
        %s249 = smul.addr %s248, 4
        %s250 = scalar_lea.vmem %s0, %s249
        %p251 = pneg %p42
        %p252 = pneg %p39
        %p253 = pneg %p63
        %p254 = pneg %p60
        %p255 = pneg %p84
        %p256 = pneg %p81
        %p257 = pneg %p105
        %p258 = pneg %p102
        %p259 = pneg %p126
        %p260 = pneg %p123
        %p261 = pneg %p147
        %p262 = pneg %p144
        %p263 = pneg %p168
        %p264 = pneg %p165
        %p265 = pneg %p194
        %p266 = pneg %p191
        %s267 = sand.u32 %s181, 1
        %s268 = scalar_lea.sflag [#allocation5], %s267
        %s269 = sand.u32 %s181, 1
        %s270 = scalar_lea.vmem [#allocation4], %s269
        %p271 = scmp.lt.s32.totalorder %s21, 1
        %s272 = scalar_select %p271, %s21, 1
        %s273 = smul.addr %s272, 144
        %s274 = smul.addr %s273, 4
        %s275 = scalar_lea.vmem %s0, %s274
        %v277 = vld [vmem:[%s275] sm:$0xff]
        %v278 = vld [vmem:[%s275 + $0x8] sm:$0xff]
        %v279 = vld [vmem:[%s275 + $0x10] sm:$0xff]
        %v280 = vld [vmem:[%s275 + $0x18] sm:$0xff]
        %v281 = vld [vmem:[%s275 + $0x20] sm:$0xff]
        %v282 = vld [vmem:[%s275 + $0x28] sm:$0xff]
        %v283 = vld [vmem:[%s275 + $0x30] sm:$0xff]
        %v284 = vld [vmem:[%s275 + $0x38] sm:$0xff]
        %v285 = vld [vmem:[%s275 + $0x40] sm:$0xff]
        %v286 = vld [vmem:[%s275 + $0x48] sm:$0xff]
        %v287 = vld [vmem:[%s275 + $0x50] sm:$0xff]
        %v288 = vld [vmem:[%s275 + $0x58] sm:$0xff]
        %v289 = vld [vmem:[%s275 + $0x60] sm:$0xff]
        %v290 = vld [vmem:[%s275 + $0x68] sm:$0xff]
        %v291 = vld [vmem:[%s275 + $0x70] sm:$0xff]
        %v292 = vld [vmem:[%s275 + $0x78] sm:$0xff]
        %v293 = vld [vmem:[%s275 + $0x80] sm:$0xff]
        %v294 = vld [vmem:[%s275 + $0x88] sm:$0xff]
        %v295 = vld [vmem:[%s275 + $0x90] sm:$0xff]
        %v296 = vld [vmem:[%s275 + $0x98] sm:$0xff]
        %v297 = vld [vmem:[%s275 + $0xa0] sm:$0xff]
        %v298 = vld [vmem:[%s275 + $0xa8] sm:$0xff]
        %v299 = vld [vmem:[%s275 + $0xb0] sm:$0xff]
        %v300 = vld [vmem:[%s275 + $0xb8] sm:$0xff]
        %v301 = vld [vmem:[%s275 + $0xc0] sm:$0xff]
        %v302 = vld [vmem:[%s275 + $0xc8] sm:$0xff]
        %v303 = vld [vmem:[%s275 + $0xd0] sm:$0xff]
        %v304 = vld [vmem:[%s275 + $0xd8] sm:$0xff]
        %v305 = vld [vmem:[%s275 + $0xe0] sm:$0xff]
        %v306 = vld [vmem:[%s275 + $0xe8] sm:$0xff]
        %v307 = vld [vmem:[%s275 + $0xf0] sm:$0xff]
        %v308 = vld [vmem:[%s275 + $0xf8] sm:$0xff]
        %v309 = vld [vmem:[%s275 + $0x100] sm:$0xff]
        %v310 = vld [vmem:[%s275 + $0x108] sm:$0xff]
        %v311 = vld [vmem:[%s275 + $0x110] sm:$0xff]
        %v312 = vld [vmem:[%s275 + $0x118] sm:$0xff]
        %v313 = vld [vmem:[%s275 + $0x120] sm:$0xff]
        %v314 = vld [vmem:[%s275 + $0x128] sm:$0xff]
        %v315 = vld [vmem:[%s275 + $0x130] sm:$0xff]
        %v316 = vld [vmem:[%s275 + $0x138] sm:$0xff]
        %v317 = vld [vmem:[%s275 + $0x140] sm:$0xff]
        %v318 = vld [vmem:[%s275 + $0x148] sm:$0xff]
        %v319 = vld [vmem:[%s275 + $0x150] sm:$0xff]
        %v320 = vld [vmem:[%s275 + $0x158] sm:$0xff]
        %v321 = vld [vmem:[%s275 + $0x160] sm:$0xff]
        %v322 = vld [vmem:[%s275 + $0x168] sm:$0xff]
        %v323 = vld [vmem:[%s275 + $0x170] sm:$0xff]
        %v324 = vld [vmem:[%s275 + $0x178] sm:$0xff]
        %v325 = vld [vmem:[%s275 + $0x180] sm:$0xff]
        %v326 = vld [vmem:[%s275 + $0x188] sm:$0xff]
        %v327 = vld [vmem:[%s275 + $0x190] sm:$0xff]
        %v328 = vld [vmem:[%s275 + $0x198] sm:$0xff]
        %v329 = vld [vmem:[%s275 + $0x1a0] sm:$0xff]
        %v330 = vld [vmem:[%s275 + $0x1a8] sm:$0xff]
        %v331 = vld [vmem:[%s275 + $0x1b0] sm:$0xff]
        %v332 = vld [vmem:[%s275 + $0x1b8] sm:$0xff]
        %v333 = vld [vmem:[%s275 + $0x1c0] sm:$0xff]
        %v334 = vld [vmem:[%s275 + $0x1c8] sm:$0xff]
        %v335 = vld [vmem:[%s275 + $0x1d0] sm:$0xff]
        %v336 = vld [vmem:[%s275 + $0x1d8] sm:$0xff]
        %v337 = vld [vmem:[%s275 + $0x1e0] sm:$0xff]
        %v338 = vld [vmem:[%s275 + $0x1e8] sm:$0xff]
        %v339 = vld [vmem:[%s275 + $0x1f0] sm:$0xff]
        %v340 = vld [vmem:[%s275 + $0x1f8] sm:$0xff]
        %v341 = vld [vmem:[%s275 + $0x200] sm:$0xff]
        %v342 = vld [vmem:[%s275 + $0x208] sm:$0xff]
        %v343 = vld [vmem:[%s275 + $0x210] sm:$0xff]
        %v344 = vld [vmem:[%s275 + $0x218] sm:$0xff]
        %v345 = vld [vmem:[%s275 + $0x220] sm:$0xff]
        %v346 = vld [vmem:[%s275 + $0x228] sm:$0xff]
        %v347 = vld [vmem:[%s275 + $0x230] sm:$0xff]
        %v348 = vld [vmem:[%s275 + $0x238] sm:$0xff]
        %v349 = vld [vmem:[%s1] sm:$0xf]
        %v350 = vld [vmem:[%s1 + $0x4] sm:$0xf]
        %v351 = vld [vmem:[%s1 + $0x8] sm:$0xf]
        %v352 = vld [vmem:[%s1 + $0xc] sm:$0xf]
        %v353 = vld [vmem:[%s1 + $0x10] sm:$0xf]
        %v354 = vld [vmem:[%s1 + $0x14] sm:$0xf]
        %v355 = vld [vmem:[%s1 + $0x18] sm:$0xf]
        %v356 = vld [vmem:[%s1 + $0x1c] sm:$0xf]
        %v357 = vld [vmem:[%s1 + $0x20] sm:$0xf]
        %v358 = vld [vmem:[%s1 + $0x24] sm:$0xf]
        %v359 = vld [vmem:[%s1 + $0x28] sm:$0xf]
        %v360 = vld [vmem:[%s1 + $0x2c] sm:$0xf]
        %v361 = vld [vmem:[%s1 + $0x30] sm:$0xf]
        %v362 = vld [vmem:[%s1 + $0x34] sm:$0xf]
        %v363 = vld [vmem:[%s1 + $0x38] sm:$0xf]
        %v364 = vld [vmem:[%s1 + $0x3c] sm:$0xf]
        %v365 = vld [vmem:[%s1 + $0x40] sm:$0xf]
        %v366 = vld [vmem:[%s1 + $0x44] sm:$0xf]
        %v367 = vld [vmem:[%s1 + $0x48] sm:$0xf]
        %v368 = vld [vmem:[%s1 + $0x4c] sm:$0xf]
        %v369 = vld [vmem:[%s1 + $0x50] sm:$0xf]
        %v370 = vld [vmem:[%s1 + $0x54] sm:$0xf]
        %v371 = vld [vmem:[%s1 + $0x58] sm:$0xf]
        %v372 = vld [vmem:[%s1 + $0x5c] sm:$0xf]
        %v373 = vld [vmem:[%s1 + $0x60] sm:$0xf]
        %v374 = vld [vmem:[%s1 + $0x64] sm:$0xf]
        %v375 = vld [vmem:[%s1 + $0x68] sm:$0xf]
        %v376 = vld [vmem:[%s1 + $0x6c] sm:$0xf]
        %v377 = vld [vmem:[%s1 + $0x70] sm:$0xf]
        %v378 = vld [vmem:[%s1 + $0x74] sm:$0xf]
        %v379 = vld [vmem:[%s1 + $0x78] sm:$0xf]
        %v380 = vld [vmem:[%s1 + $0x7c] sm:$0xf]
        %v381 = vld [vmem:[%s1 + $0x80] sm:$0xf]
        %v382 = vld [vmem:[%s1 + $0x84] sm:$0xf]
        %v383 = vld [vmem:[%s1 + $0x88] sm:$0xf]
        %v384 = vld [vmem:[%s1 + $0x8c] sm:$0xf]
        %v385 = vld [vmem:[%s1 + $0x90] sm:$0xf]
        %v386 = vld [vmem:[%s1 + $0x94] sm:$0xf]
        %v387 = vld [vmem:[%s1 + $0x98] sm:$0xf]
        %v388 = vld [vmem:[%s1 + $0x9c] sm:$0xf]
        %v389 = vld [vmem:[%s1 + $0xa0] sm:$0xf]
        %v390 = vld [vmem:[%s1 + $0xa4] sm:$0xf]
        %v391 = vld [vmem:[%s1 + $0xa8] sm:$0xf]
        %v392 = vld [vmem:[%s1 + $0xac] sm:$0xf]
        %v393 = vld [vmem:[%s1 + $0xb0] sm:$0xf]
        %v394 = vld [vmem:[%s1 + $0xb4] sm:$0xf]
        %v395 = vld [vmem:[%s1 + $0xb8] sm:$0xf]
        %v396 = vld [vmem:[%s1 + $0xbc] sm:$0xf]
        %v397 = vld [vmem:[%s1 + $0xc0] sm:$0xf]
        %v398 = vld [vmem:[%s1 + $0xc4] sm:$0xf]
        %v399 = vld [vmem:[%s1 + $0xc8] sm:$0xf]
        %v400 = vld [vmem:[%s1 + $0xcc] sm:$0xf]
        %v401 = vld [vmem:[%s1 + $0xd0] sm:$0xf]
        %v402 = vld [vmem:[%s1 + $0xd4] sm:$0xf]
        %v403 = vld [vmem:[%s1 + $0xd8] sm:$0xf]
        %v404 = vld [vmem:[%s1 + $0xdc] sm:$0xf]
        %v405 = vld [vmem:[%s1 + $0xe0] sm:$0xf]
        %v406 = vld [vmem:[%s1 + $0xe4] sm:$0xf]
        %v407 = vld [vmem:[%s1 + $0xe8] sm:$0xf]
        %v408 = vld [vmem:[%s1 + $0xec] sm:$0xf]
        %v409 = vld [vmem:[%s1 + $0xf0] sm:$0xf]
        %v410 = vld [vmem:[%s1 + $0xf4] sm:$0xf]
        %v411 = vld [vmem:[%s1 + $0xf8] sm:$0xf]
        %v412 = vld [vmem:[%s1 + $0xfc] sm:$0xf]
        %v413 = vld [vmem:[%s1 + $0x100] sm:$0xf]
        %v414 = vld [vmem:[%s1 + $0x104] sm:$0xf]
        %v415 = vld [vmem:[%s1 + $0x108] sm:$0xf]
        %v416 = vld [vmem:[%s1 + $0x10c] sm:$0xf]
        %v417 = vld [vmem:[%s1 + $0x110] sm:$0xf]
        %v418 = vld [vmem:[%s1 + $0x114] sm:$0xf]
        %v419 = vld [vmem:[%s1 + $0x118] sm:$0xf]
        %v420 = vld [vmem:[%s1 + $0x11c] sm:$0xf]
        %v421 = vld [vmem:[%s1 + $0x120] sm:$0xf]
        %v422 = vld [vmem:[%s1 + $0x124] sm:$0xf]
        %v423 = vld [vmem:[%s1 + $0x128] sm:$0xf]
        %v424 = vld [vmem:[%s1 + $0x12c] sm:$0xf]
        %v425 = vld [vmem:[%s1 + $0x130] sm:$0xf]
        %v426 = vld [vmem:[%s1 + $0x134] sm:$0xf]
        %v427 = vld [vmem:[%s1 + $0x138] sm:$0xf]
        %v428 = vld [vmem:[%s1 + $0x13c] sm:$0xf]
        %v429 = vld [vmem:[%s1 + $0x140] sm:$0xf]
        %v430 = vld [vmem:[%s1 + $0x144] sm:$0xf]
        %v431 = vld [vmem:[%s1 + $0x148] sm:$0xf]
        %v432 = vld [vmem:[%s1 + $0x14c] sm:$0xf]
        %v433 = vld [vmem:[%s1 + $0x150] sm:$0xf]
        %v434 = vld [vmem:[%s1 + $0x154] sm:$0xf]
        %v435 = vld [vmem:[%s1 + $0x158] sm:$0xf]
        %v436 = vld [vmem:[%s1 + $0x15c] sm:$0xf]
        %v437 = vld [vmem:[%s1 + $0x160] sm:$0xf]
        %v438 = vld [vmem:[%s1 + $0x164] sm:$0xf]
        %v439 = vld [vmem:[%s1 + $0x168] sm:$0xf]
        %v440 = vld [vmem:[%s1 + $0x16c] sm:$0xf]
        %v441 = vld [vmem:[%s1 + $0x170] sm:$0xf]
        %v442 = vld [vmem:[%s1 + $0x174] sm:$0xf]
        %v443 = vld [vmem:[%s1 + $0x178] sm:$0xf]
        %v444 = vld [vmem:[%s1 + $0x17c] sm:$0xf]
        %v445 = vld [vmem:[%s1 + $0x180] sm:$0xf]
        %v446 = vld [vmem:[%s1 + $0x184] sm:$0xf]
        %v447 = vld [vmem:[%s1 + $0x188] sm:$0xf]
        %v448 = vld [vmem:[%s1 + $0x18c] sm:$0xf]
        %v449 = vld [vmem:[%s1 + $0x190] sm:$0xf]
        %v450 = vld [vmem:[%s1 + $0x194] sm:$0xf]
        %v451 = vld [vmem:[%s1 + $0x198] sm:$0xf]
        %v452 = vld [vmem:[%s1 + $0x19c] sm:$0xf]
        %v453 = vld [vmem:[%s1 + $0x1a0] sm:$0xf]
        %v454 = vld [vmem:[%s1 + $0x1a4] sm:$0xf]
        %v455 = vld [vmem:[%s1 + $0x1a8] sm:$0xf]
        %v456 = vld [vmem:[%s1 + $0x1ac] sm:$0xf]
        %v457 = vld [vmem:[%s1 + $0x1b0] sm:$0xf]
        %v458 = vld [vmem:[%s1 + $0x1b4] sm:$0xf]
        %v459 = vld [vmem:[%s1 + $0x1b8] sm:$0xf]
        %v460 = vld [vmem:[%s1 + $0x1bc] sm:$0xf]
        %v461 = vld [vmem:[%s1 + $0x1c0] sm:$0xf]
        %v462 = vld [vmem:[%s1 + $0x1c4] sm:$0xf]
        %v463 = vld [vmem:[%s1 + $0x1c8] sm:$0xf]
        %v464 = vld [vmem:[%s1 + $0x1cc] sm:$0xf]
        %v465 = vld [vmem:[%s1 + $0x1d0] sm:$0xf]
        %v466 = vld [vmem:[%s1 + $0x1d4] sm:$0xf]
        %v467 = vld [vmem:[%s1 + $0x1d8] sm:$0xf]
        %v468 = vld [vmem:[%s1 + $0x1dc] sm:$0xf]
        %v469 = vld [vmem:[%s1 + $0x1e0] sm:$0xf]
        %v470 = vld [vmem:[%s1 + $0x1e4] sm:$0xf]
        %v471 = vld [vmem:[%s1 + $0x1e8] sm:$0xf]
        %v472 = vld [vmem:[%s1 + $0x1ec] sm:$0xf]
        %v473 = vld [vmem:[%s1 + $0x1f0] sm:$0xf]
        %v474 = vld [vmem:[%s1 + $0x1f4] sm:$0xf]
        %v475 = vld [vmem:[%s1 + $0x1f8] sm:$0xf]
        %v476 = vld [vmem:[%s1 + $0x1fc] sm:$0xf]
        %v477 = vld [vmem:[%s1 + $0x200] sm:$0xf]
        %v478 = vld [vmem:[%s1 + $0x204] sm:$0xf]
        %v479 = vld [vmem:[%s1 + $0x208] sm:$0xf]
        %v480 = vld [vmem:[%s1 + $0x20c] sm:$0xf]
        %v481 = vld [vmem:[%s1 + $0x210] sm:$0xf]
        %v482 = vld [vmem:[%s1 + $0x214] sm:$0xf]
        %v483 = vld [vmem:[%s1 + $0x218] sm:$0xf]
        %v484 = vld [vmem:[%s1 + $0x21c] sm:$0xf]
        %v485 = vld [vmem:[%s1 + $0x220] sm:$0xf]
        %v486 = vld [vmem:[%s1 + $0x224] sm:$0xf]
        %v487 = vld [vmem:[%s1 + $0x228] sm:$0xf]
        %v488 = vld [vmem:[%s1 + $0x22c] sm:$0xf]
        %v489 = vld [vmem:[%s1 + $0x230] sm:$0xf]
        %v490 = vld [vmem:[%s1 + $0x234] sm:$0xf]
        %v491 = vld [vmem:[%s1 + $0x238] sm:$0xf]
        %v492 = vld [vmem:[%s1 + $0x23c] sm:$0xf]
        %v493 = vld [vmem:[%s1 + $0x240] sm:$0xf]
        %v494 = vld [vmem:[%s1 + $0x244] sm:$0xf]
        %v495 = vld [vmem:[%s1 + $0x248] sm:$0xf]
        %v496 = vld [vmem:[%s1 + $0x24c] sm:$0xf]
        %v497 = vld [vmem:[%s1 + $0x250] sm:$0xf]
        %v498 = vld [vmem:[%s1 + $0x254] sm:$0xf]
        %v499 = vld [vmem:[%s1 + $0x258] sm:$0xf]
        %v500 = vld [vmem:[%s1 + $0x25c] sm:$0xf]
        %v501 = vld [vmem:[%s1 + $0x260] sm:$0xf]
        %v502 = vld [vmem:[%s1 + $0x264] sm:$0xf]
        %v503 = vld [vmem:[%s1 + $0x268] sm:$0xf]
        %v504 = vld [vmem:[%s1 + $0x26c] sm:$0xf]
        %v505 = vld [vmem:[%s1 + $0x270] sm:$0xf]
        %v506 = vld [vmem:[%s1 + $0x274] sm:$0xf]
        %v507 = vld [vmem:[%s1 + $0x278] sm:$0xf]
        %v508 = vld [vmem:[%s1 + $0x27c] sm:$0xf]
        %v509 = vld [vmem:[%s1 + $0x280] sm:$0xf]
        %v510 = vld [vmem:[%s1 + $0x284] sm:$0xf]
        %v511 = vld [vmem:[%s1 + $0x288] sm:$0xf]
        %v512 = vld [vmem:[%s1 + $0x28c] sm:$0xf]
        %v513 = vld [vmem:[%s1 + $0x290] sm:$0xf]
        %v514 = vld [vmem:[%s1 + $0x294] sm:$0xf]
        %v515 = vld [vmem:[%s1 + $0x298] sm:$0xf]
        %v516 = vld [vmem:[%s1 + $0x29c] sm:$0xf]
        %v517 = vld [vmem:[%s1 + $0x2a0] sm:$0xf]
        %v518 = vld [vmem:[%s1 + $0x2a4] sm:$0xf]
        %v519 = vld [vmem:[%s1 + $0x2a8] sm:$0xf]
        %v520 = vld [vmem:[%s1 + $0x2ac] sm:$0xf]
        %v521 = vld [vmem:[%s1 + $0x2b0] sm:$0xf]
        %v522 = vld [vmem:[%s1 + $0x2b4] sm:$0xf]
        %v523 = vld [vmem:[%s1 + $0x2b8] sm:$0xf]
        %v524 = vld [vmem:[%s1 + $0x2bc] sm:$0xf]
        %v525 = vld [vmem:[%s1 + $0x2c0] sm:$0xf]
        %v526 = vld [vmem:[%s1 + $0x2c4] sm:$0xf]
        %v527 = vld [vmem:[%s1 + $0x2c8] sm:$0xf]
        %v528 = vld [vmem:[%s1 + $0x2cc] sm:$0xf]
        %v529 = vld [vmem:[%s1 + $0x2d0] sm:$0xf]
        %v530 = vld [vmem:[%s1 + $0x2d4] sm:$0xf]
        %v531 = vld [vmem:[%s1 + $0x2d8] sm:$0xf]
        %v532 = vld [vmem:[%s1 + $0x2dc] sm:$0xf]
        %v533 = vld [vmem:[%s1 + $0x2e0] sm:$0xf]
        %v534 = vld [vmem:[%s1 + $0x2e4] sm:$0xf]
        %v535 = vld [vmem:[%s1 + $0x2e8] sm:$0xf]
        %v536 = vld [vmem:[%s1 + $0x2ec] sm:$0xf]
        %v537 = vld [vmem:[%s1 + $0x2f0] sm:$0xf]
        %v538 = vld [vmem:[%s1 + $0x2f4] sm:$0xf]
        %v539 = vld [vmem:[%s1 + $0x2f8] sm:$0xf]
        %v540 = vld [vmem:[%s1 + $0x2fc] sm:$0xf]
        %v541 = vld [vmem:[%s1 + $0x300] sm:$0xf]
        %v542 = vld [vmem:[%s1 + $0x304] sm:$0xf]
        %v543 = vld [vmem:[%s1 + $0x308] sm:$0xf]
        %v544 = vld [vmem:[%s1 + $0x30c] sm:$0xf]
        %v545 = vld [vmem:[%s1 + $0x310] sm:$0xf]
        %v546 = vld [vmem:[%s1 + $0x314] sm:$0xf]
        %v547 = vld [vmem:[%s1 + $0x318] sm:$0xf]
        %v548 = vld [vmem:[%s1 + $0x31c] sm:$0xf]
        %v549 = vld [vmem:[%s1 + $0x320] sm:$0xf]
        %v550 = vld [vmem:[%s1 + $0x324] sm:$0xf]
        %v551 = vld [vmem:[%s1 + $0x328] sm:$0xf]
        %v552 = vld [vmem:[%s1 + $0x32c] sm:$0xf]
        %v553 = vld [vmem:[%s1 + $0x330] sm:$0xf]
        %v554 = vld [vmem:[%s1 + $0x334] sm:$0xf]
        %v555 = vld [vmem:[%s1 + $0x338] sm:$0xf]
        %v556 = vld [vmem:[%s1 + $0x33c] sm:$0xf]
        %v557 = vld [vmem:[%s1 + $0x340] sm:$0xf]
        %v558 = vld [vmem:[%s1 + $0x344] sm:$0xf]
        %v559 = vld [vmem:[%s1 + $0x348] sm:$0xf]
        %v560 = vld [vmem:[%s1 + $0x34c] sm:$0xf]
        %v561 = vld [vmem:[%s1 + $0x350] sm:$0xf]
        %v562 = vld [vmem:[%s1 + $0x354] sm:$0xf]
        %v563 = vld [vmem:[%s1 + $0x358] sm:$0xf]
        %v564 = vld [vmem:[%s1 + $0x35c] sm:$0xf]
        %v565 = vld [vmem:[%s1 + $0x360] sm:$0xf]
        %v566 = vld [vmem:[%s1 + $0x364] sm:$0xf]
        %v567 = vld [vmem:[%s1 + $0x368] sm:$0xf]
        %v568 = vld [vmem:[%s1 + $0x36c] sm:$0xf]
        %v569 = vld [vmem:[%s1 + $0x370] sm:$0xf]
        %v570 = vld [vmem:[%s1 + $0x374] sm:$0xf]
        %v571 = vld [vmem:[%s1 + $0x378] sm:$0xf]
        %v572 = vld [vmem:[%s1 + $0x37c] sm:$0xf]
        %v573 = vld [vmem:[%s1 + $0x380] sm:$0xf]
        %v574 = vld [vmem:[%s1 + $0x384] sm:$0xf]
        %v575 = vld [vmem:[%s1 + $0x388] sm:$0xf]
        %v576 = vld [vmem:[%s1 + $0x38c] sm:$0xf]
        %v577 = vld [vmem:[%s1 + $0x390] sm:$0xf]
        %v578 = vld [vmem:[%s1 + $0x394] sm:$0xf]
        %v579 = vld [vmem:[%s1 + $0x398] sm:$0xf]
        %v580 = vld [vmem:[%s1 + $0x39c] sm:$0xf]
        %v581 = vld [vmem:[%s1 + $0x3a0] sm:$0xf]
        %v582 = vld [vmem:[%s1 + $0x3a4] sm:$0xf]
        %v583 = vld [vmem:[%s1 + $0x3a8] sm:$0xf]
        %v584 = vld [vmem:[%s1 + $0x3ac] sm:$0xf]
        %v585 = vld [vmem:[%s1 + $0x3b0] sm:$0xf]
        %v586 = vld [vmem:[%s1 + $0x3b4] sm:$0xf]
        %v587 = vld [vmem:[%s1 + $0x3b8] sm:$0xf]
        %v588 = vld [vmem:[%s1 + $0x3bc] sm:$0xf]
        %v589 = vld [vmem:[%s1 + $0x3c0] sm:$0xf]
        %v590 = vld [vmem:[%s1 + $0x3c4] sm:$0xf]
        %v591 = vld [vmem:[%s1 + $0x3c8] sm:$0xf]
        %v592 = vld [vmem:[%s1 + $0x3cc] sm:$0xf]
        %v593 = vld [vmem:[%s1 + $0x3d0] sm:$0xf]
        %v594 = vld [vmem:[%s1 + $0x3d4] sm:$0xf]
        %v595 = vld [vmem:[%s1 + $0x3d8] sm:$0xf]
        %v596 = vld [vmem:[%s1 + $0x3dc] sm:$0xf]
        %v597 = vld [vmem:[%s1 + $0x3e0] sm:$0xf]
        %v598 = vld [vmem:[%s1 + $0x3e4] sm:$0xf]
        %v599 = vld [vmem:[%s1 + $0x3e8] sm:$0xf]
        %v600 = vld [vmem:[%s1 + $0x3ec] sm:$0xf]
        %v601 = vld [vmem:[%s1 + $0x3f0] sm:$0xf]
        %v602 = vld [vmem:[%s1 + $0x3f4] sm:$0xf]
        %v603 = vld [vmem:[%s1 + $0x3f8] sm:$0xf]
        %v604 = vld [vmem:[%s1 + $0x3fc] sm:$0xf]
        %v605 = vld [vmem:[%s1 + $0x400] sm:$0xf]
        %v606 = vld [vmem:[%s1 + $0x404] sm:$0xf]
        %v607 = vld [vmem:[%s1 + $0x408] sm:$0xf]
        %v608 = vld [vmem:[%s1 + $0x40c] sm:$0xf]
        %v609 = vld [vmem:[%s1 + $0x410] sm:$0xf]
        %v610 = vld [vmem:[%s1 + $0x414] sm:$0xf]
        %v611 = vld [vmem:[%s1 + $0x418] sm:$0xf]
        %v612 = vld [vmem:[%s1 + $0x41c] sm:$0xf]
        %v613 = vld [vmem:[%s1 + $0x420] sm:$0xf]
        %v614 = vld [vmem:[%s1 + $0x424] sm:$0xf]
        %v615 = vld [vmem:[%s1 + $0x428] sm:$0xf]
        %v616 = vld [vmem:[%s1 + $0x42c] sm:$0xf]
        %v617 = vld [vmem:[%s1 + $0x430] sm:$0xf]
        %v618 = vld [vmem:[%s1 + $0x434] sm:$0xf]
        %v619 = vld [vmem:[%s1 + $0x438] sm:$0xf]
        %v620 = vld [vmem:[%s1 + $0x43c] sm:$0xf]
        %v621 = vld [vmem:[%s1 + $0x440] sm:$0xf]
        %v622 = vld [vmem:[%s1 + $0x444] sm:$0xf]
        %v623 = vld [vmem:[%s1 + $0x448] sm:$0xf]
        %v624 = vld [vmem:[%s1 + $0x44c] sm:$0xf]
        %v625 = vld [vmem:[%s1 + $0x450] sm:$0xf]
        %v626 = vld [vmem:[%s1 + $0x454] sm:$0xf]
        %v627 = vld [vmem:[%s1 + $0x458] sm:$0xf]
        %v628 = vld [vmem:[%s1 + $0x45c] sm:$0xf]
        %v629 = vld [vmem:[%s1 + $0x460] sm:$0xf]
        %v630 = vld [vmem:[%s1 + $0x464] sm:$0xf]
        %v631 = vld [vmem:[%s1 + $0x468] sm:$0xf]
        %v632 = vld [vmem:[%s1 + $0x46c] sm:$0xf]
        %v633 = vld [vmem:[%s1 + $0x470] sm:$0xf]
        %v634 = vld [vmem:[%s1 + $0x474] sm:$0xf]
        %v635 = vld [vmem:[%s1 + $0x478] sm:$0xf]
        %v636 = vld [vmem:[%s1 + $0x47c] sm:$0xf]
        %v637 = vld [vmem:[%s2] sm:$0x1]
        %v639 = vlaneseq
        %v640 = vshrl.u32 %v639, 7
        %v641 = vsub.s32 0, %v640
        %v642 = vrot.slane %v637, %v641
        %v716 = vunpack.c.l.b16 %v277
        %v717 = vunpack.c.h.b16 %v277
        %v718 = vunpack.c.l.b16 %v278
        %v719 = vunpack.c.h.b16 %v278
        %v720 = vunpack.c.l.b16 %v279
        %v721 = vunpack.c.h.b16 %v279
        %v722 = vunpack.c.l.b16 %v280
        %v723 = vunpack.c.h.b16 %v280
        %v724 = vunpack.c.l.b16 %v281
        %v725 = vunpack.c.h.b16 %v281
        %v726 = vunpack.c.l.b16 %v282
        %v727 = vunpack.c.h.b16 %v282
        %v728 = vunpack.c.l.b16 %v283
        %v729 = vunpack.c.h.b16 %v283
        %v730 = vunpack.c.l.b16 %v284
        %v731 = vunpack.c.h.b16 %v284
        %v732 = vunpack.c.l.b16 %v285
        %v733 = vunpack.c.h.b16 %v285
        %v734 = vunpack.c.l.b16 %v286
        %v735 = vunpack.c.h.b16 %v286
        %v736 = vunpack.c.l.b16 %v287
        %v737 = vunpack.c.h.b16 %v287
        %v738 = vunpack.c.l.b16 %v288
        %v739 = vunpack.c.h.b16 %v288
        %v740 = vunpack.c.l.b16 %v289
        %v741 = vunpack.c.h.b16 %v289
        %v742 = vunpack.c.l.b16 %v290
        %v743 = vunpack.c.h.b16 %v290
        %v744 = vunpack.c.l.b16 %v291
        %v745 = vunpack.c.h.b16 %v291
        %v746 = vunpack.c.l.b16 %v292
        %v747 = vunpack.c.h.b16 %v292
        %v748 = vunpack.c.l.b16 %v293
        %v749 = vunpack.c.h.b16 %v293
        %v750 = vunpack.c.l.b16 %v294
        %v751 = vunpack.c.h.b16 %v294
        %v752 = vunpack.c.l.b16 %v295
        %v753 = vunpack.c.h.b16 %v295
        %v754 = vunpack.c.l.b16 %v296
        %v755 = vunpack.c.h.b16 %v296
        %v756 = vunpack.c.l.b16 %v297
        %v757 = vunpack.c.h.b16 %v297
        %v758 = vunpack.c.l.b16 %v298
        %v759 = vunpack.c.h.b16 %v298
        %v760 = vunpack.c.l.b16 %v299
        %v761 = vunpack.c.h.b16 %v299
        %v762 = vunpack.c.l.b16 %v300
        %v763 = vunpack.c.h.b16 %v300
        %v764 = vunpack.c.l.b16 %v301
        %v765 = vunpack.c.h.b16 %v301
        %v766 = vunpack.c.l.b16 %v302
        %v767 = vunpack.c.h.b16 %v302
        %v768 = vunpack.c.l.b16 %v303
        %v769 = vunpack.c.h.b16 %v303
        %v770 = vunpack.c.l.b16 %v304
        %v771 = vunpack.c.h.b16 %v304
        %v772 = vunpack.c.l.b16 %v305
        %v773 = vunpack.c.h.b16 %v305
        %v774 = vunpack.c.l.b16 %v306
        %v775 = vunpack.c.h.b16 %v306
        %v776 = vunpack.c.l.b16 %v307
        %v777 = vunpack.c.h.b16 %v307
        %v778 = vunpack.c.l.b16 %v308
        %v779 = vunpack.c.h.b16 %v308
        %v780 = vunpack.c.l.b16 %v309
        %v781 = vunpack.c.h.b16 %v309
        %v782 = vunpack.c.l.b16 %v310
        %v783 = vunpack.c.h.b16 %v310
        %v784 = vunpack.c.l.b16 %v311
        %v785 = vunpack.c.h.b16 %v311
        %v786 = vunpack.c.l.b16 %v312
        %v787 = vunpack.c.h.b16 %v312
        %v788 = vunpack.c.l.b16 %v313
        %v789 = vunpack.c.h.b16 %v313
        %v790 = vunpack.c.l.b16 %v314
        %v791 = vunpack.c.h.b16 %v314
        %v792 = vunpack.c.l.b16 %v315
        %v793 = vunpack.c.h.b16 %v315
        %v794 = vunpack.c.l.b16 %v316
        %v795 = vunpack.c.h.b16 %v316
        %v796 = vunpack.c.l.b16 %v317
        %v797 = vunpack.c.h.b16 %v317
        %v798 = vunpack.c.l.b16 %v318
        %v799 = vunpack.c.h.b16 %v318
        %v800 = vunpack.c.l.b16 %v319
        %v801 = vunpack.c.h.b16 %v319
        %v802 = vunpack.c.l.b16 %v320
        %v803 = vunpack.c.h.b16 %v320
        %v804 = vunpack.c.l.b16 %v321
        %v805 = vunpack.c.h.b16 %v321
        %v806 = vunpack.c.l.b16 %v322
        %v807 = vunpack.c.h.b16 %v322
        %v808 = vunpack.c.l.b16 %v323
        %v809 = vunpack.c.h.b16 %v323
        %v810 = vunpack.c.l.b16 %v324
        %v811 = vunpack.c.h.b16 %v324
        %v812 = vunpack.c.l.b16 %v325
        %v813 = vunpack.c.h.b16 %v325
        %v814 = vunpack.c.l.b16 %v326
        %v815 = vunpack.c.h.b16 %v326
        %v816 = vunpack.c.l.b16 %v327
        %v817 = vunpack.c.h.b16 %v327
        %v818 = vunpack.c.l.b16 %v328
        %v819 = vunpack.c.h.b16 %v328
        %v820 = vunpack.c.l.b16 %v329
        %v821 = vunpack.c.h.b16 %v329
        %v822 = vunpack.c.l.b16 %v330
        %v823 = vunpack.c.h.b16 %v330
        %v824 = vunpack.c.l.b16 %v331
        %v825 = vunpack.c.h.b16 %v331
        %v826 = vunpack.c.l.b16 %v332
        %v827 = vunpack.c.h.b16 %v332
        %v828 = vunpack.c.l.b16 %v333
        %v829 = vunpack.c.h.b16 %v333
        %v830 = vunpack.c.l.b16 %v334
        %v831 = vunpack.c.h.b16 %v334
        %v832 = vunpack.c.l.b16 %v335
        %v833 = vunpack.c.h.b16 %v335
        %v834 = vunpack.c.l.b16 %v336
        %v835 = vunpack.c.h.b16 %v336
        %v836 = vunpack.c.l.b16 %v337
        %v837 = vunpack.c.h.b16 %v337
        %v838 = vunpack.c.l.b16 %v338
        %v839 = vunpack.c.h.b16 %v338
        %v840 = vunpack.c.l.b16 %v339
        %v841 = vunpack.c.h.b16 %v339
        %v842 = vunpack.c.l.b16 %v340
        %v843 = vunpack.c.h.b16 %v340
        %v844 = vunpack.c.l.b16 %v341
        %v845 = vunpack.c.h.b16 %v341
        %v846 = vunpack.c.l.b16 %v342
        %v847 = vunpack.c.h.b16 %v342
        %v848 = vunpack.c.l.b16 %v343
        %v849 = vunpack.c.h.b16 %v343
        %v850 = vunpack.c.l.b16 %v344
        %v851 = vunpack.c.h.b16 %v344
        %v852 = vunpack.c.l.b16 %v345
        %v853 = vunpack.c.h.b16 %v345
        %v854 = vunpack.c.l.b16 %v346
        %v855 = vunpack.c.h.b16 %v346
        %v856 = vunpack.c.l.b16 %v347
        %v857 = vunpack.c.h.b16 %v347
        %v858 = vunpack.c.l.b16 %v348
        %v859 = vunpack.c.h.b16 %v348
        %v860 = vpack.c.b16 %v734, %v716
        %v861 = vpack.c.b16 %v735, %v717
        %v862 = vpack.c.b16 %v736, %v718
        %v863 = vpack.c.b16 %v737, %v719
        %v864 = vpack.c.b16 %v738, %v720
        %v865 = vpack.c.b16 %v739, %v721
        %v866 = vpack.c.b16 %v740, %v722
        %v867 = vpack.c.b16 %v741, %v723
        %v868 = vpack.c.b16 %v742, %v724
        %v869 = vpack.c.b16 %v743, %v725
        %v870 = vpack.c.b16 %v744, %v726
        %v871 = vpack.c.b16 %v745, %v727
        %v872 = vpack.c.b16 %v746, %v728
        %v873 = vpack.c.b16 %v747, %v729
        %v874 = vpack.c.b16 %v748, %v730
        %v875 = vpack.c.b16 %v749, %v731
        %v876 = vpack.c.b16 %v750, %v732
        %v877 = vpack.c.b16 %v751, %v733
        %v878 = vpack.c.b16 %v770, %v752
        %v879 = vpack.c.b16 %v771, %v753
        %v880 = vpack.c.b16 %v772, %v754
        %v881 = vpack.c.b16 %v773, %v755
        %v882 = vpack.c.b16 %v774, %v756
        %v883 = vpack.c.b16 %v775, %v757
        %v884 = vpack.c.b16 %v776, %v758
        %v885 = vpack.c.b16 %v777, %v759
        %v886 = vpack.c.b16 %v778, %v760
        %v887 = vpack.c.b16 %v779, %v761
        %v888 = vpack.c.b16 %v780, %v762
        %v889 = vpack.c.b16 %v781, %v763
        %v890 = vpack.c.b16 %v782, %v764
        %v891 = vpack.c.b16 %v783, %v765
        %v892 = vpack.c.b16 %v784, %v766
        %v893 = vpack.c.b16 %v785, %v767
        %v894 = vpack.c.b16 %v786, %v768
        %v895 = vpack.c.b16 %v787, %v769
        %v896 = vpack.c.b16 %v806, %v788
        %v897 = vpack.c.b16 %v807, %v789
        %v898 = vpack.c.b16 %v808, %v790
        %v899 = vpack.c.b16 %v809, %v791
        %v900 = vpack.c.b16 %v810, %v792
        %v901 = vpack.c.b16 %v811, %v793
        %v902 = vpack.c.b16 %v812, %v794
        %v903 = vpack.c.b16 %v813, %v795
        %v904 = vpack.c.b16 %v814, %v796
        %v905 = vpack.c.b16 %v815, %v797
        %v906 = vpack.c.b16 %v816, %v798
        %v907 = vpack.c.b16 %v817, %v799
        %v908 = vpack.c.b16 %v818, %v800
        %v909 = vpack.c.b16 %v819, %v801
        %v910 = vpack.c.b16 %v820, %v802
        %v911 = vpack.c.b16 %v821, %v803
        %v912 = vpack.c.b16 %v822, %v804
        %v913 = vpack.c.b16 %v823, %v805
        %v914 = vpack.c.b16 %v842, %v824
        %v915 = vpack.c.b16 %v843, %v825
        %v916 = vpack.c.b16 %v844, %v826
        %v917 = vpack.c.b16 %v845, %v827
        %v918 = vpack.c.b16 %v846, %v828
        %v919 = vpack.c.b16 %v847, %v829
        %v920 = vpack.c.b16 %v848, %v830
        %v921 = vpack.c.b16 %v849, %v831
        %v922 = vpack.c.b16 %v850, %v832
        %v923 = vpack.c.b16 %v851, %v833
        %v924 = vpack.c.b16 %v852, %v834
        %v925 = vpack.c.b16 %v853, %v835
        %v926 = vpack.c.b16 %v854, %v836
        %v927 = vpack.c.b16 %v855, %v837
        %v928 = vpack.c.b16 %v856, %v838
        %v929 = vpack.c.b16 %v857, %v839
        %v930 = vpack.c.b16 %v858, %v840
        %v931 = vpack.c.b16 %v859, %v841
        %v1292 = vunpack.c.l.b16 %v349
        %v1293 = vunpack.c.l.b16 %v350
        %v1294 = vunpack.c.l.b16 %v351
        %v1295 = vunpack.c.l.b16 %v352
        %v1296 = vunpack.c.l.b16 %v353
        %v1297 = vunpack.c.l.b16 %v354
        %v1298 = vunpack.c.l.b16 %v355
        %v1299 = vunpack.c.l.b16 %v356
        %v1300 = vunpack.c.l.b16 %v357
        %v1301 = vunpack.c.l.b16 %v358
        %v1302 = vunpack.c.l.b16 %v359
        %v1303 = vunpack.c.l.b16 %v360
        %v1304 = vunpack.c.l.b16 %v361
        %v1305 = vunpack.c.l.b16 %v362
        %v1306 = vunpack.c.l.b16 %v363
        %v1307 = vunpack.c.l.b16 %v364
        %v1308 = vunpack.c.l.b16 %v365
        %v1309 = vunpack.c.l.b16 %v366
        %v1310 = vunpack.c.l.b16 %v367
        %v1311 = vunpack.c.l.b16 %v368
        %v1312 = vunpack.c.l.b16 %v369
        %v1313 = vunpack.c.l.b16 %v370
        %v1314 = vunpack.c.l.b16 %v371
        %v1315 = vunpack.c.l.b16 %v372
        %v1316 = vunpack.c.l.b16 %v373
        %v1317 = vunpack.c.l.b16 %v374
        %v1318 = vunpack.c.l.b16 %v375
        %v1319 = vunpack.c.l.b16 %v376
        %v1320 = vunpack.c.l.b16 %v377
        %v1321 = vunpack.c.l.b16 %v378
        %v1322 = vunpack.c.l.b16 %v379
        %v1323 = vunpack.c.l.b16 %v380
        %v1324 = vunpack.c.l.b16 %v381
        %v1325 = vunpack.c.l.b16 %v382
        %v1326 = vunpack.c.l.b16 %v383
        %v1327 = vunpack.c.l.b16 %v384
        %v1328 = vunpack.c.l.b16 %v385
        %v1329 = vunpack.c.l.b16 %v386
        %v1330 = vunpack.c.l.b16 %v387
        %v1331 = vunpack.c.l.b16 %v388
        %v1332 = vunpack.c.l.b16 %v389
        %v1333 = vunpack.c.l.b16 %v390
        %v1334 = vunpack.c.l.b16 %v391
        %v1335 = vunpack.c.l.b16 %v392
        %v1336 = vunpack.c.l.b16 %v393
        %v1337 = vunpack.c.l.b16 %v394
        %v1338 = vunpack.c.l.b16 %v395
        %v1339 = vunpack.c.l.b16 %v396
        %v1340 = vunpack.c.l.b16 %v397
        %v1341 = vunpack.c.l.b16 %v398
        %v1342 = vunpack.c.l.b16 %v399
        %v1343 = vunpack.c.l.b16 %v400
        %v1344 = vunpack.c.l.b16 %v401
        %v1345 = vunpack.c.l.b16 %v402
        %v1346 = vunpack.c.l.b16 %v403
        %v1347 = vunpack.c.l.b16 %v404
        %v1348 = vunpack.c.l.b16 %v405
        %v1349 = vunpack.c.l.b16 %v406
        %v1350 = vunpack.c.l.b16 %v407
        %v1351 = vunpack.c.l.b16 %v408
        %v1352 = vunpack.c.l.b16 %v409
        %v1353 = vunpack.c.l.b16 %v410
        %v1354 = vunpack.c.l.b16 %v411
        %v1355 = vunpack.c.l.b16 %v412
        %v1356 = vunpack.c.l.b16 %v413
        %v1357 = vunpack.c.l.b16 %v414
        %v1358 = vunpack.c.l.b16 %v415
        %v1359 = vunpack.c.l.b16 %v416
        %v1360 = vunpack.c.l.b16 %v417
        %v1361 = vunpack.c.l.b16 %v418
        %v1362 = vunpack.c.l.b16 %v419
        %v1363 = vunpack.c.l.b16 %v420
        %v1364 = vunpack.c.l.b16 %v421
        %v1365 = vunpack.c.l.b16 %v422
        %v1366 = vunpack.c.l.b16 %v423
        %v1367 = vunpack.c.l.b16 %v424
        %v1368 = vunpack.c.l.b16 %v425
        %v1369 = vunpack.c.l.b16 %v426
        %v1370 = vunpack.c.l.b16 %v427
        %v1371 = vunpack.c.l.b16 %v428
        %v1372 = vunpack.c.l.b16 %v429
        %v1373 = vunpack.c.l.b16 %v430
        %v1374 = vunpack.c.l.b16 %v431
        %v1375 = vunpack.c.l.b16 %v432
        %v1376 = vunpack.c.l.b16 %v433
        %v1377 = vunpack.c.l.b16 %v434
        %v1378 = vunpack.c.l.b16 %v435
        %v1379 = vunpack.c.l.b16 %v436
        %v1380 = vunpack.c.l.b16 %v437
        %v1381 = vunpack.c.l.b16 %v438
        %v1382 = vunpack.c.l.b16 %v439
        %v1383 = vunpack.c.l.b16 %v440
        %v1384 = vunpack.c.l.b16 %v441
        %v1385 = vunpack.c.l.b16 %v442
        %v1386 = vunpack.c.l.b16 %v443
        %v1387 = vunpack.c.l.b16 %v444
        %v1388 = vunpack.c.l.b16 %v445
        %v1389 = vunpack.c.l.b16 %v446
        %v1390 = vunpack.c.l.b16 %v447
        %v1391 = vunpack.c.l.b16 %v448
        %v1392 = vunpack.c.l.b16 %v449
        %v1393 = vunpack.c.l.b16 %v450
        %v1394 = vunpack.c.l.b16 %v451
        %v1395 = vunpack.c.l.b16 %v452
        %v1396 = vunpack.c.l.b16 %v453
        %v1397 = vunpack.c.l.b16 %v454
        %v1398 = vunpack.c.l.b16 %v455
        %v1399 = vunpack.c.l.b16 %v456
        %v1400 = vunpack.c.l.b16 %v457
        %v1401 = vunpack.c.l.b16 %v458
        %v1402 = vunpack.c.l.b16 %v459
        %v1403 = vunpack.c.l.b16 %v460
        %v1404 = vunpack.c.l.b16 %v461
        %v1405 = vunpack.c.l.b16 %v462
        %v1406 = vunpack.c.l.b16 %v463
        %v1407 = vunpack.c.l.b16 %v464
        %v1408 = vunpack.c.l.b16 %v465
        %v1409 = vunpack.c.l.b16 %v466
        %v1410 = vunpack.c.l.b16 %v467
        %v1411 = vunpack.c.l.b16 %v468
        %v1412 = vunpack.c.l.b16 %v469
        %v1413 = vunpack.c.l.b16 %v470
        %v1414 = vunpack.c.l.b16 %v471
        %v1415 = vunpack.c.l.b16 %v472
        %v1416 = vunpack.c.l.b16 %v473
        %v1417 = vunpack.c.l.b16 %v474
        %v1418 = vunpack.c.l.b16 %v475
        %v1419 = vunpack.c.l.b16 %v476
        %v1420 = vunpack.c.l.b16 %v477
        %v1421 = vunpack.c.l.b16 %v478
        %v1422 = vunpack.c.l.b16 %v479
        %v1423 = vunpack.c.l.b16 %v480
        %v1424 = vunpack.c.l.b16 %v481
        %v1425 = vunpack.c.l.b16 %v482
        %v1426 = vunpack.c.l.b16 %v483
        %v1427 = vunpack.c.l.b16 %v484
        %v1428 = vunpack.c.l.b16 %v485
        %v1429 = vunpack.c.l.b16 %v486
        %v1430 = vunpack.c.l.b16 %v487
        %v1431 = vunpack.c.l.b16 %v488
        %v1432 = vunpack.c.l.b16 %v489
        %v1433 = vunpack.c.l.b16 %v490
        %v1434 = vunpack.c.l.b16 %v491
        %v1435 = vunpack.c.l.b16 %v492
        %v1436 = vunpack.c.l.b16 %v493
        %v1437 = vunpack.c.l.b16 %v494
        %v1438 = vunpack.c.l.b16 %v495
        %v1439 = vunpack.c.l.b16 %v496
        %v1440 = vunpack.c.l.b16 %v497
        %v1441 = vunpack.c.l.b16 %v498
        %v1442 = vunpack.c.l.b16 %v499
        %v1443 = vunpack.c.l.b16 %v500
        %v1444 = vunpack.c.l.b16 %v501
        %v1445 = vunpack.c.l.b16 %v502
        %v1446 = vunpack.c.l.b16 %v503
        %v1447 = vunpack.c.l.b16 %v504
        %v1448 = vunpack.c.l.b16 %v505
        %v1449 = vunpack.c.l.b16 %v506
        %v1450 = vunpack.c.l.b16 %v507
        %v1451 = vunpack.c.l.b16 %v508
        %v1452 = vunpack.c.l.b16 %v509
        %v1453 = vunpack.c.l.b16 %v510
        %v1454 = vunpack.c.l.b16 %v511
        %v1455 = vunpack.c.l.b16 %v512
        %v1456 = vunpack.c.l.b16 %v513
        %v1457 = vunpack.c.l.b16 %v514
        %v1458 = vunpack.c.l.b16 %v515
        %v1459 = vunpack.c.l.b16 %v516
        %v1460 = vunpack.c.l.b16 %v517
        %v1461 = vunpack.c.l.b16 %v518
        %v1462 = vunpack.c.l.b16 %v519
        %v1463 = vunpack.c.l.b16 %v520
        %v1464 = vunpack.c.l.b16 %v521
        %v1465 = vunpack.c.l.b16 %v522
        %v1466 = vunpack.c.l.b16 %v523
        %v1467 = vunpack.c.l.b16 %v524
        %v1468 = vunpack.c.l.b16 %v525
        %v1469 = vunpack.c.l.b16 %v526
        %v1470 = vunpack.c.l.b16 %v527
        %v1471 = vunpack.c.l.b16 %v528
        %v1472 = vunpack.c.l.b16 %v529
        %v1473 = vunpack.c.l.b16 %v530
        %v1474 = vunpack.c.l.b16 %v531
        %v1475 = vunpack.c.l.b16 %v532
        %v1476 = vunpack.c.l.b16 %v533
        %v1477 = vunpack.c.l.b16 %v534
        %v1478 = vunpack.c.l.b16 %v535
        %v1479 = vunpack.c.l.b16 %v536
        %v1480 = vunpack.c.l.b16 %v537
        %v1481 = vunpack.c.l.b16 %v538
        %v1482 = vunpack.c.l.b16 %v539
        %v1483 = vunpack.c.l.b16 %v540
        %v1484 = vunpack.c.l.b16 %v541
        %v1485 = vunpack.c.l.b16 %v542
        %v1486 = vunpack.c.l.b16 %v543
        %v1487 = vunpack.c.l.b16 %v544
        %v1488 = vunpack.c.l.b16 %v545
        %v1489 = vunpack.c.l.b16 %v546
        %v1490 = vunpack.c.l.b16 %v547
        %v1491 = vunpack.c.l.b16 %v548
        %v1492 = vunpack.c.l.b16 %v549
        %v1493 = vunpack.c.l.b16 %v550
        %v1494 = vunpack.c.l.b16 %v551
        %v1495 = vunpack.c.l.b16 %v552
        %v1496 = vunpack.c.l.b16 %v553
        %v1497 = vunpack.c.l.b16 %v554
        %v1498 = vunpack.c.l.b16 %v555
        %v1499 = vunpack.c.l.b16 %v556
        %v1500 = vunpack.c.l.b16 %v557
        %v1501 = vunpack.c.l.b16 %v558
        %v1502 = vunpack.c.l.b16 %v559
        %v1503 = vunpack.c.l.b16 %v560
        %v1504 = vunpack.c.l.b16 %v561
        %v1505 = vunpack.c.l.b16 %v562
        %v1506 = vunpack.c.l.b16 %v563
        %v1507 = vunpack.c.l.b16 %v564
        %v1508 = vunpack.c.l.b16 %v565
        %v1509 = vunpack.c.l.b16 %v566
        %v1510 = vunpack.c.l.b16 %v567
        %v1511 = vunpack.c.l.b16 %v568
        %v1512 = vunpack.c.l.b16 %v569
        %v1513 = vunpack.c.l.b16 %v570
        %v1514 = vunpack.c.l.b16 %v571
        %v1515 = vunpack.c.l.b16 %v572
        %v1516 = vunpack.c.l.b16 %v573
        %v1517 = vunpack.c.l.b16 %v574
        %v1518 = vunpack.c.l.b16 %v575
        %v1519 = vunpack.c.l.b16 %v576
        %v1520 = vunpack.c.l.b16 %v577
        %v1521 = vunpack.c.l.b16 %v578
        %v1522 = vunpack.c.l.b16 %v579
        %v1523 = vunpack.c.l.b16 %v580
        %v1524 = vunpack.c.l.b16 %v581
        %v1525 = vunpack.c.l.b16 %v582
        %v1526 = vunpack.c.l.b16 %v583
        %v1527 = vunpack.c.l.b16 %v584
        %v1528 = vunpack.c.l.b16 %v585
        %v1529 = vunpack.c.l.b16 %v586
        %v1530 = vunpack.c.l.b16 %v587
        %v1531 = vunpack.c.l.b16 %v588
        %v1532 = vunpack.c.l.b16 %v589
        %v1533 = vunpack.c.l.b16 %v590
        %v1534 = vunpack.c.l.b16 %v591
        %v1535 = vunpack.c.l.b16 %v592
        %v1536 = vunpack.c.l.b16 %v593
        %v1537 = vunpack.c.l.b16 %v594
        %v1538 = vunpack.c.l.b16 %v595
        %v1539 = vunpack.c.l.b16 %v596
        %v1540 = vunpack.c.l.b16 %v597
        %v1541 = vunpack.c.l.b16 %v598
        %v1542 = vunpack.c.l.b16 %v599
        %v1543 = vunpack.c.l.b16 %v600
        %v1544 = vunpack.c.l.b16 %v601
        %v1545 = vunpack.c.l.b16 %v602
        %v1546 = vunpack.c.l.b16 %v603
        %v1547 = vunpack.c.l.b16 %v604
        %v1548 = vunpack.c.l.b16 %v605
        %v1549 = vunpack.c.l.b16 %v606
        %v1550 = vunpack.c.l.b16 %v607
        %v1551 = vunpack.c.l.b16 %v608
        %v1552 = vunpack.c.l.b16 %v609
        %v1553 = vunpack.c.l.b16 %v610
        %v1554 = vunpack.c.l.b16 %v611
        %v1555 = vunpack.c.l.b16 %v612
        %v1556 = vunpack.c.l.b16 %v613
        %v1557 = vunpack.c.l.b16 %v614
        %v1558 = vunpack.c.l.b16 %v615
        %v1559 = vunpack.c.l.b16 %v616
        %v1560 = vunpack.c.l.b16 %v617
        %v1561 = vunpack.c.l.b16 %v618
        %v1562 = vunpack.c.l.b16 %v619
        %v1563 = vunpack.c.l.b16 %v620
        %v1564 = vunpack.c.l.b16 %v621
        %v1565 = vunpack.c.l.b16 %v622
        %v1566 = vunpack.c.l.b16 %v623
        %v1567 = vunpack.c.l.b16 %v624
        %v1568 = vunpack.c.l.b16 %v625
        %v1569 = vunpack.c.l.b16 %v626
        %v1570 = vunpack.c.l.b16 %v627
        %v1571 = vunpack.c.l.b16 %v628
        %v1572 = vunpack.c.l.b16 %v629
        %v1573 = vunpack.c.l.b16 %v630
        %v1574 = vunpack.c.l.b16 %v631
        %v1575 = vunpack.c.l.b16 %v632
        %v1576 = vunpack.c.l.b16 %v633
        %v1577 = vunpack.c.l.b16 %v634
        %v1578 = vunpack.c.l.b16 %v635
        %v1579 = vunpack.c.l.b16 %v636
        %v1580 = vpack.c.b16 %v1293, %v1292
        %v1581 = vpack.c.b16 %v1295, %v1294
        %v1582 = vpack.c.b16 %v1297, %v1296
        %v1583 = vpack.c.b16 %v1299, %v1298
        %v1584 = vpack.c.b16 %v1301, %v1300
        %v1585 = vpack.c.b16 %v1303, %v1302
        %v1586 = vpack.c.b16 %v1305, %v1304
        %v1587 = vpack.c.b16 %v1307, %v1306
        %v1588 = vpack.c.b16 %v1309, %v1308
        %v1589 = vpack.c.b16 %v1311, %v1310
        %v1590 = vpack.c.b16 %v1313, %v1312
        %v1591 = vpack.c.b16 %v1315, %v1314
        %v1592 = vpack.c.b16 %v1317, %v1316
        %v1593 = vpack.c.b16 %v1319, %v1318
        %v1594 = vpack.c.b16 %v1321, %v1320
        %v1595 = vpack.c.b16 %v1323, %v1322
        %v1596 = vpack.c.b16 %v1325, %v1324
        %v1597 = vpack.c.b16 %v1327, %v1326
        %v1598 = vpack.c.b16 %v1329, %v1328
        %v1599 = vpack.c.b16 %v1331, %v1330
        %v1600 = vpack.c.b16 %v1333, %v1332
        %v1601 = vpack.c.b16 %v1335, %v1334
        %v1602 = vpack.c.b16 %v1337, %v1336
        %v1603 = vpack.c.b16 %v1339, %v1338
        %v1604 = vpack.c.b16 %v1341, %v1340
        %v1605 = vpack.c.b16 %v1343, %v1342
        %v1606 = vpack.c.b16 %v1345, %v1344
        %v1607 = vpack.c.b16 %v1347, %v1346
        %v1608 = vpack.c.b16 %v1349, %v1348
        %v1609 = vpack.c.b16 %v1351, %v1350
        %v1610 = vpack.c.b16 %v1353, %v1352
        %v1611 = vpack.c.b16 %v1355, %v1354
        %v1612 = vpack.c.b16 %v1357, %v1356
        %v1613 = vpack.c.b16 %v1359, %v1358
        %v1614 = vpack.c.b16 %v1361, %v1360
        %v1615 = vpack.c.b16 %v1363, %v1362
        %v1616 = vpack.c.b16 %v1365, %v1364
        %v1617 = vpack.c.b16 %v1367, %v1366
        %v1618 = vpack.c.b16 %v1369, %v1368
        %v1619 = vpack.c.b16 %v1371, %v1370
        %v1620 = vpack.c.b16 %v1373, %v1372
        %v1621 = vpack.c.b16 %v1375, %v1374
        %v1622 = vpack.c.b16 %v1377, %v1376
        %v1623 = vpack.c.b16 %v1379, %v1378
        %v1624 = vpack.c.b16 %v1381, %v1380
        %v1625 = vpack.c.b16 %v1383, %v1382
        %v1626 = vpack.c.b16 %v1385, %v1384
        %v1627 = vpack.c.b16 %v1387, %v1386
        %v1628 = vpack.c.b16 %v1389, %v1388
        %v1629 = vpack.c.b16 %v1391, %v1390
        %v1630 = vpack.c.b16 %v1393, %v1392
        %v1631 = vpack.c.b16 %v1395, %v1394
        %v1632 = vpack.c.b16 %v1397, %v1396
        %v1633 = vpack.c.b16 %v1399, %v1398
        %v1634 = vpack.c.b16 %v1401, %v1400
        %v1635 = vpack.c.b16 %v1403, %v1402
        %v1636 = vpack.c.b16 %v1405, %v1404
        %v1637 = vpack.c.b16 %v1407, %v1406
        %v1638 = vpack.c.b16 %v1409, %v1408
        %v1639 = vpack.c.b16 %v1411, %v1410
        %v1640 = vpack.c.b16 %v1413, %v1412
        %v1641 = vpack.c.b16 %v1415, %v1414
        %v1642 = vpack.c.b16 %v1417, %v1416
        %v1643 = vpack.c.b16 %v1419, %v1418
        %v1644 = vpack.c.b16 %v1421, %v1420
        %v1645 = vpack.c.b16 %v1423, %v1422
        %v1646 = vpack.c.b16 %v1425, %v1424
        %v1647 = vpack.c.b16 %v1427, %v1426
        %v1648 = vpack.c.b16 %v1429, %v1428
        %v1649 = vpack.c.b16 %v1431, %v1430
        %v1650 = vpack.c.b16 %v1433, %v1432
        %v1651 = vpack.c.b16 %v1435, %v1434
        %v1652 = vpack.c.b16 %v1437, %v1436
        %v1653 = vpack.c.b16 %v1439, %v1438
        %v1654 = vpack.c.b16 %v1441, %v1440
        %v1655 = vpack.c.b16 %v1443, %v1442
        %v1656 = vpack.c.b16 %v1445, %v1444
        %v1657 = vpack.c.b16 %v1447, %v1446
        %v1658 = vpack.c.b16 %v1449, %v1448
        %v1659 = vpack.c.b16 %v1451, %v1450
        %v1660 = vpack.c.b16 %v1453, %v1452
        %v1661 = vpack.c.b16 %v1455, %v1454
        %v1662 = vpack.c.b16 %v1457, %v1456
        %v1663 = vpack.c.b16 %v1459, %v1458
        %v1664 = vpack.c.b16 %v1461, %v1460
        %v1665 = vpack.c.b16 %v1463, %v1462
        %v1666 = vpack.c.b16 %v1465, %v1464
        %v1667 = vpack.c.b16 %v1467, %v1466
        %v1668 = vpack.c.b16 %v1469, %v1468
        %v1669 = vpack.c.b16 %v1471, %v1470
        %v1670 = vpack.c.b16 %v1473, %v1472
        %v1671 = vpack.c.b16 %v1475, %v1474
        %v1672 = vpack.c.b16 %v1477, %v1476
        %v1673 = vpack.c.b16 %v1479, %v1478
        %v1674 = vpack.c.b16 %v1481, %v1480
        %v1675 = vpack.c.b16 %v1483, %v1482
        %v1676 = vpack.c.b16 %v1485, %v1484
        %v1677 = vpack.c.b16 %v1487, %v1486
        %v1678 = vpack.c.b16 %v1489, %v1488
        %v1679 = vpack.c.b16 %v1491, %v1490
        %v1680 = vpack.c.b16 %v1493, %v1492
        %v1681 = vpack.c.b16 %v1495, %v1494
        %v1682 = vpack.c.b16 %v1497, %v1496
        %v1683 = vpack.c.b16 %v1499, %v1498
        %v1684 = vpack.c.b16 %v1501, %v1500
        %v1685 = vpack.c.b16 %v1503, %v1502
        %v1686 = vpack.c.b16 %v1505, %v1504
        %v1687 = vpack.c.b16 %v1507, %v1506
        %v1688 = vpack.c.b16 %v1509, %v1508
        %v1689 = vpack.c.b16 %v1511, %v1510
        %v1690 = vpack.c.b16 %v1513, %v1512
        %v1691 = vpack.c.b16 %v1515, %v1514
        %v1692 = vpack.c.b16 %v1517, %v1516
        %v1693 = vpack.c.b16 %v1519, %v1518
        %v1694 = vpack.c.b16 %v1521, %v1520
        %v1695 = vpack.c.b16 %v1523, %v1522
        %v1696 = vpack.c.b16 %v1525, %v1524
        %v1697 = vpack.c.b16 %v1527, %v1526
        %v1698 = vpack.c.b16 %v1529, %v1528
        %v1699 = vpack.c.b16 %v1531, %v1530
        %v1700 = vpack.c.b16 %v1533, %v1532
        %v1701 = vpack.c.b16 %v1535, %v1534
        %v1702 = vpack.c.b16 %v1537, %v1536
        %v1703 = vpack.c.b16 %v1539, %v1538
        %v1704 = vpack.c.b16 %v1541, %v1540
        %v1705 = vpack.c.b16 %v1543, %v1542
        %v1706 = vpack.c.b16 %v1545, %v1544
        %v1707 = vpack.c.b16 %v1547, %v1546
        %v1708 = vpack.c.b16 %v1549, %v1548
        %v1709 = vpack.c.b16 %v1551, %v1550
        %v1710 = vpack.c.b16 %v1553, %v1552
        %v1711 = vpack.c.b16 %v1555, %v1554
        %v1712 = vpack.c.b16 %v1557, %v1556
        %v1713 = vpack.c.b16 %v1559, %v1558
        %v1714 = vpack.c.b16 %v1561, %v1560
        %v1715 = vpack.c.b16 %v1563, %v1562
        %v1716 = vpack.c.b16 %v1565, %v1564
        %v1717 = vpack.c.b16 %v1567, %v1566
        %v1718 = vpack.c.b16 %v1569, %v1568
        %v1719 = vpack.c.b16 %v1571, %v1570
        %v1720 = vpack.c.b16 %v1573, %v1572
        %v1721 = vpack.c.b16 %v1575, %v1574
        %v1722 = vpack.c.b16 %v1577, %v1576
        %v1723 = vpack.c.b16 %v1579, %v1578
        %1868 = vmatprep.subr.bf16.mxu0 0
        %1869 = vmatpush1.bf16.msra.mxu0 %v1587
        %1870 = vmatprep.subr.bf16.mxu0 0
        %1871 = vmatpush1.bf16.msra.mxu0 %v1586
        %1872 = vmatprep.subr.bf16.mxu0 0
        %1873 = vmatpush1.bf16.msra.mxu0 %v1585
        %1874 = vmatprep.subr.bf16.mxu0 0
        %1875 = vmatpush1.bf16.msra.mxu0 %v1584
        %1876 = vmatprep.subr.bf16.mxu0 0
        %1877 = vmatpush1.bf16.msra.mxu0 %v1583
        %1878 = vmatprep.subr.bf16.mxu0 0
        %1879 = vmatpush1.bf16.msra.mxu0 %v1582
        %1880 = vmatprep.subr.bf16.mxu0 0
        %1881 = vmatpush1.bf16.msra.mxu0 %v1581
        %1882 = vmatprep.subr.bf16.mxu0 0
        %1883 = vmatpush1.bf16.msra.mxu0 %v1580
        %1884 = vmatprep.subr.bf16.mxu0 0
        %1885 = vmatpush2.bf16.msra.mxu0 %v1595
        %1886 = vmatprep.subr.bf16.mxu0 0
        %1887 = vmatpush2.bf16.msra.mxu0 %v1594
        %1888 = vmatprep.subr.bf16.mxu0 0
        %1889 = vmatpush2.bf16.msra.mxu0 %v1593
        %1890 = vmatprep.subr.bf16.mxu0 0
        %1891 = vmatpush2.bf16.msra.mxu0 %v1592
        %1892 = vmatprep.subr.bf16.mxu0 0
        %1893 = vmatpush2.bf16.msra.mxu0 %v1591
        %1894 = vmatprep.subr.bf16.mxu0 0
        %1895 = vmatpush2.bf16.msra.mxu0 %v1590
        %1896 = vmatprep.subr.bf16.mxu0 0
        %1897 = vmatpush2.bf16.msra.mxu0 %v1589
        %1898 = vmatprep.subr.bf16.mxu0 0
        %1899 = vmatpush2.bf16.msra.mxu0 %v1588
        %1900 = vmatprep.mubr.bf16.mxu0 %v861
        %1901 = vmatmul.mubr.bf16.gmra.mxu0 %v860
        %v1902 = vpop.f32.mrf.mxu0
        %v1903 = vadd.f32 %v642, %v1902
        %v1904 = vpop.f32.mrf.mxu0
        %v1905 = vpop.f32.mrf.mxu0
        %v1906 = vadd.f32 %v642, %v1905
        %v1907 = vpop.f32.mrf.mxu0
        %1908 = vmatprep.mubr.bf16.mxu0 %v879
        %1909 = vmatmul.mubr.bf16.gmra.mxu0 %v878
        %v1910 = vpop.f32.mrf.mxu0
        %v1911 = vadd.f32 %v642, %v1910
        %v1912 = vpop.f32.mrf.mxu0
        %v1913 = vpop.f32.mrf.mxu0
        %v1914 = vadd.f32 %v642, %v1913
        %v1915 = vpop.f32.mrf.mxu0
        %1916 = vmatprep.mubr.bf16.mxu0 %v897
        %1917 = vmatmul.mubr.bf16.gmra.mxu0 %v896
        %v1918 = vpop.f32.mrf.mxu0
        %v1919 = vadd.f32 %v642, %v1918
        %v1920 = vpop.f32.mrf.mxu0
        %v1921 = vpop.f32.mrf.mxu0
        %v1922 = vadd.f32 %v642, %v1921
        %v1923 = vpop.f32.mrf.mxu0
        %1924 = vmatprep.mubr.bf16.mxu0 %v915
        %1925 = vmatmul.mubr.bf16.gmra.mxu0 %v914
        %v1926 = vpop.f32.mrf.mxu0
        %v1927 = vadd.f32 %v642, %v1926
        %v1928 = vpop.f32.mrf.mxu0
        %v1929 = vpop.f32.mrf.mxu0
        %v1930 = vadd.f32 %v642, %v1929
        %v1931 = vpop.f32.mrf.mxu0
        %1932 = vdwg.mxu0
        %1933 = vmatprep.subr.bf16.mxu0 0
        %1934 = vmatpush1.bf16.msra.mxu0 %v1603
        %1935 = vmatprep.subr.bf16.mxu0 0
        %1936 = vmatpush1.bf16.msra.mxu0 %v1602
        %1937 = vmatprep.subr.bf16.mxu0 0
        %1938 = vmatpush1.bf16.msra.mxu0 %v1601
        %1939 = vmatprep.subr.bf16.mxu0 0
        %1940 = vmatpush1.bf16.msra.mxu0 %v1600
        %1941 = vmatprep.subr.bf16.mxu0 0
        %1942 = vmatpush1.bf16.msra.mxu0 %v1599
        %1943 = vmatprep.subr.bf16.mxu0 0
        %1944 = vmatpush1.bf16.msra.mxu0 %v1598
        %1945 = vmatprep.subr.bf16.mxu0 0
        %1946 = vmatpush1.bf16.msra.mxu0 %v1597
        %1947 = vmatprep.subr.bf16.mxu0 0
        %1948 = vmatpush1.bf16.msra.mxu0 %v1596
        %1949 = vmatprep.subr.bf16.mxu0 0
        %1950 = vmatpush2.bf16.msra.mxu0 %v1611
        %1951 = vmatprep.subr.bf16.mxu0 0
        %1952 = vmatpush2.bf16.msra.mxu0 %v1610
        %1953 = vmatprep.subr.bf16.mxu0 0
        %1954 = vmatpush2.bf16.msra.mxu0 %v1609
        %1955 = vmatprep.subr.bf16.mxu0 0
        %1956 = vmatpush2.bf16.msra.mxu0 %v1608
        %1957 = vmatprep.subr.bf16.mxu0 0
        %1958 = vmatpush2.bf16.msra.mxu0 %v1607
        %1959 = vmatprep.subr.bf16.mxu0 0
        %1960 = vmatpush2.bf16.msra.mxu0 %v1606
        %1961 = vmatprep.subr.bf16.mxu0 0
        %1962 = vmatpush2.bf16.msra.mxu0 %v1605
        %1963 = vmatprep.subr.bf16.mxu0 0
        %1964 = vmatpush2.bf16.msra.mxu0 %v1604
        %1965 = vmatprep.mubr.bf16.mxu0 %v863
        %1966 = vmatmul.mubr.bf16.gmra.mxu0 %v862
        %v1967 = vpop.f32.mrf.mxu0
        %v1968 = vadd.f32 %v1903, %v1967
        %v1969 = vpop.f32.mrf.mxu0
        %v1970 = vpop.f32.mrf.mxu0
        %v1971 = vadd.f32 %v1906, %v1970
        %v1972 = vpop.f32.mrf.mxu0
        %1973 = vmatprep.mubr.bf16.mxu0 %v881
        %1974 = vmatmul.mubr.bf16.gmra.mxu0 %v880
        %v1975 = vpop.f32.mrf.mxu0
        %v1976 = vadd.f32 %v1911, %v1975
        %v1977 = vpop.f32.mrf.mxu0
        %v1978 = vpop.f32.mrf.mxu0
        %v1979 = vadd.f32 %v1914, %v1978
        %v1980 = vpop.f32.mrf.mxu0
        %1981 = vmatprep.mubr.bf16.mxu0 %v899
        %1982 = vmatmul.mubr.bf16.gmra.mxu0 %v898
        %v1983 = vpop.f32.mrf.mxu0
        %v1984 = vadd.f32 %v1919, %v1983
        %v1985 = vpop.f32.mrf.mxu0
        %v1986 = vpop.f32.mrf.mxu0
        %v1987 = vadd.f32 %v1922, %v1986
        %v1988 = vpop.f32.mrf.mxu0
        %1989 = vmatprep.mubr.bf16.mxu0 %v917
        %1990 = vmatmul.mubr.bf16.gmra.mxu0 %v916
        %v1991 = vpop.f32.mrf.mxu0
        %v1992 = vadd.f32 %v1927, %v1991
        %v1993 = vpop.f32.mrf.mxu0
        %v1994 = vpop.f32.mrf.mxu0
        %v1995 = vadd.f32 %v1930, %v1994
        %v1996 = vpop.f32.mrf.mxu0
        %1997 = vdwg.mxu0
        %1998 = vmatprep.subr.bf16.mxu0 0
        %1999 = vmatpush1.bf16.msra.mxu0 %v1619
        %2000 = vmatprep.subr.bf16.mxu0 0
        %2001 = vmatpush1.bf16.msra.mxu0 %v1618
        %2002 = vmatprep.subr.bf16.mxu0 0
        %2003 = vmatpush1.bf16.msra.mxu0 %v1617
        %2004 = vmatprep.subr.bf16.mxu0 0
        %2005 = vmatpush1.bf16.msra.mxu0 %v1616
        %2006 = vmatprep.subr.bf16.mxu0 0
        %2007 = vmatpush1.bf16.msra.mxu0 %v1615
        %2008 = vmatprep.subr.bf16.mxu0 0
        %2009 = vmatpush1.bf16.msra.mxu0 %v1614
        %2010 = vmatprep.subr.bf16.mxu0 0
        %2011 = vmatpush1.bf16.msra.mxu0 %v1613
        %2012 = vmatprep.subr.bf16.mxu0 0
        %2013 = vmatpush1.bf16.msra.mxu0 %v1612
        %2014 = vmatprep.subr.bf16.mxu0 0
        %2015 = vmatpush2.bf16.msra.mxu0 %v1627
        %2016 = vmatprep.subr.bf16.mxu0 0
        %2017 = vmatpush2.bf16.msra.mxu0 %v1626
        %2018 = vmatprep.subr.bf16.mxu0 0
        %2019 = vmatpush2.bf16.msra.mxu0 %v1625
        %2020 = vmatprep.subr.bf16.mxu0 0
        %2021 = vmatpush2.bf16.msra.mxu0 %v1624
        %2022 = vmatprep.subr.bf16.mxu0 0
        %2023 = vmatpush2.bf16.msra.mxu0 %v1623
        %2024 = vmatprep.subr.bf16.mxu0 0
        %2025 = vmatpush2.bf16.msra.mxu0 %v1622
        %2026 = vmatprep.subr.bf16.mxu0 0
        %2027 = vmatpush2.bf16.msra.mxu0 %v1621
        %2028 = vmatprep.subr.bf16.mxu0 0
        %2029 = vmatpush2.bf16.msra.mxu0 %v1620
        %2030 = vmatprep.mubr.bf16.mxu0 %v865
        %2031 = vmatmul.mubr.bf16.gmra.mxu0 %v864
        %v2032 = vpop.f32.mrf.mxu0
        %v2033 = vadd.f32 %v1968, %v2032
        %v2034 = vpop.f32.mrf.mxu0
        %v2035 = vpop.f32.mrf.mxu0
        %v2036 = vadd.f32 %v1971, %v2035
        %v2037 = vpop.f32.mrf.mxu0
        %2038 = vmatprep.mubr.bf16.mxu0 %v883
        %2039 = vmatmul.mubr.bf16.gmra.mxu0 %v882
        %v2040 = vpop.f32.mrf.mxu0
        %v2041 = vadd.f32 %v1976, %v2040
        %v2042 = vpop.f32.mrf.mxu0
        %v2043 = vpop.f32.mrf.mxu0
        %v2044 = vadd.f32 %v1979, %v2043
        %v2045 = vpop.f32.mrf.mxu0
        %2046 = vmatprep.mubr.bf16.mxu0 %v901
        %2047 = vmatmul.mubr.bf16.gmra.mxu0 %v900
        %v2048 = vpop.f32.mrf.mxu0
        %v2049 = vadd.f32 %v1984, %v2048
        %v2050 = vpop.f32.mrf.mxu0
        %v2051 = vpop.f32.mrf.mxu0
        %v2052 = vadd.f32 %v1987, %v2051
        %v2053 = vpop.f32.mrf.mxu0
        %2054 = vmatprep.mubr.bf16.mxu0 %v919
        %2055 = vmatmul.mubr.bf16.gmra.mxu0 %v918
        %v2056 = vpop.f32.mrf.mxu0
        %v2057 = vadd.f32 %v1992, %v2056
        %v2058 = vpop.f32.mrf.mxu0
        %v2059 = vpop.f32.mrf.mxu0
        %v2060 = vadd.f32 %v1995, %v2059
        %v2061 = vpop.f32.mrf.mxu0
        %2062 = vdwg.mxu0
        %2063 = vmatprep.subr.bf16.mxu0 0
        %2064 = vmatpush1.bf16.msra.mxu0 %v1635
        %2065 = vmatprep.subr.bf16.mxu0 0
        %2066 = vmatpush1.bf16.msra.mxu0 %v1634
        %2067 = vmatprep.subr.bf16.mxu0 0
        %2068 = vmatpush1.bf16.msra.mxu0 %v1633
        %2069 = vmatprep.subr.bf16.mxu0 0
        %2070 = vmatpush1.bf16.msra.mxu0 %v1632
        %2071 = vmatprep.subr.bf16.mxu0 0
        %2072 = vmatpush1.bf16.msra.mxu0 %v1631
        %2073 = vmatprep.subr.bf16.mxu0 0
        %2074 = vmatpush1.bf16.msra.mxu0 %v1630
        %2075 = vmatprep.subr.bf16.mxu0 0
        %2076 = vmatpush1.bf16.msra.mxu0 %v1629
        %2077 = vmatprep.subr.bf16.mxu0 0
        %2078 = vmatpush1.bf16.msra.mxu0 %v1628
        %2079 = vmatprep.subr.bf16.mxu0 0
        %2080 = vmatpush2.bf16.msra.mxu0 %v1643
        %2081 = vmatprep.subr.bf16.mxu0 0
        %2082 = vmatpush2.bf16.msra.mxu0 %v1642
        %2083 = vmatprep.subr.bf16.mxu0 0
        %2084 = vmatpush2.bf16.msra.mxu0 %v1641
        %2085 = vmatprep.subr.bf16.mxu0 0
        %2086 = vmatpush2.bf16.msra.mxu0 %v1640
        %2087 = vmatprep.subr.bf16.mxu0 0
        %2088 = vmatpush2.bf16.msra.mxu0 %v1639
        %2089 = vmatprep.subr.bf16.mxu0 0
        %2090 = vmatpush2.bf16.msra.mxu0 %v1638
        %2091 = vmatprep.subr.bf16.mxu0 0
        %2092 = vmatpush2.bf16.msra.mxu0 %v1637
        %2093 = vmatprep.subr.bf16.mxu0 0
        %2094 = vmatpush2.bf16.msra.mxu0 %v1636
        %2095 = vmatprep.mubr.bf16.mxu0 %v867
        %2096 = vmatmul.mubr.bf16.gmra.mxu0 %v866
        %v2097 = vpop.f32.mrf.mxu0
        %v2098 = vadd.f32 %v2033, %v2097
        %v2099 = vpop.f32.mrf.mxu0
        %v2100 = vpop.f32.mrf.mxu0
        %v2101 = vadd.f32 %v2036, %v2100
        %v2102 = vpop.f32.mrf.mxu0
        %2103 = vmatprep.mubr.bf16.mxu0 %v885
        %2104 = vmatmul.mubr.bf16.gmra.mxu0 %v884
        %v2105 = vpop.f32.mrf.mxu0
        %v2106 = vadd.f32 %v2041, %v2105
        %v2107 = vpop.f32.mrf.mxu0
        %v2108 = vpop.f32.mrf.mxu0
        %v2109 = vadd.f32 %v2044, %v2108
        %v2110 = vpop.f32.mrf.mxu0
        %2111 = vmatprep.mubr.bf16.mxu0 %v903
        %2112 = vmatmul.mubr.bf16.gmra.mxu0 %v902
        %v2113 = vpop.f32.mrf.mxu0
        %v2114 = vadd.f32 %v2049, %v2113
        %v2115 = vpop.f32.mrf.mxu0
        %v2116 = vpop.f32.mrf.mxu0
        %v2117 = vadd.f32 %v2052, %v2116
        %v2118 = vpop.f32.mrf.mxu0
        %2119 = vmatprep.mubr.bf16.mxu0 %v921
        %2120 = vmatmul.mubr.bf16.gmra.mxu0 %v920
        %v2121 = vpop.f32.mrf.mxu0
        %v2122 = vadd.f32 %v2057, %v2121
        %v2123 = vpop.f32.mrf.mxu0
        %v2124 = vpop.f32.mrf.mxu0
        %v2125 = vadd.f32 %v2060, %v2124
        %v2126 = vpop.f32.mrf.mxu0
        %2127 = vdwg.mxu0
        %2128 = vmatprep.subr.bf16.mxu0 0
        %2129 = vmatpush1.bf16.msra.mxu0 %v1651
        %2130 = vmatprep.subr.bf16.mxu0 0
        %2131 = vmatpush1.bf16.msra.mxu0 %v1650
        %2132 = vmatprep.subr.bf16.mxu0 0
        %2133 = vmatpush1.bf16.msra.mxu0 %v1649
        %2134 = vmatprep.subr.bf16.mxu0 0
        %2135 = vmatpush1.bf16.msra.mxu0 %v1648
        %2136 = vmatprep.subr.bf16.mxu0 0
        %2137 = vmatpush1.bf16.msra.mxu0 %v1647
        %2138 = vmatprep.subr.bf16.mxu0 0
        %2139 = vmatpush1.bf16.msra.mxu0 %v1646
        %2140 = vmatprep.subr.bf16.mxu0 0
        %2141 = vmatpush1.bf16.msra.mxu0 %v1645
        %2142 = vmatprep.subr.bf16.mxu0 0
        %2143 = vmatpush1.bf16.msra.mxu0 %v1644
        %2144 = vmatprep.subr.bf16.mxu0 0
        %2145 = vmatpush2.bf16.msra.mxu0 %v1659
        %2146 = vmatprep.subr.bf16.mxu0 0
        %2147 = vmatpush2.bf16.msra.mxu0 %v1658
        %2148 = vmatprep.subr.bf16.mxu0 0
        %2149 = vmatpush2.bf16.msra.mxu0 %v1657
        %2150 = vmatprep.subr.bf16.mxu0 0
        %2151 = vmatpush2.bf16.msra.mxu0 %v1656
        %2152 = vmatprep.subr.bf16.mxu0 0
        %2153 = vmatpush2.bf16.msra.mxu0 %v1655
        %2154 = vmatprep.subr.bf16.mxu0 0
        %2155 = vmatpush2.bf16.msra.mxu0 %v1654
        %2156 = vmatprep.subr.bf16.mxu0 0
        %2157 = vmatpush2.bf16.msra.mxu0 %v1653
        %2158 = vmatprep.subr.bf16.mxu0 0
        %2159 = vmatpush2.bf16.msra.mxu0 %v1652
        %2160 = vmatprep.mubr.bf16.mxu0 %v869
        %2161 = vmatmul.mubr.bf16.gmra.mxu0 %v868
        %v2162 = vpop.f32.mrf.mxu0
        %v2163 = vadd.f32 %v2098, %v2162
        %v2164 = vpop.f32.mrf.mxu0
        %v2165 = vpop.f32.mrf.mxu0
        %v2166 = vadd.f32 %v2101, %v2165
        %v2167 = vpop.f32.mrf.mxu0
        %2168 = vmatprep.mubr.bf16.mxu0 %v887
        %2169 = vmatmul.mubr.bf16.gmra.mxu0 %v886
        %v2170 = vpop.f32.mrf.mxu0
        %v2171 = vadd.f32 %v2106, %v2170
        %v2172 = vpop.f32.mrf.mxu0
        %v2173 = vpop.f32.mrf.mxu0
        %v2174 = vadd.f32 %v2109, %v2173
        %v2175 = vpop.f32.mrf.mxu0
        %2176 = vmatprep.mubr.bf16.mxu0 %v905
        %2177 = vmatmul.mubr.bf16.gmra.mxu0 %v904
        %v2178 = vpop.f32.mrf.mxu0
        %v2179 = vadd.f32 %v2114, %v2178
        %v2180 = vpop.f32.mrf.mxu0
        %v2181 = vpop.f32.mrf.mxu0
        %v2182 = vadd.f32 %v2117, %v2181
        %v2183 = vpop.f32.mrf.mxu0
        %2184 = vmatprep.mubr.bf16.mxu0 %v923
        %2185 = vmatmul.mubr.bf16.gmra.mxu0 %v922
        %v2186 = vpop.f32.mrf.mxu0
        %v2187 = vadd.f32 %v2122, %v2186
        %v2188 = vpop.f32.mrf.mxu0
        %v2189 = vpop.f32.mrf.mxu0
        %v2190 = vadd.f32 %v2125, %v2189
        %v2191 = vpop.f32.mrf.mxu0
        %2192 = vdwg.mxu0
        %2193 = vmatprep.subr.bf16.mxu0 0
        %2194 = vmatpush1.bf16.msra.mxu0 %v1667
        %2195 = vmatprep.subr.bf16.mxu0 0
        %2196 = vmatpush1.bf16.msra.mxu0 %v1666
        %2197 = vmatprep.subr.bf16.mxu0 0
        %2198 = vmatpush1.bf16.msra.mxu0 %v1665
        %2199 = vmatprep.subr.bf16.mxu0 0
        %2200 = vmatpush1.bf16.msra.mxu0 %v1664
        %2201 = vmatprep.subr.bf16.mxu0 0
        %2202 = vmatpush1.bf16.msra.mxu0 %v1663
        %2203 = vmatprep.subr.bf16.mxu0 0
        %2204 = vmatpush1.bf16.msra.mxu0 %v1662
        %2205 = vmatprep.subr.bf16.mxu0 0
        %2206 = vmatpush1.bf16.msra.mxu0 %v1661
        %2207 = vmatprep.subr.bf16.mxu0 0
        %2208 = vmatpush1.bf16.msra.mxu0 %v1660
        %2209 = vmatprep.subr.bf16.mxu0 0
        %2210 = vmatpush2.bf16.msra.mxu0 %v1675
        %2211 = vmatprep.subr.bf16.mxu0 0
        %2212 = vmatpush2.bf16.msra.mxu0 %v1674
        %2213 = vmatprep.subr.bf16.mxu0 0
        %2214 = vmatpush2.bf16.msra.mxu0 %v1673
        %2215 = vmatprep.subr.bf16.mxu0 0
        %2216 = vmatpush2.bf16.msra.mxu0 %v1672
        %2217 = vmatprep.subr.bf16.mxu0 0
        %2218 = vmatpush2.bf16.msra.mxu0 %v1671
        %2219 = vmatprep.subr.bf16.mxu0 0
        %2220 = vmatpush2.bf16.msra.mxu0 %v1670
        %2221 = vmatprep.subr.bf16.mxu0 0
        %2222 = vmatpush2.bf16.msra.mxu0 %v1669
        %2223 = vmatprep.subr.bf16.mxu0 0
        %2224 = vmatpush2.bf16.msra.mxu0 %v1668
        %2225 = vmatprep.mubr.bf16.mxu0 %v871
        %2226 = vmatmul.mubr.bf16.gmra.mxu0 %v870
        %v2227 = vpop.f32.mrf.mxu0
        %v2228 = vadd.f32 %v2163, %v2227
        %v2229 = vpop.f32.mrf.mxu0
        %v2230 = vpop.f32.mrf.mxu0
        %v2231 = vadd.f32 %v2166, %v2230
        %v2232 = vpop.f32.mrf.mxu0
        %2233 = vmatprep.mubr.bf16.mxu0 %v889
        %2234 = vmatmul.mubr.bf16.gmra.mxu0 %v888
        %v2235 = vpop.f32.mrf.mxu0
        %v2236 = vadd.f32 %v2171, %v2235
        %v2237 = vpop.f32.mrf.mxu0
        %v2238 = vpop.f32.mrf.mxu0
        %v2239 = vadd.f32 %v2174, %v2238
        %v2240 = vpop.f32.mrf.mxu0
        %2241 = vmatprep.mubr.bf16.mxu0 %v907
        %2242 = vmatmul.mubr.bf16.gmra.mxu0 %v906
        %v2243 = vpop.f32.mrf.mxu0
        %v2244 = vadd.f32 %v2179, %v2243
        %v2245 = vpop.f32.mrf.mxu0
        %v2246 = vpop.f32.mrf.mxu0
        %v2247 = vadd.f32 %v2182, %v2246
        %v2248 = vpop.f32.mrf.mxu0
        %2249 = vmatprep.mubr.bf16.mxu0 %v925
        %2250 = vmatmul.mubr.bf16.gmra.mxu0 %v924
        %v2251 = vpop.f32.mrf.mxu0
        %v2252 = vadd.f32 %v2187, %v2251
        %v2253 = vpop.f32.mrf.mxu0
        %v2254 = vpop.f32.mrf.mxu0
        %v2255 = vadd.f32 %v2190, %v2254
        %v2256 = vpop.f32.mrf.mxu0
        %2257 = vdwg.mxu0
        %2258 = vmatprep.subr.bf16.mxu0 0
        %2259 = vmatpush1.bf16.msra.mxu0 %v1683
        %2260 = vmatprep.subr.bf16.mxu0 0
        %2261 = vmatpush1.bf16.msra.mxu0 %v1682
        %2262 = vmatprep.subr.bf16.mxu0 0
        %2263 = vmatpush1.bf16.msra.mxu0 %v1681
        %2264 = vmatprep.subr.bf16.mxu0 0
        %2265 = vmatpush1.bf16.msra.mxu0 %v1680
        %2266 = vmatprep.subr.bf16.mxu0 0
        %2267 = vmatpush1.bf16.msra.mxu0 %v1679
        %2268 = vmatprep.subr.bf16.mxu0 0
        %2269 = vmatpush1.bf16.msra.mxu0 %v1678
        %2270 = vmatprep.subr.bf16.mxu0 0
        %2271 = vmatpush1.bf16.msra.mxu0 %v1677
        %2272 = vmatprep.subr.bf16.mxu0 0
        %2273 = vmatpush1.bf16.msra.mxu0 %v1676
        %2274 = vmatprep.subr.bf16.mxu0 0
        %2275 = vmatpush2.bf16.msra.mxu0 %v1691
        %2276 = vmatprep.subr.bf16.mxu0 0
        %2277 = vmatpush2.bf16.msra.mxu0 %v1690
        %2278 = vmatprep.subr.bf16.mxu0 0
        %2279 = vmatpush2.bf16.msra.mxu0 %v1689
        %2280 = vmatprep.subr.bf16.mxu0 0
        %2281 = vmatpush2.bf16.msra.mxu0 %v1688
        %2282 = vmatprep.subr.bf16.mxu0 0
        %2283 = vmatpush2.bf16.msra.mxu0 %v1687
        %2284 = vmatprep.subr.bf16.mxu0 0
        %2285 = vmatpush2.bf16.msra.mxu0 %v1686
        %2286 = vmatprep.subr.bf16.mxu0 0
        %2287 = vmatpush2.bf16.msra.mxu0 %v1685
        %2288 = vmatprep.subr.bf16.mxu0 0
        %2289 = vmatpush2.bf16.msra.mxu0 %v1684
        %2290 = vmatprep.mubr.bf16.mxu0 %v873
        %2291 = vmatmul.mubr.bf16.gmra.mxu0 %v872
        %v2292 = vpop.f32.mrf.mxu0
        %v2293 = vadd.f32 %v2228, %v2292
        %v2294 = vpop.f32.mrf.mxu0
        %v2295 = vpop.f32.mrf.mxu0
        %v2296 = vadd.f32 %v2231, %v2295
        %v2297 = vpop.f32.mrf.mxu0
        %2298 = vmatprep.mubr.bf16.mxu0 %v891
        %2299 = vmatmul.mubr.bf16.gmra.mxu0 %v890
        %v2300 = vpop.f32.mrf.mxu0
        %v2301 = vadd.f32 %v2236, %v2300
        %v2302 = vpop.f32.mrf.mxu0
        %v2303 = vpop.f32.mrf.mxu0
        %v2304 = vadd.f32 %v2239, %v2303
        %v2305 = vpop.f32.mrf.mxu0
        %2306 = vmatprep.mubr.bf16.mxu0 %v909
        %2307 = vmatmul.mubr.bf16.gmra.mxu0 %v908
        %v2308 = vpop.f32.mrf.mxu0
        %v2309 = vadd.f32 %v2244, %v2308
        %v2310 = vpop.f32.mrf.mxu0
        %v2311 = vpop.f32.mrf.mxu0
        %v2312 = vadd.f32 %v2247, %v2311
        %v2313 = vpop.f32.mrf.mxu0
        %2314 = vmatprep.mubr.bf16.mxu0 %v927
        %2315 = vmatmul.mubr.bf16.gmra.mxu0 %v926
        %v2316 = vpop.f32.mrf.mxu0
        %v2317 = vadd.f32 %v2252, %v2316
        %v2318 = vpop.f32.mrf.mxu0
        %v2319 = vpop.f32.mrf.mxu0
        %v2320 = vadd.f32 %v2255, %v2319
        %v2321 = vpop.f32.mrf.mxu0
        %2322 = vdwg.mxu0
        %2323 = vmatprep.subr.bf16.mxu0 0
        %2324 = vmatpush1.bf16.msra.mxu0 %v1699
        %2325 = vmatprep.subr.bf16.mxu0 0
        %2326 = vmatpush1.bf16.msra.mxu0 %v1698
        %2327 = vmatprep.subr.bf16.mxu0 0
        %2328 = vmatpush1.bf16.msra.mxu0 %v1697
        %2329 = vmatprep.subr.bf16.mxu0 0
        %2330 = vmatpush1.bf16.msra.mxu0 %v1696
        %2331 = vmatprep.subr.bf16.mxu0 0
        %2332 = vmatpush1.bf16.msra.mxu0 %v1695
        %2333 = vmatprep.subr.bf16.mxu0 0
        %2334 = vmatpush1.bf16.msra.mxu0 %v1694
        %2335 = vmatprep.subr.bf16.mxu0 0
        %2336 = vmatpush1.bf16.msra.mxu0 %v1693
        %2337 = vmatprep.subr.bf16.mxu0 0
        %2338 = vmatpush1.bf16.msra.mxu0 %v1692
        %2339 = vmatprep.subr.bf16.mxu0 0
        %2340 = vmatpush2.bf16.msra.mxu0 %v1707
        %2341 = vmatprep.subr.bf16.mxu0 0
        %2342 = vmatpush2.bf16.msra.mxu0 %v1706
        %2343 = vmatprep.subr.bf16.mxu0 0
        %2344 = vmatpush2.bf16.msra.mxu0 %v1705
        %2345 = vmatprep.subr.bf16.mxu0 0
        %2346 = vmatpush2.bf16.msra.mxu0 %v1704
        %2347 = vmatprep.subr.bf16.mxu0 0
        %2348 = vmatpush2.bf16.msra.mxu0 %v1703
        %2349 = vmatprep.subr.bf16.mxu0 0
        %2350 = vmatpush2.bf16.msra.mxu0 %v1702
        %2351 = vmatprep.subr.bf16.mxu0 0
        %2352 = vmatpush2.bf16.msra.mxu0 %v1701
        %2353 = vmatprep.subr.bf16.mxu0 0
        %2354 = vmatpush2.bf16.msra.mxu0 %v1700
        %2355 = vmatprep.mubr.bf16.mxu0 %v875
        %2356 = vmatmul.mubr.bf16.gmra.mxu0 %v874
        %v2357 = vpop.f32.mrf.mxu0
        %v2358 = vadd.f32 %v2293, %v2357
        %v2359 = vpop.f32.mrf.mxu0
        %v2360 = vpop.f32.mrf.mxu0
        %v2361 = vadd.f32 %v2296, %v2360
        %v2362 = vpop.f32.mrf.mxu0
        %2363 = vmatprep.mubr.bf16.mxu0 %v893
        %2364 = vmatmul.mubr.bf16.gmra.mxu0 %v892
        %v2365 = vpop.f32.mrf.mxu0
        %v2366 = vadd.f32 %v2301, %v2365
        %v2367 = vpop.f32.mrf.mxu0
        %v2368 = vpop.f32.mrf.mxu0
        %v2369 = vadd.f32 %v2304, %v2368
        %v2370 = vpop.f32.mrf.mxu0
        %2371 = vmatprep.mubr.bf16.mxu0 %v911
        %2372 = vmatmul.mubr.bf16.gmra.mxu0 %v910
        %v2373 = vpop.f32.mrf.mxu0
        %v2374 = vadd.f32 %v2309, %v2373
        %v2375 = vpop.f32.mrf.mxu0
        %v2376 = vpop.f32.mrf.mxu0
        %v2377 = vadd.f32 %v2312, %v2376
        %v2378 = vpop.f32.mrf.mxu0
        %2379 = vmatprep.mubr.bf16.mxu0 %v929
        %2380 = vmatmul.mubr.bf16.gmra.mxu0 %v928
        %v2381 = vpop.f32.mrf.mxu0
        %v2382 = vadd.f32 %v2317, %v2381
        %v2383 = vpop.f32.mrf.mxu0
        %v2384 = vpop.f32.mrf.mxu0
        %v2385 = vadd.f32 %v2320, %v2384
        %v2386 = vpop.f32.mrf.mxu0
        %2387 = vdwg.mxu0
        %2388 = vmatprep.subr.bf16.mxu0 0
        %2389 = vmatpush1.bf16.msra.mxu0 %v1715
        %2390 = vmatprep.subr.bf16.mxu0 0
        %2391 = vmatpush1.bf16.msra.mxu0 %v1714
        %2392 = vmatprep.subr.bf16.mxu0 0
        %2393 = vmatpush1.bf16.msra.mxu0 %v1713
        %2394 = vmatprep.subr.bf16.mxu0 0
        %2395 = vmatpush1.bf16.msra.mxu0 %v1712
        %2396 = vmatprep.subr.bf16.mxu0 0
        %2397 = vmatpush1.bf16.msra.mxu0 %v1711
        %2398 = vmatprep.subr.bf16.mxu0 0
        %2399 = vmatpush1.bf16.msra.mxu0 %v1710
        %2400 = vmatprep.subr.bf16.mxu0 0
        %2401 = vmatpush1.bf16.msra.mxu0 %v1709
        %2402 = vmatprep.subr.bf16.mxu0 0
        %2403 = vmatpush1.bf16.msra.mxu0 %v1708
        %2404 = vmatprep.subr.bf16.mxu0 0
        %2405 = vmatpush2.bf16.msra.mxu0 %v1723
        %2406 = vmatprep.subr.bf16.mxu0 0
        %2407 = vmatpush2.bf16.msra.mxu0 %v1722
        %2408 = vmatprep.subr.bf16.mxu0 0
        %2409 = vmatpush2.bf16.msra.mxu0 %v1721
        %2410 = vmatprep.subr.bf16.mxu0 0
        %2411 = vmatpush2.bf16.msra.mxu0 %v1720
        %2412 = vmatprep.subr.bf16.mxu0 0
        %2413 = vmatpush2.bf16.msra.mxu0 %v1719
        %2414 = vmatprep.subr.bf16.mxu0 0
        %2415 = vmatpush2.bf16.msra.mxu0 %v1718
        %2416 = vmatprep.subr.bf16.mxu0 0
        %2417 = vmatpush2.bf16.msra.mxu0 %v1717
        %2418 = vmatprep.subr.bf16.mxu0 0
        %2419 = vmatpush2.bf16.msra.mxu0 %v1716
        %2420 = vmatprep.mubr.bf16.mxu0 %v877
        %2421 = vmatmul.mubr.bf16.gmra.mxu0 %v876
        %v2422 = vpop.f32.mrf.mxu0
        %v2423 = vadd.f32 %v2358, %v2422
        %v2424 = vpop.f32.mrf.mxu0
        %v2425 = vpop.f32.mrf.mxu0
        %v2426 = vadd.f32 %v2361, %v2425
        %v2427 = vpop.f32.mrf.mxu0
        %2428 = vmatprep.mubr.bf16.mxu0 %v895
        %2429 = vmatmul.mubr.bf16.gmra.mxu0 %v894
        %v2430 = vpop.f32.mrf.mxu0
        %v2431 = vadd.f32 %v2366, %v2430
        %v2432 = vpop.f32.mrf.mxu0
        %v2433 = vpop.f32.mrf.mxu0
        %v2434 = vadd.f32 %v2369, %v2433
        %v2435 = vpop.f32.mrf.mxu0
        %2436 = vmatprep.mubr.bf16.mxu0 %v913
        %2437 = vmatmul.mubr.bf16.gmra.mxu0 %v912
        %v2438 = vpop.f32.mrf.mxu0
        %v2439 = vadd.f32 %v2374, %v2438
        %v2440 = vpop.f32.mrf.mxu0
        %v2441 = vpop.f32.mrf.mxu0
        %v2442 = vadd.f32 %v2377, %v2441
        %v2443 = vpop.f32.mrf.mxu0
        %2444 = vmatprep.mubr.bf16.mxu0 %v931
        %2445 = vmatmul.mubr.bf16.gmra.mxu0 %v930
        %v2446 = vpop.f32.mrf.mxu0
        %v2447 = vadd.f32 %v2382, %v2446
        %v2448 = vpop.f32.mrf.mxu0
        %v2449 = vpop.f32.mrf.mxu0
        %v2450 = vadd.f32 %v2385, %v2449
        %v2451 = vpop.f32.mrf.mxu0
        %2452 = vdwg.mxu0
        %v2453 = vmax.f32 %v2423, 0.0
        %v2454 = vmax.f32 %v2426, 0.0
        %v2455 = vmax.f32 %v2431, 0.0
        %v2456 = vmax.f32 %v2434, 0.0
        %v2457 = vmax.f32 %v2439, 0.0
        %v2458 = vmax.f32 %v2442, 0.0
        %v2459 = vmax.f32 %v2447, 0.0
        %v2460 = vmax.f32 %v2450, 0.0
        %2461 = vst [vmem:[#allocation2] sm:$0xff] %v2453
        %2462 = vst [vmem:[#allocation2 + $0x8] sm:$0xff] %v2454
        %2463 = vst [vmem:[#allocation2 + $0x10] sm:$0xff] %v2455
        %2464 = vst [vmem:[#allocation2 + $0x18] sm:$0xff] %v2456
        %2465 = vst [vmem:[#allocation2 + $0x20] sm:$0xff] %v2457
        %2466 = vst [vmem:[#allocation2 + $0x28] sm:$0xff] %v2458
        %2467 = vst [vmem:[#allocation2 + $0x30] sm:$0xff] %v2459
        %2468 = vst [vmem:[#allocation2 + $0x38] sm:$0xff] %v2460
        %2469 = vst [vmem:[#allocation3] sm:$0xff] 0.0
        %2470 = vst [vmem:[#allocation3 + $0x8] sm:$0xff] 0.0
        %v2471 = vld [vmem:[#allocation2 + $0x30] sm:$0x7]
        %2472 = vst [vmem:[#allocation3 + $0x5] sm:$0x7] %v2471
        %v2473 = vld [vmem:[#allocation2 + $0x34] sm:$0x7]
        %2474 = vst [vmem:[#allocation3 + $0x9] sm:$0x7] %v2473
        %v2475 = vld [vmem:[#allocation2 + $0x38] sm:$0x7]
        %2476 = vst [vmem:[#allocation3 + $0xd] sm:$0x7] %v2475
        %v2477 = vld [vmem:[#allocation3] sm:$0xff]
        %v2478 = vld [vmem:[#allocation3 + $0x8] sm:$0xff]
        %v2479 = vpack.c.bf16 %v2478, %v2477
        %v2480 = vld [vmem:[%s3] sm:$0xf]
        %v2481 = vld [vmem:[%s3 + $0x4] sm:$0xf]
        %v2482 = vld [vmem:[%s3 + $0x8] sm:$0xf]
        %v2483 = vld [vmem:[%s3 + $0xc] sm:$0xf]
        %v2484 = vld [vmem:[%s3 + $0x10] sm:$0xf]
        %v2485 = vld [vmem:[%s3 + $0x14] sm:$0xf]
        %v2486 = vld [vmem:[%s3 + $0x18] sm:$0xf]
        %v2487 = vld [vmem:[%s3 + $0x1c] sm:$0xf]
        %v2488 = vld [vmem:[%s3 + $0x20] sm:$0xf]
        %v2489 = vld [vmem:[%s3 + $0x24] sm:$0xf]
        %v2490 = vld [vmem:[%s3 + $0x28] sm:$0xf]
        %v2491 = vld [vmem:[%s3 + $0x2c] sm:$0xf]
        %v2492 = vld [vmem:[%s3 + $0x30] sm:$0xf]
        %v2493 = vld [vmem:[%s3 + $0x34] sm:$0xf]
        %v2494 = vld [vmem:[%s3 + $0x38] sm:$0xf]
        %v2495 = vld [vmem:[%s3 + $0x3c] sm:$0xf]
        %2496 = vst [vmem:[#allocation3] sm:$0xff] 0.0
        %2497 = vst [vmem:[#allocation3 + $0x8] sm:$0xff] 0.0
        %v2498 = vld [vmem:[#allocation2 + $0x20] sm:$0xf]
        %2499 = vst [vmem:[#allocation3 + $0x4] sm:$0xf] %v2498
        %v2500 = vld [vmem:[#allocation2 + $0x24] sm:$0xf]
        %2501 = vst [vmem:[#allocation3 + $0x8] sm:$0xf] %v2500
        %v2502 = vld [vmem:[#allocation2 + $0x28] sm:$0xf]
        %2503 = vst [vmem:[#allocation3 + $0xc] sm:$0xf] %v2502
        %v2504 = vld [vmem:[#allocation3] sm:$0xff]
        %v2505 = vld [vmem:[#allocation3 + $0x8] sm:$0xff]
        %v2506 = vpack.c.bf16 %v2505, %v2504
        %v2507 = vld [vmem:[%s3 + $0x40] sm:$0xf]
        %v2508 = vld [vmem:[%s3 + $0x44] sm:$0xf]
        %v2509 = vld [vmem:[%s3 + $0x48] sm:$0xf]
        %v2510 = vld [vmem:[%s3 + $0x4c] sm:$0xf]
        %v2511 = vld [vmem:[%s3 + $0x50] sm:$0xf]
        %v2512 = vld [vmem:[%s3 + $0x54] sm:$0xf]
        %v2513 = vld [vmem:[%s3 + $0x58] sm:$0xf]
        %v2514 = vld [vmem:[%s3 + $0x5c] sm:$0xf]
        %v2515 = vld [vmem:[%s3 + $0x60] sm:$0xf]
        %v2516 = vld [vmem:[%s3 + $0x64] sm:$0xf]
        %v2517 = vld [vmem:[%s3 + $0x68] sm:$0xf]
        %v2518 = vld [vmem:[%s3 + $0x6c] sm:$0xf]
        %v2519 = vld [vmem:[%s3 + $0x70] sm:$0xf]
        %v2520 = vld [vmem:[%s3 + $0x74] sm:$0xf]
        %v2521 = vld [vmem:[%s3 + $0x78] sm:$0xf]
        %v2522 = vld [vmem:[%s3 + $0x7c] sm:$0xf]
        %v2539 = vunpack.c.l.b16 %v2507
        %v2540 = vunpack.c.l.b16 %v2508
        %v2541 = vunpack.c.l.b16 %v2509
        %v2542 = vunpack.c.l.b16 %v2510
        %v2543 = vunpack.c.l.b16 %v2511
        %v2544 = vunpack.c.l.b16 %v2512
        %v2545 = vunpack.c.l.b16 %v2513
        %v2546 = vunpack.c.l.b16 %v2514
        %v2547 = vunpack.c.l.b16 %v2515
        %v2548 = vunpack.c.l.b16 %v2516
        %v2549 = vunpack.c.l.b16 %v2517
        %v2550 = vunpack.c.l.b16 %v2518
        %v2551 = vunpack.c.l.b16 %v2519
        %v2552 = vunpack.c.l.b16 %v2520
        %v2553 = vunpack.c.l.b16 %v2521
        %v2554 = vunpack.c.l.b16 %v2522
        %v2555 = vpack.c.b16 %v2540, %v2539
        %v2556 = vpack.c.b16 %v2542, %v2541
        %v2557 = vpack.c.b16 %v2544, %v2543
        %v2558 = vpack.c.b16 %v2546, %v2545
        %v2559 = vpack.c.b16 %v2548, %v2547
        %v2560 = vpack.c.b16 %v2550, %v2549
        %v2561 = vpack.c.b16 %v2552, %v2551
        %v2562 = vpack.c.b16 %v2554, %v2553
        %2571 = vmatprep.subr.bf16.mxu0 0
        %2572 = vmatpush1.bf16.msra.mxu0 %v2562
        %2573 = vmatprep.subr.bf16.mxu0 0
        %2574 = vmatpush1.bf16.msra.mxu0 %v2561
        %2575 = vmatprep.subr.bf16.mxu0 0
        %2576 = vmatpush1.bf16.msra.mxu0 %v2560
        %2577 = vmatprep.subr.bf16.mxu0 0
        %2578 = vmatpush1.bf16.msra.mxu0 %v2559
        %2579 = vmatprep.subr.bf16.mxu0 0
        %2580 = vmatpush1.bf16.msra.mxu0 %v2558
        %2581 = vmatprep.subr.bf16.mxu0 0
        %2582 = vmatpush1.bf16.msra.mxu0 %v2557
        %2583 = vmatprep.subr.bf16.mxu0 0
        %2584 = vmatpush1.bf16.msra.mxu0 %v2556
        %2585 = vmatprep.subr.bf16.mxu0 0
        %2586 = vmatpush1.bf16.msra.mxu0 %v2555
        %2587 = vmatprep.subr.bf16.mxu0 0
        %2588 = vmatpush2.bf16.msra.mxu0 0
        %2589 = vmatprep.subr.bf16.mxu0 0
        %2590 = vmatpush2.bf16.msra.mxu0 0
        %2591 = vmatprep.subr.bf16.mxu0 0
        %2592 = vmatpush2.bf16.msra.mxu0 0
        %2593 = vmatprep.subr.bf16.mxu0 0
        %2594 = vmatpush2.bf16.msra.mxu0 0
        %2595 = vmatprep.subr.bf16.mxu0 0
        %2596 = vmatpush2.bf16.msra.mxu0 0
        %2597 = vmatprep.subr.bf16.mxu0 0
        %2598 = vmatpush2.bf16.msra.mxu0 0
        %2599 = vmatprep.subr.bf16.mxu0 0
        %2600 = vmatpush2.bf16.msra.mxu0 0
        %2601 = vmatprep.subr.bf16.mxu0 0
        %2602 = vmatpush2.bf16.msra.mxu0 0
        %2603 = vmatprep.mubr.bf16.mxu0 0
        %2604 = vmatmul.mubr.bf16.gmra.mxu0 %v2506
        %v2605 = vpop.f32.mrf.mxu0
        %v2606 = vadd.f32 0.0, %v2605
        %v2607 = vpop.f32.mrf.mxu0
        %v2608 = vpop.f32.mrf.mxu0
        %v2609 = vadd.f32 0.0, %v2608
        %v2610 = vpop.f32.mrf.mxu0
        %2611 = vdwg.mxu0
        %v2628 = vunpack.c.l.b16 %v2480
        %v2629 = vunpack.c.l.b16 %v2481
        %v2630 = vunpack.c.l.b16 %v2482
        %v2631 = vunpack.c.l.b16 %v2483
        %v2632 = vunpack.c.l.b16 %v2484
        %v2633 = vunpack.c.l.b16 %v2485
        %v2634 = vunpack.c.l.b16 %v2486
        %v2635 = vunpack.c.l.b16 %v2487
        %v2636 = vunpack.c.l.b16 %v2488
        %v2637 = vunpack.c.l.b16 %v2489
        %v2638 = vunpack.c.l.b16 %v2490
        %v2639 = vunpack.c.l.b16 %v2491
        %v2640 = vunpack.c.l.b16 %v2492
        %v2641 = vunpack.c.l.b16 %v2493
        %v2642 = vunpack.c.l.b16 %v2494
        %v2643 = vunpack.c.l.b16 %v2495
        %v2644 = vpack.c.b16 %v2629, %v2628
        %v2645 = vpack.c.b16 %v2631, %v2630
        %v2646 = vpack.c.b16 %v2633, %v2632
        %v2647 = vpack.c.b16 %v2635, %v2634
        %v2648 = vpack.c.b16 %v2637, %v2636
        %v2649 = vpack.c.b16 %v2639, %v2638
        %v2650 = vpack.c.b16 %v2641, %v2640
        %v2651 = vpack.c.b16 %v2643, %v2642
        %2660 = vmatprep.subr.bf16.mxu0 0
        %2661 = vmatpush1.bf16.msra.mxu0 %v2651
        %2662 = vmatprep.subr.bf16.mxu0 0
        %2663 = vmatpush1.bf16.msra.mxu0 %v2650
        %2664 = vmatprep.subr.bf16.mxu0 0
        %2665 = vmatpush1.bf16.msra.mxu0 %v2649
        %2666 = vmatprep.subr.bf16.mxu0 0
        %2667 = vmatpush1.bf16.msra.mxu0 %v2648
        %2668 = vmatprep.subr.bf16.mxu0 0
        %2669 = vmatpush1.bf16.msra.mxu0 %v2647
        %2670 = vmatprep.subr.bf16.mxu0 0
        %2671 = vmatpush1.bf16.msra.mxu0 %v2646
        %2672 = vmatprep.subr.bf16.mxu0 0
        %2673 = vmatpush1.bf16.msra.mxu0 %v2645
        %2674 = vmatprep.subr.bf16.mxu0 0
        %2675 = vmatpush1.bf16.msra.mxu0 %v2644
        %2676 = vmatprep.subr.bf16.mxu0 0
        %2677 = vmatpush2.bf16.msra.mxu0 0
        %2678 = vmatprep.subr.bf16.mxu0 0
        %2679 = vmatpush2.bf16.msra.mxu0 0
        %2680 = vmatprep.subr.bf16.mxu0 0
        %2681 = vmatpush2.bf16.msra.mxu0 0
        %2682 = vmatprep.subr.bf16.mxu0 0
        %2683 = vmatpush2.bf16.msra.mxu0 0
        %2684 = vmatprep.subr.bf16.mxu0 0
        %2685 = vmatpush2.bf16.msra.mxu0 0
        %2686 = vmatprep.subr.bf16.mxu0 0
        %2687 = vmatpush2.bf16.msra.mxu0 0
        %2688 = vmatprep.subr.bf16.mxu0 0
        %2689 = vmatpush2.bf16.msra.mxu0 0
        %2690 = vmatprep.subr.bf16.mxu0 0
        %2691 = vmatpush2.bf16.msra.mxu0 0
        %2692 = vmatprep.mubr.bf16.mxu0 0
        %2693 = vmatmul.mubr.bf16.gmra.mxu0 %v2479
        %v2694 = vpop.f32.mrf.mxu0
        %v2695 = vadd.f32 %v2606, %v2694
        %v2696 = vpop.f32.mrf.mxu0
        %v2697 = vpop.f32.mrf.mxu0
        %v2698 = vadd.f32 %v2609, %v2697
        %v2699 = vpop.f32.mrf.mxu0
        %2700 = vdwg.mxu0
        %2701 = vst [vmem:[#allocation3] sm:$0xff] 0.0
        %2702 = vst [vmem:[#allocation3 + $0x8] sm:$0xff] 0.0
        %v2703 = vld [vmem:[#allocation2 + $0x30] sm:$0xf]
        %2704 = vst [vmem:[#allocation3 + $0x4] sm:$0xf] %v2703
        %v2705 = vld [vmem:[#allocation2 + $0x34] sm:$0xf]
        %2706 = vst [vmem:[#allocation3 + $0x8] sm:$0xf] %v2705
        %v2707 = vld [vmem:[#allocation2 + $0x38] sm:$0xf]
        %2708 = vst [vmem:[#allocation3 + $0xc] sm:$0xf] %v2707
        %v2709 = vld [vmem:[#allocation3] sm:$0xff]
        %v2710 = vld [vmem:[#allocation3 + $0x8] sm:$0xff]
        %v2711 = vpack.c.bf16 %v2710, %v2709
        %v2712 = vld [vmem:[%s3 + $0x80] sm:$0xf]
        %v2713 = vld [vmem:[%s3 + $0x84] sm:$0xf]
        %v2714 = vld [vmem:[%s3 + $0x88] sm:$0xf]
        %v2715 = vld [vmem:[%s3 + $0x8c] sm:$0xf]
        %v2716 = vld [vmem:[%s3 + $0x90] sm:$0xf]
        %v2717 = vld [vmem:[%s3 + $0x94] sm:$0xf]
        %v2718 = vld [vmem:[%s3 + $0x98] sm:$0xf]
        %v2719 = vld [vmem:[%s3 + $0x9c] sm:$0xf]
        %v2720 = vld [vmem:[%s3 + $0xa0] sm:$0xf]
        %v2721 = vld [vmem:[%s3 + $0xa4] sm:$0xf]
        %v2722 = vld [vmem:[%s3 + $0xa8] sm:$0xf]
        %v2723 = vld [vmem:[%s3 + $0xac] sm:$0xf]
        %v2724 = vld [vmem:[%s3 + $0xb0] sm:$0xf]
        %v2725 = vld [vmem:[%s3 + $0xb4] sm:$0xf]
        %v2726 = vld [vmem:[%s3 + $0xb8] sm:$0xf]
        %v2727 = vld [vmem:[%s3 + $0xbc] sm:$0xf]
        %v2744 = vunpack.c.l.b16 %v2712
        %v2745 = vunpack.c.l.b16 %v2713
        %v2746 = vunpack.c.l.b16 %v2714
        %v2747 = vunpack.c.l.b16 %v2715
        %v2748 = vunpack.c.l.b16 %v2716
        %v2749 = vunpack.c.l.b16 %v2717
        %v2750 = vunpack.c.l.b16 %v2718
        %v2751 = vunpack.c.l.b16 %v2719
        %v2752 = vunpack.c.l.b16 %v2720
        %v2753 = vunpack.c.l.b16 %v2721
        %v2754 = vunpack.c.l.b16 %v2722
        %v2755 = vunpack.c.l.b16 %v2723
        %v2756 = vunpack.c.l.b16 %v2724
        %v2757 = vunpack.c.l.b16 %v2725
        %v2758 = vunpack.c.l.b16 %v2726
        %v2759 = vunpack.c.l.b16 %v2727
        %v2760 = vpack.c.b16 %v2745, %v2744
        %v2761 = vpack.c.b16 %v2747, %v2746
        %v2762 = vpack.c.b16 %v2749, %v2748
        %v2763 = vpack.c.b16 %v2751, %v2750
        %v2764 = vpack.c.b16 %v2753, %v2752
        %v2765 = vpack.c.b16 %v2755, %v2754
        %v2766 = vpack.c.b16 %v2757, %v2756
        %v2767 = vpack.c.b16 %v2759, %v2758
        %2776 = vmatprep.subr.bf16.mxu0 0
        %2777 = vmatpush1.bf16.msra.mxu0 %v2767
        %2778 = vmatprep.subr.bf16.mxu0 0
        %2779 = vmatpush1.bf16.msra.mxu0 %v2766
        %2780 = vmatprep.subr.bf16.mxu0 0
        %2781 = vmatpush1.bf16.msra.mxu0 %v2765
        %2782 = vmatprep.subr.bf16.mxu0 0
        %2783 = vmatpush1.bf16.msra.mxu0 %v2764
        %2784 = vmatprep.subr.bf16.mxu0 0
        %2785 = vmatpush1.bf16.msra.mxu0 %v2763
        %2786 = vmatprep.subr.bf16.mxu0 0
        %2787 = vmatpush1.bf16.msra.mxu0 %v2762
        %2788 = vmatprep.subr.bf16.mxu0 0
        %2789 = vmatpush1.bf16.msra.mxu0 %v2761
        %2790 = vmatprep.subr.bf16.mxu0 0
        %2791 = vmatpush1.bf16.msra.mxu0 %v2760
        %2792 = vmatprep.subr.bf16.mxu0 0
        %2793 = vmatpush2.bf16.msra.mxu0 0
        %2794 = vmatprep.subr.bf16.mxu0 0
        %2795 = vmatpush2.bf16.msra.mxu0 0
        %2796 = vmatprep.subr.bf16.mxu0 0
        %2797 = vmatpush2.bf16.msra.mxu0 0
        %2798 = vmatprep.subr.bf16.mxu0 0
        %2799 = vmatpush2.bf16.msra.mxu0 0
        %2800 = vmatprep.subr.bf16.mxu0 0
        %2801 = vmatpush2.bf16.msra.mxu0 0
        %2802 = vmatprep.subr.bf16.mxu0 0
        %2803 = vmatpush2.bf16.msra.mxu0 0
        %2804 = vmatprep.subr.bf16.mxu0 0
        %2805 = vmatpush2.bf16.msra.mxu0 0
        %2806 = vmatprep.subr.bf16.mxu0 0
        %2807 = vmatpush2.bf16.msra.mxu0 0
        %2808 = vmatprep.mubr.bf16.mxu0 0
        %2809 = vmatmul.mubr.bf16.gmra.mxu0 %v2711
        %v2810 = vpop.f32.mrf.mxu0
        %v2811 = vadd.f32 0.0, %v2810
        %v2812 = vpop.f32.mrf.mxu0
        %v2813 = vpop.f32.mrf.mxu0
        %v2814 = vadd.f32 0.0, %v2813
        %v2815 = vpop.f32.mrf.mxu0
        %2816 = vdwg.mxu0
        %v2817 = vadd.f32 %v2695, %v2811
        %v2818 = vadd.f32 %v2698, %v2814
        %2819 = vst [vmem:[#allocation3] sm:$0xff] 0.0
        %2820 = vst [vmem:[#allocation3 + $0x8] sm:$0xff] 0.0
        %v2821 = vld [vmem:[#allocation2 + $0x10] sm:$0x7]
        %2822 = vst [vmem:[#allocation3 + $0x1] sm:$0x7] %v2821
        %v2823 = vld [vmem:[#allocation2 + $0x14] sm:$0x7]
        %2824 = vst [vmem:[#allocation3 + $0x5] sm:$0x7] %v2823
        %v2825 = vld [vmem:[#allocation2 + $0x18] sm:$0x7]
        %2826 = vst [vmem:[#allocation3 + $0x9] sm:$0x7] %v2825
        %v2827 = vld [vmem:[#allocation2 + $0x1c] sm:$0x7]
        %2828 = vst [vmem:[#allocation3 + $0xd] sm:$0x7] %v2827
        %v2829 = vld [vmem:[#allocation3] sm:$0xff]
        %v2830 = vld [vmem:[#allocation3 + $0x8] sm:$0xff]
        %v2831 = vpack.c.bf16 %v2830, %v2829
        %v2832 = vld [vmem:[%s3 + $0xc0] sm:$0xf]
        %v2833 = vld [vmem:[%s3 + $0xc4] sm:$0xf]
        %v2834 = vld [vmem:[%s3 + $0xc8] sm:$0xf]
        %v2835 = vld [vmem:[%s3 + $0xcc] sm:$0xf]
        %v2836 = vld [vmem:[%s3 + $0xd0] sm:$0xf]
        %v2837 = vld [vmem:[%s3 + $0xd4] sm:$0xf]
        %v2838 = vld [vmem:[%s3 + $0xd8] sm:$0xf]
        %v2839 = vld [vmem:[%s3 + $0xdc] sm:$0xf]
        %v2840 = vld [vmem:[%s3 + $0xe0] sm:$0xf]
        %v2841 = vld [vmem:[%s3 + $0xe4] sm:$0xf]
        %v2842 = vld [vmem:[%s3 + $0xe8] sm:$0xf]
        %v2843 = vld [vmem:[%s3 + $0xec] sm:$0xf]
        %v2844 = vld [vmem:[%s3 + $0xf0] sm:$0xf]
        %v2845 = vld [vmem:[%s3 + $0xf4] sm:$0xf]
        %v2846 = vld [vmem:[%s3 + $0xf8] sm:$0xf]
        %v2847 = vld [vmem:[%s3 + $0xfc] sm:$0xf]
        %v2864 = vunpack.c.l.b16 %v2832
        %v2865 = vunpack.c.l.b16 %v2833
        %v2866 = vunpack.c.l.b16 %v2834
        %v2867 = vunpack.c.l.b16 %v2835
        %v2868 = vunpack.c.l.b16 %v2836
        %v2869 = vunpack.c.l.b16 %v2837
        %v2870 = vunpack.c.l.b16 %v2838
        %v2871 = vunpack.c.l.b16 %v2839
        %v2872 = vunpack.c.l.b16 %v2840
        %v2873 = vunpack.c.l.b16 %v2841
        %v2874 = vunpack.c.l.b16 %v2842
        %v2875 = vunpack.c.l.b16 %v2843
        %v2876 = vunpack.c.l.b16 %v2844
        %v2877 = vunpack.c.l.b16 %v2845
        %v2878 = vunpack.c.l.b16 %v2846
        %v2879 = vunpack.c.l.b16 %v2847
        %v2880 = vpack.c.b16 %v2865, %v2864
        %v2881 = vpack.c.b16 %v2867, %v2866
        %v2882 = vpack.c.b16 %v2869, %v2868
        %v2883 = vpack.c.b16 %v2871, %v2870
        %v2884 = vpack.c.b16 %v2873, %v2872
        %v2885 = vpack.c.b16 %v2875, %v2874
        %v2886 = vpack.c.b16 %v2877, %v2876
        %v2887 = vpack.c.b16 %v2879, %v2878
        %2896 = vmatprep.subr.bf16.mxu0 0
        %2897 = vmatpush1.bf16.msra.mxu0 %v2887
        %2898 = vmatprep.subr.bf16.mxu0 0
        %2899 = vmatpush1.bf16.msra.mxu0 %v2886
        %2900 = vmatprep.subr.bf16.mxu0 0
        %2901 = vmatpush1.bf16.msra.mxu0 %v2885
        %2902 = vmatprep.subr.bf16.mxu0 0
        %2903 = vmatpush1.bf16.msra.mxu0 %v2884
        %2904 = vmatprep.subr.bf16.mxu0 0
        %2905 = vmatpush1.bf16.msra.mxu0 %v2883
        %2906 = vmatprep.subr.bf16.mxu0 0
        %2907 = vmatpush1.bf16.msra.mxu0 %v2882
        %2908 = vmatprep.subr.bf16.mxu0 0
        %2909 = vmatpush1.bf16.msra.mxu0 %v2881
        %2910 = vmatprep.subr.bf16.mxu0 0
        %2911 = vmatpush1.bf16.msra.mxu0 %v2880
        %2912 = vmatprep.subr.bf16.mxu0 0
        %2913 = vmatpush2.bf16.msra.mxu0 0
        %2914 = vmatprep.subr.bf16.mxu0 0
        %2915 = vmatpush2.bf16.msra.mxu0 0
        %2916 = vmatprep.subr.bf16.mxu0 0
        %2917 = vmatpush2.bf16.msra.mxu0 0
        %2918 = vmatprep.subr.bf16.mxu0 0
        %2919 = vmatpush2.bf16.msra.mxu0 0
        %2920 = vmatprep.subr.bf16.mxu0 0
        %2921 = vmatpush2.bf16.msra.mxu0 0
        %2922 = vmatprep.subr.bf16.mxu0 0
        %2923 = vmatpush2.bf16.msra.mxu0 0
        %2924 = vmatprep.subr.bf16.mxu0 0
        %2925 = vmatpush2.bf16.msra.mxu0 0
        %2926 = vmatprep.subr.bf16.mxu0 0
        %2927 = vmatpush2.bf16.msra.mxu0 0
        %2928 = vmatprep.mubr.bf16.mxu0 0
        %2929 = vmatmul.mubr.bf16.gmra.mxu0 %v2831
        %v2930 = vpop.f32.mrf.mxu0
        %v2931 = vadd.f32 0.0, %v2930
        %v2932 = vpop.f32.mrf.mxu0
        %v2933 = vpop.f32.mrf.mxu0
        %v2934 = vadd.f32 0.0, %v2933
        %v2935 = vpop.f32.mrf.mxu0
        %2936 = vdwg.mxu0
        %v2937 = vadd.f32 %v2817, %v2931
        %v2938 = vadd.f32 %v2818, %v2934
        %v2939 = vld [vmem:[#allocation2] sm:$0xff]
        %v2940 = vld [vmem:[#allocation2 + $0x8] sm:$0xff]
        %v2941 = vpack.c.bf16 %v2940, %v2939
        %v2942 = vld [vmem:[%s3 + $0x100] sm:$0xf]
        %v2943 = vld [vmem:[%s3 + $0x104] sm:$0xf]
        %v2944 = vld [vmem:[%s3 + $0x108] sm:$0xf]
        %v2945 = vld [vmem:[%s3 + $0x10c] sm:$0xf]
        %v2946 = vld [vmem:[%s3 + $0x110] sm:$0xf]
        %v2947 = vld [vmem:[%s3 + $0x114] sm:$0xf]
        %v2948 = vld [vmem:[%s3 + $0x118] sm:$0xf]
        %v2949 = vld [vmem:[%s3 + $0x11c] sm:$0xf]
        %v2950 = vld [vmem:[%s3 + $0x120] sm:$0xf]
        %v2951 = vld [vmem:[%s3 + $0x124] sm:$0xf]
        %v2952 = vld [vmem:[%s3 + $0x128] sm:$0xf]
        %v2953 = vld [vmem:[%s3 + $0x12c] sm:$0xf]
        %v2954 = vld [vmem:[%s3 + $0x130] sm:$0xf]
        %v2955 = vld [vmem:[%s3 + $0x134] sm:$0xf]
        %v2956 = vld [vmem:[%s3 + $0x138] sm:$0xf]
        %v2957 = vld [vmem:[%s3 + $0x13c] sm:$0xf]
        %v2974 = vunpack.c.l.b16 %v2942
        %v2975 = vunpack.c.l.b16 %v2943
        %v2976 = vunpack.c.l.b16 %v2944
        %v2977 = vunpack.c.l.b16 %v2945
        %v2978 = vunpack.c.l.b16 %v2946
        %v2979 = vunpack.c.l.b16 %v2947
        %v2980 = vunpack.c.l.b16 %v2948
        %v2981 = vunpack.c.l.b16 %v2949
        %v2982 = vunpack.c.l.b16 %v2950
        %v2983 = vunpack.c.l.b16 %v2951
        %v2984 = vunpack.c.l.b16 %v2952
        %v2985 = vunpack.c.l.b16 %v2953
        %v2986 = vunpack.c.l.b16 %v2954
        %v2987 = vunpack.c.l.b16 %v2955
        %v2988 = vunpack.c.l.b16 %v2956
        %v2989 = vunpack.c.l.b16 %v2957
        %v2990 = vpack.c.b16 %v2975, %v2974
        %v2991 = vpack.c.b16 %v2977, %v2976
        %v2992 = vpack.c.b16 %v2979, %v2978
        %v2993 = vpack.c.b16 %v2981, %v2980
        %v2994 = vpack.c.b16 %v2983, %v2982
        %v2995 = vpack.c.b16 %v2985, %v2984
        %v2996 = vpack.c.b16 %v2987, %v2986
        %v2997 = vpack.c.b16 %v2989, %v2988
        %3006 = vmatprep.subr.bf16.mxu0 0
        %3007 = vmatpush1.bf16.msra.mxu0 %v2997
        %3008 = vmatprep.subr.bf16.mxu0 0
        %3009 = vmatpush1.bf16.msra.mxu0 %v2996
        %3010 = vmatprep.subr.bf16.mxu0 0
        %3011 = vmatpush1.bf16.msra.mxu0 %v2995
        %3012 = vmatprep.subr.bf16.mxu0 0
        %3013 = vmatpush1.bf16.msra.mxu0 %v2994
        %3014 = vmatprep.subr.bf16.mxu0 0
        %3015 = vmatpush1.bf16.msra.mxu0 %v2993
        %3016 = vmatprep.subr.bf16.mxu0 0
        %3017 = vmatpush1.bf16.msra.mxu0 %v2992
        %3018 = vmatprep.subr.bf16.mxu0 0
        %3019 = vmatpush1.bf16.msra.mxu0 %v2991
        %3020 = vmatprep.subr.bf16.mxu0 0
        %3021 = vmatpush1.bf16.msra.mxu0 %v2990
        %3022 = vmatprep.subr.bf16.mxu0 0
        %3023 = vmatpush2.bf16.msra.mxu0 0
        %3024 = vmatprep.subr.bf16.mxu0 0
        %3025 = vmatpush2.bf16.msra.mxu0 0
        %3026 = vmatprep.subr.bf16.mxu0 0
        %3027 = vmatpush2.bf16.msra.mxu0 0
        %3028 = vmatprep.subr.bf16.mxu0 0
        %3029 = vmatpush2.bf16.msra.mxu0 0
        %3030 = vmatprep.subr.bf16.mxu0 0
        %3031 = vmatpush2.bf16.msra.mxu0 0
        %3032 = vmatprep.subr.bf16.mxu0 0
        %3033 = vmatpush2.bf16.msra.mxu0 0
        %3034 = vmatprep.subr.bf16.mxu0 0
        %3035 = vmatpush2.bf16.msra.mxu0 0
        %3036 = vmatprep.subr.bf16.mxu0 0
        %3037 = vmatpush2.bf16.msra.mxu0 0
        %3038 = vmatprep.mubr.bf16.mxu0 0
        %3039 = vmatmul.mubr.bf16.gmra.mxu0 %v2941
        %v3040 = vpop.f32.mrf.mxu0
        %v3041 = vadd.f32 0.0, %v3040
        %v3042 = vpop.f32.mrf.mxu0
        %v3043 = vpop.f32.mrf.mxu0
        %v3044 = vadd.f32 0.0, %v3043
        %v3045 = vpop.f32.mrf.mxu0
        %3046 = vdwg.mxu0
        %v3047 = vadd.f32 %v2937, %v3041
        %v3048 = vadd.f32 %v2938, %v3044
        %v3049 = vld [vmem:[#allocation2 + $0x10] sm:$0xff]
        %v3050 = vld [vmem:[#allocation2 + $0x18] sm:$0xff]
        %v3051 = vpack.c.bf16 %v3050, %v3049
        %v3052 = vld [vmem:[%s3 + $0x140] sm:$0xf]
        %v3053 = vld [vmem:[%s3 + $0x144] sm:$0xf]
        %v3054 = vld [vmem:[%s3 + $0x148] sm:$0xf]
        %v3055 = vld [vmem:[%s3 + $0x14c] sm:$0xf]
        %v3056 = vld [vmem:[%s3 + $0x150] sm:$0xf]
        %v3057 = vld [vmem:[%s3 + $0x154] sm:$0xf]
        %v3058 = vld [vmem:[%s3 + $0x158] sm:$0xf]
        %v3059 = vld [vmem:[%s3 + $0x15c] sm:$0xf]
        %v3060 = vld [vmem:[%s3 + $0x160] sm:$0xf]
        %v3061 = vld [vmem:[%s3 + $0x164] sm:$0xf]
        %v3062 = vld [vmem:[%s3 + $0x168] sm:$0xf]
        %v3063 = vld [vmem:[%s3 + $0x16c] sm:$0xf]
        %v3064 = vld [vmem:[%s3 + $0x170] sm:$0xf]
        %v3065 = vld [vmem:[%s3 + $0x174] sm:$0xf]
        %v3066 = vld [vmem:[%s3 + $0x178] sm:$0xf]
        %v3067 = vld [vmem:[%s3 + $0x17c] sm:$0xf]
        %v3084 = vunpack.c.l.b16 %v3052
        %v3085 = vunpack.c.l.b16 %v3053
        %v3086 = vunpack.c.l.b16 %v3054
        %v3087 = vunpack.c.l.b16 %v3055
        %v3088 = vunpack.c.l.b16 %v3056
        %v3089 = vunpack.c.l.b16 %v3057
        %v3090 = vunpack.c.l.b16 %v3058
        %v3091 = vunpack.c.l.b16 %v3059
        %v3092 = vunpack.c.l.b16 %v3060
        %v3093 = vunpack.c.l.b16 %v3061
        %v3094 = vunpack.c.l.b16 %v3062
        %v3095 = vunpack.c.l.b16 %v3063
        %v3096 = vunpack.c.l.b16 %v3064
        %v3097 = vunpack.c.l.b16 %v3065
        %v3098 = vunpack.c.l.b16 %v3066
        %v3099 = vunpack.c.l.b16 %v3067
        %v3100 = vpack.c.b16 %v3085, %v3084
        %v3101 = vpack.c.b16 %v3087, %v3086
        %v3102 = vpack.c.b16 %v3089, %v3088
        %v3103 = vpack.c.b16 %v3091, %v3090
        %v3104 = vpack.c.b16 %v3093, %v3092
        %v3105 = vpack.c.b16 %v3095, %v3094
        %v3106 = vpack.c.b16 %v3097, %v3096
        %v3107 = vpack.c.b16 %v3099, %v3098
        %3116 = vmatprep.subr.bf16.mxu0 0
        %3117 = vmatpush1.bf16.msra.mxu0 %v3107
        %3118 = vmatprep.subr.bf16.mxu0 0
        %3119 = vmatpush1.bf16.msra.mxu0 %v3106
        %3120 = vmatprep.subr.bf16.mxu0 0
        %3121 = vmatpush1.bf16.msra.mxu0 %v3105
        %3122 = vmatprep.subr.bf16.mxu0 0
        %3123 = vmatpush1.bf16.msra.mxu0 %v3104
        %3124 = vmatprep.subr.bf16.mxu0 0
        %3125 = vmatpush1.bf16.msra.mxu0 %v3103
        %3126 = vmatprep.subr.bf16.mxu0 0
        %3127 = vmatpush1.bf16.msra.mxu0 %v3102
        %3128 = vmatprep.subr.bf16.mxu0 0
        %3129 = vmatpush1.bf16.msra.mxu0 %v3101
        %3130 = vmatprep.subr.bf16.mxu0 0
        %3131 = vmatpush1.bf16.msra.mxu0 %v3100
        %3132 = vmatprep.subr.bf16.mxu0 0
        %3133 = vmatpush2.bf16.msra.mxu0 0
        %3134 = vmatprep.subr.bf16.mxu0 0
        %3135 = vmatpush2.bf16.msra.mxu0 0
        %3136 = vmatprep.subr.bf16.mxu0 0
        %3137 = vmatpush2.bf16.msra.mxu0 0
        %3138 = vmatprep.subr.bf16.mxu0 0
        %3139 = vmatpush2.bf16.msra.mxu0 0
        %3140 = vmatprep.subr.bf16.mxu0 0
        %3141 = vmatpush2.bf16.msra.mxu0 0
        %3142 = vmatprep.subr.bf16.mxu0 0
        %3143 = vmatpush2.bf16.msra.mxu0 0
        %3144 = vmatprep.subr.bf16.mxu0 0
        %3145 = vmatpush2.bf16.msra.mxu0 0
        %3146 = vmatprep.subr.bf16.mxu0 0
        %3147 = vmatpush2.bf16.msra.mxu0 0
        %3148 = vmatprep.mubr.bf16.mxu0 0
        %3149 = vmatmul.mubr.bf16.gmra.mxu0 %v3051
        %v3150 = vpop.f32.mrf.mxu0
        %v3151 = vadd.f32 0.0, %v3150
        %v3152 = vpop.f32.mrf.mxu0
        %v3153 = vpop.f32.mrf.mxu0
        %v3154 = vadd.f32 0.0, %v3153
        %v3155 = vpop.f32.mrf.mxu0
        %3156 = vdwg.mxu0
        %v3157 = vadd.f32 %v3047, %v3151
        %v3158 = vadd.f32 %v3048, %v3154
        %3159 = vst [vmem:[#allocation3] sm:$0xff] 0.0
        %3160 = vst [vmem:[#allocation3 + $0x8] sm:$0xff] 0.0
        %v3161 = vld [vmem:[#allocation2 + $0x30] sm:$0x7]
        %3162 = vst [vmem:[#allocation3 + $0x1] sm:$0x7] %v3161
        %v3163 = vld [vmem:[#allocation2 + $0x34] sm:$0x7]
        %3164 = vst [vmem:[#allocation3 + $0x5] sm:$0x7] %v3163
        %v3165 = vld [vmem:[#allocation2 + $0x38] sm:$0x7]
        %3166 = vst [vmem:[#allocation3 + $0x9] sm:$0x7] %v3165
        %v3167 = vld [vmem:[#allocation2 + $0x3c] sm:$0x7]
        %3168 = vst [vmem:[#allocation3 + $0xd] sm:$0x7] %v3167
        %v3169 = vld [vmem:[#allocation3] sm:$0xff]
        %v3170 = vld [vmem:[#allocation3 + $0x8] sm:$0xff]
        %v3171 = vpack.c.bf16 %v3170, %v3169
        %v3172 = vld [vmem:[%s3 + $0x180] sm:$0xf]
        %v3173 = vld [vmem:[%s3 + $0x184] sm:$0xf]
        %v3174 = vld [vmem:[%s3 + $0x188] sm:$0xf]
        %v3175 = vld [vmem:[%s3 + $0x18c] sm:$0xf]
        %v3176 = vld [vmem:[%s3 + $0x190] sm:$0xf]
        %v3177 = vld [vmem:[%s3 + $0x194] sm:$0xf]
        %v3178 = vld [vmem:[%s3 + $0x198] sm:$0xf]
        %v3179 = vld [vmem:[%s3 + $0x19c] sm:$0xf]
        %v3180 = vld [vmem:[%s3 + $0x1a0] sm:$0xf]
        %v3181 = vld [vmem:[%s3 + $0x1a4] sm:$0xf]
        %v3182 = vld [vmem:[%s3 + $0x1a8] sm:$0xf]
        %v3183 = vld [vmem:[%s3 + $0x1ac] sm:$0xf]
        %v3184 = vld [vmem:[%s3 + $0x1b0] sm:$0xf]
        %v3185 = vld [vmem:[%s3 + $0x1b4] sm:$0xf]
        %v3186 = vld [vmem:[%s3 + $0x1b8] sm:$0xf]
        %v3187 = vld [vmem:[%s3 + $0x1bc] sm:$0xf]
        %v3204 = vunpack.c.l.b16 %v3172
        %v3205 = vunpack.c.l.b16 %v3173
        %v3206 = vunpack.c.l.b16 %v3174
        %v3207 = vunpack.c.l.b16 %v3175
        %v3208 = vunpack.c.l.b16 %v3176
        %v3209 = vunpack.c.l.b16 %v3177
        %v3210 = vunpack.c.l.b16 %v3178
        %v3211 = vunpack.c.l.b16 %v3179
        %v3212 = vunpack.c.l.b16 %v3180
        %v3213 = vunpack.c.l.b16 %v3181
        %v3214 = vunpack.c.l.b16 %v3182
        %v3215 = vunpack.c.l.b16 %v3183
        %v3216 = vunpack.c.l.b16 %v3184
        %v3217 = vunpack.c.l.b16 %v3185
        %v3218 = vunpack.c.l.b16 %v3186
        %v3219 = vunpack.c.l.b16 %v3187
        %v3220 = vpack.c.b16 %v3205, %v3204
        %v3221 = vpack.c.b16 %v3207, %v3206
        %v3222 = vpack.c.b16 %v3209, %v3208
        %v3223 = vpack.c.b16 %v3211, %v3210
        %v3224 = vpack.c.b16 %v3213, %v3212
        %v3225 = vpack.c.b16 %v3215, %v3214
        %v3226 = vpack.c.b16 %v3217, %v3216
        %v3227 = vpack.c.b16 %v3219, %v3218
        %3236 = vmatprep.subr.bf16.mxu0 0
        %3237 = vmatpush1.bf16.msra.mxu0 %v3227
        %3238 = vmatprep.subr.bf16.mxu0 0
        %3239 = vmatpush1.bf16.msra.mxu0 %v3226
        %3240 = vmatprep.subr.bf16.mxu0 0
        %3241 = vmatpush1.bf16.msra.mxu0 %v3225
        %3242 = vmatprep.subr.bf16.mxu0 0
        %3243 = vmatpush1.bf16.msra.mxu0 %v3224
        %3244 = vmatprep.subr.bf16.mxu0 0
        %3245 = vmatpush1.bf16.msra.mxu0 %v3223
        %3246 = vmatprep.subr.bf16.mxu0 0
        %3247 = vmatpush1.bf16.msra.mxu0 %v3222
        %3248 = vmatprep.subr.bf16.mxu0 0
        %3249 = vmatpush1.bf16.msra.mxu0 %v3221
        %3250 = vmatprep.subr.bf16.mxu0 0
        %3251 = vmatpush1.bf16.msra.mxu0 %v3220
        %3252 = vmatprep.subr.bf16.mxu0 0
        %3253 = vmatpush2.bf16.msra.mxu0 0
        %3254 = vmatprep.subr.bf16.mxu0 0
        %3255 = vmatpush2.bf16.msra.mxu0 0
        %3256 = vmatprep.subr.bf16.mxu0 0
        %3257 = vmatpush2.bf16.msra.mxu0 0
        %3258 = vmatprep.subr.bf16.mxu0 0
        %3259 = vmatpush2.bf16.msra.mxu0 0
        %3260 = vmatprep.subr.bf16.mxu0 0
        %3261 = vmatpush2.bf16.msra.mxu0 0
        %3262 = vmatprep.subr.bf16.mxu0 0
        %3263 = vmatpush2.bf16.msra.mxu0 0
        %3264 = vmatprep.subr.bf16.mxu0 0
        %3265 = vmatpush2.bf16.msra.mxu0 0
        %3266 = vmatprep.subr.bf16.mxu0 0
        %3267 = vmatpush2.bf16.msra.mxu0 0
        %3268 = vmatprep.mubr.bf16.mxu0 0
        %3269 = vmatmul.mubr.bf16.gmra.mxu0 %v3171
        %v3270 = vpop.f32.mrf.mxu0
        %v3271 = vadd.f32 0.0, %v3270
        %v3272 = vpop.f32.mrf.mxu0
        %v3273 = vpop.f32.mrf.mxu0
        %v3274 = vadd.f32 0.0, %v3273
        %v3275 = vpop.f32.mrf.mxu0
        %3276 = vdwg.mxu0
        %v3277 = vadd.f32 %v3157, %v3271
        %v3278 = vadd.f32 %v3158, %v3274
        %v3279 = vld [vmem:[#allocation2 + $0x20] sm:$0xff]
        %v3280 = vld [vmem:[#allocation2 + $0x28] sm:$0xff]
        %v3281 = vpack.c.bf16 %v3280, %v3279
        %v3282 = vld [vmem:[%s3 + $0x1c0] sm:$0xf]
        %v3283 = vld [vmem:[%s3 + $0x1c4] sm:$0xf]
        %v3284 = vld [vmem:[%s3 + $0x1c8] sm:$0xf]
        %v3285 = vld [vmem:[%s3 + $0x1cc] sm:$0xf]
        %v3286 = vld [vmem:[%s3 + $0x1d0] sm:$0xf]
        %v3287 = vld [vmem:[%s3 + $0x1d4] sm:$0xf]
        %v3288 = vld [vmem:[%s3 + $0x1d8] sm:$0xf]
        %v3289 = vld [vmem:[%s3 + $0x1dc] sm:$0xf]
        %v3290 = vld [vmem:[%s3 + $0x1e0] sm:$0xf]
        %v3291 = vld [vmem:[%s3 + $0x1e4] sm:$0xf]
        %v3292 = vld [vmem:[%s3 + $0x1e8] sm:$0xf]
        %v3293 = vld [vmem:[%s3 + $0x1ec] sm:$0xf]
        %v3294 = vld [vmem:[%s3 + $0x1f0] sm:$0xf]
        %v3295 = vld [vmem:[%s3 + $0x1f4] sm:$0xf]
        %v3296 = vld [vmem:[%s3 + $0x1f8] sm:$0xf]
        %v3297 = vld [vmem:[%s3 + $0x1fc] sm:$0xf]
        %v3314 = vunpack.c.l.b16 %v3282
        %v3315 = vunpack.c.l.b16 %v3283
        %v3316 = vunpack.c.l.b16 %v3284
        %v3317 = vunpack.c.l.b16 %v3285
        %v3318 = vunpack.c.l.b16 %v3286
        %v3319 = vunpack.c.l.b16 %v3287
        %v3320 = vunpack.c.l.b16 %v3288
        %v3321 = vunpack.c.l.b16 %v3289
        %v3322 = vunpack.c.l.b16 %v3290
        %v3323 = vunpack.c.l.b16 %v3291
        %v3324 = vunpack.c.l.b16 %v3292
        %v3325 = vunpack.c.l.b16 %v3293
        %v3326 = vunpack.c.l.b16 %v3294
        %v3327 = vunpack.c.l.b16 %v3295
        %v3328 = vunpack.c.l.b16 %v3296
        %v3329 = vunpack.c.l.b16 %v3297
        %v3330 = vpack.c.b16 %v3315, %v3314
        %v3331 = vpack.c.b16 %v3317, %v3316
        %v3332 = vpack.c.b16 %v3319, %v3318
        %v3333 = vpack.c.b16 %v3321, %v3320
        %v3334 = vpack.c.b16 %v3323, %v3322
        %v3335 = vpack.c.b16 %v3325, %v3324
        %v3336 = vpack.c.b16 %v3327, %v3326
        %v3337 = vpack.c.b16 %v3329, %v3328
        %3346 = vmatprep.subr.bf16.mxu0 0
        %3347 = vmatpush1.bf16.msra.mxu0 %v3337
        %3348 = vmatprep.subr.bf16.mxu0 0
        %3349 = vmatpush1.bf16.msra.mxu0 %v3336
        %3350 = vmatprep.subr.bf16.mxu0 0
        %3351 = vmatpush1.bf16.msra.mxu0 %v3335
        %3352 = vmatprep.subr.bf16.mxu0 0
        %3353 = vmatpush1.bf16.msra.mxu0 %v3334
        %3354 = vmatprep.subr.bf16.mxu0 0
        %3355 = vmatpush1.bf16.msra.mxu0 %v3333
        %3356 = vmatprep.subr.bf16.mxu0 0
        %3357 = vmatpush1.bf16.msra.mxu0 %v3332
        %3358 = vmatprep.subr.bf16.mxu0 0
        %3359 = vmatpush1.bf16.msra.mxu0 %v3331
        %3360 = vmatprep.subr.bf16.mxu0 0
        %3361 = vmatpush1.bf16.msra.mxu0 %v3330
        %3362 = vmatprep.subr.bf16.mxu0 0
        %3363 = vmatpush2.bf16.msra.mxu0 0
        %3364 = vmatprep.subr.bf16.mxu0 0
        %3365 = vmatpush2.bf16.msra.mxu0 0
        %3366 = vmatprep.subr.bf16.mxu0 0
        %3367 = vmatpush2.bf16.msra.mxu0 0
        %3368 = vmatprep.subr.bf16.mxu0 0
        %3369 = vmatpush2.bf16.msra.mxu0 0
        %3370 = vmatprep.subr.bf16.mxu0 0
        %3371 = vmatpush2.bf16.msra.mxu0 0
        %3372 = vmatprep.subr.bf16.mxu0 0
        %3373 = vmatpush2.bf16.msra.mxu0 0
        %3374 = vmatprep.subr.bf16.mxu0 0
        %3375 = vmatpush2.bf16.msra.mxu0 0
        %3376 = vmatprep.subr.bf16.mxu0 0
        %3377 = vmatpush2.bf16.msra.mxu0 0
        %3378 = vmatprep.mubr.bf16.mxu0 0
        %3379 = vmatmul.mubr.bf16.gmra.mxu0 %v3281
        %v3380 = vpop.f32.mrf.mxu0
        %v3381 = vadd.f32 0.0, %v3380
        %v3382 = vpop.f32.mrf.mxu0
        %v3383 = vpop.f32.mrf.mxu0
        %v3384 = vadd.f32 0.0, %v3383
        %v3385 = vpop.f32.mrf.mxu0
        %3386 = vdwg.mxu0
        %v3387 = vadd.f32 %v3277, %v3381
        %v3388 = vadd.f32 %v3278, %v3384
        %v3389 = vld [vmem:[#allocation2 + $0x30] sm:$0xff]
        %v3390 = vld [vmem:[#allocation2 + $0x38] sm:$0xff]
        %v3391 = vpack.c.bf16 %v3390, %v3389
        %v3392 = vld [vmem:[%s3 + $0x200] sm:$0xf]
        %v3393 = vld [vmem:[%s3 + $0x204] sm:$0xf]
        %v3394 = vld [vmem:[%s3 + $0x208] sm:$0xf]
        %v3395 = vld [vmem:[%s3 + $0x20c] sm:$0xf]
        %v3396 = vld [vmem:[%s3 + $0x210] sm:$0xf]
        %v3397 = vld [vmem:[%s3 + $0x214] sm:$0xf]
        %v3398 = vld [vmem:[%s3 + $0x218] sm:$0xf]
        %v3399 = vld [vmem:[%s3 + $0x21c] sm:$0xf]
        %v3400 = vld [vmem:[%s3 + $0x220] sm:$0xf]
        %v3401 = vld [vmem:[%s3 + $0x224] sm:$0xf]
        %v3402 = vld [vmem:[%s3 + $0x228] sm:$0xf]
        %v3403 = vld [vmem:[%s3 + $0x22c] sm:$0xf]
        %v3404 = vld [vmem:[%s3 + $0x230] sm:$0xf]
        %v3405 = vld [vmem:[%s3 + $0x234] sm:$0xf]
        %v3406 = vld [vmem:[%s3 + $0x238] sm:$0xf]
        %v3407 = vld [vmem:[%s3 + $0x23c] sm:$0xf]
        %v3424 = vunpack.c.l.b16 %v3392
        %v3425 = vunpack.c.l.b16 %v3393
        %v3426 = vunpack.c.l.b16 %v3394
        %v3427 = vunpack.c.l.b16 %v3395
        %v3428 = vunpack.c.l.b16 %v3396
        %v3429 = vunpack.c.l.b16 %v3397
        %v3430 = vunpack.c.l.b16 %v3398
        %v3431 = vunpack.c.l.b16 %v3399
        %v3432 = vunpack.c.l.b16 %v3400
        %v3433 = vunpack.c.l.b16 %v3401
        %v3434 = vunpack.c.l.b16 %v3402
        %v3435 = vunpack.c.l.b16 %v3403
        %v3436 = vunpack.c.l.b16 %v3404
        %v3437 = vunpack.c.l.b16 %v3405
        %v3438 = vunpack.c.l.b16 %v3406
        %v3439 = vunpack.c.l.b16 %v3407
        %v3440 = vpack.c.b16 %v3425, %v3424
        %v3441 = vpack.c.b16 %v3427, %v3426
        %v3442 = vpack.c.b16 %v3429, %v3428
        %v3443 = vpack.c.b16 %v3431, %v3430
        %v3444 = vpack.c.b16 %v3433, %v3432
        %v3445 = vpack.c.b16 %v3435, %v3434
        %v3446 = vpack.c.b16 %v3437, %v3436
        %v3447 = vpack.c.b16 %v3439, %v3438
        %3456 = vmatprep.subr.bf16.mxu0 0
        %3457 = vmatpush1.bf16.msra.mxu0 %v3447
        %3458 = vmatprep.subr.bf16.mxu0 0
        %3459 = vmatpush1.bf16.msra.mxu0 %v3446
        %3460 = vmatprep.subr.bf16.mxu0 0
        %3461 = vmatpush1.bf16.msra.mxu0 %v3445
        %3462 = vmatprep.subr.bf16.mxu0 0
        %3463 = vmatpush1.bf16.msra.mxu0 %v3444
        %3464 = vmatprep.subr.bf16.mxu0 0
        %3465 = vmatpush1.bf16.msra.mxu0 %v3443
        %3466 = vmatprep.subr.bf16.mxu0 0
        %3467 = vmatpush1.bf16.msra.mxu0 %v3442
        %3468 = vmatprep.subr.bf16.mxu0 0
        %3469 = vmatpush1.bf16.msra.mxu0 %v3441
        %3470 = vmatprep.subr.bf16.mxu0 0
        %3471 = vmatpush1.bf16.msra.mxu0 %v3440
        %3472 = vmatprep.subr.bf16.mxu0 0
        %3473 = vmatpush2.bf16.msra.mxu0 0
        %3474 = vmatprep.subr.bf16.mxu0 0
        %3475 = vmatpush2.bf16.msra.mxu0 0
        %3476 = vmatprep.subr.bf16.mxu0 0
        %3477 = vmatpush2.bf16.msra.mxu0 0
        %3478 = vmatprep.subr.bf16.mxu0 0
        %3479 = vmatpush2.bf16.msra.mxu0 0
        %3480 = vmatprep.subr.bf16.mxu0 0
        %3481 = vmatpush2.bf16.msra.mxu0 0
        %3482 = vmatprep.subr.bf16.mxu0 0
        %3483 = vmatpush2.bf16.msra.mxu0 0
        %3484 = vmatprep.subr.bf16.mxu0 0
        %3485 = vmatpush2.bf16.msra.mxu0 0
        %3486 = vmatprep.subr.bf16.mxu0 0
        %3487 = vmatpush2.bf16.msra.mxu0 0
        %3488 = vmatprep.mubr.bf16.mxu0 0
        %3489 = vmatmul.mubr.bf16.gmra.mxu0 %v3391
        %v3490 = vpop.f32.mrf.mxu0
        %v3491 = vadd.f32 0.0, %v3490
        %v3492 = vpop.f32.mrf.mxu0
        %v3493 = vpop.f32.mrf.mxu0
        %v3494 = vadd.f32 0.0, %v3493
        %v3495 = vpop.f32.mrf.mxu0
        %3496 = vdwg.mxu0
        %v3497 = vadd.f32 %v3387, %v3491
        %v3498 = vadd.f32 %v3388, %v3494
        %v3499 = vld [vmem:[%s4] sm:$0x1]
        %v3501 = vlaneseq
        %v3502 = vshrl.u32 %v3501, 7
        %v3503 = vsub.s32 0, %v3502
        %v3504 = vrot.slane %v3499, %v3503
        %v3506 = vadd.f32 %v3497, %v3504
        %v3507 = vadd.f32 %v3498, %v3504
        %v3508 = vmax.f32 %v3506, 0.0
        %v3509 = vmax.f32 %v3507, 0.0
        %vm3510 = vcmask 261120
        %v3511 = vsel %vm3510, %v3508, 0.0
        %v3512 = vsel %vm3510, %v3509, 0.0
        %v3513 = vadd.f32 %v3511, %v3512
        %v3514 = vrot.slane %v3513, 4
        %v3515 = vadd.f32 %v3513, %v3514
        %v3516 = vrot.slane %v3515, 2
        %v3517 = vadd.f32 %v3515, %v3516
        %v3518 = vrot.slane %v3517, 1
        %v3519 = vadd.f32 %v3517, %v3518
        %v3520 = vmul.f32 %v3519, 0.0625
        %v3521 = vld [vmem:[%s5] sm:$0xff]
        %v3522 = vld [vmem:[%s5 + $0x8] sm:$0xff]
        %v3523 = vld [vmem:[%s5 + $0x10] sm:$0xff]
        %v3524 = vld [vmem:[%s5 + $0x18] sm:$0xff]
        %v3525 = vld [vmem:[%s6] sm:$0x1]
        %v3527 = vsel %vm3510, %v3520, 0
        %3529 = vmatprep.subr.mxu0 0.0
        %3530 = vmatpush1.msra.mxu0 0.0
        %3531 = vmatprep.subr.mxu0 0.0
        %3532 = vmatpush1.msra.mxu0 0.0
        %3533 = vmatprep.subr.mxu0 0.0
        %3534 = vmatpush1.msra.mxu0 0.0
        %3535 = vmatprep.subr.mxu0 0.0
        %3536 = vmatpush1.msra.mxu0 0.0
        %3537 = vmatprep.subr.mxu0 0.0
        %3538 = vmatpush1.msra.mxu0 0.0
        %3539 = vmatprep.subr.mxu0 0.0
        %3540 = vmatpush1.msra.mxu0 0.0
        %3541 = vmatprep.subr.mxu0 0.0
        %3542 = vmatpush1.msra.mxu0 0.0
        %3543 = vmatprep.subr.mxu0 0.0
        %3544 = vmatpush1.msra.mxu0 0.0
        %3545 = vmatprep.subr.mxu0 0.0
        %3546 = vmatpush1.msra.mxu0 0.0
        %3547 = vmatprep.subr.mxu0 0.0
        %3548 = vmatpush1.msra.mxu0 0.0
        %3549 = vmatprep.subr.mxu0 0.0
        %3550 = vmatpush1.msra.mxu0 0.0
        %3551 = vmatprep.subr.mxu0 0.0
        %3552 = vmatpush1.msra.mxu0 0.0
        %3553 = vmatprep.subr.mxu0 0.0
        %3554 = vmatpush1.msra.mxu0 %v3524
        %3555 = vmatprep.subr.mxu0 0.0
        %3556 = vmatpush1.msra.mxu0 %v3523
        %3557 = vmatprep.subr.mxu0 0.0
        %3558 = vmatpush1.msra.mxu0 %v3522
        %3559 = vmatprep.subr.mxu0 0.0
        %3560 = vmatpush1.msra.mxu0 %v3521
        %3561 = vmatprep.subr.mxu0 0.0
        %3562 = vmatpush2.msra.mxu0 0.0
        %3563 = vmatprep.subr.mxu0 0.0
        %3564 = vmatpush2.msra.mxu0 0.0
        %3565 = vmatprep.subr.mxu0 0.0
        %3566 = vmatpush2.msra.mxu0 0.0
        %3567 = vmatprep.subr.mxu0 0.0
        %3568 = vmatpush2.msra.mxu0 0.0
        %3569 = vmatprep.subr.mxu0 0.0
        %3570 = vmatpush2.msra.mxu0 0.0
        %3571 = vmatprep.subr.mxu0 0.0
        %3572 = vmatpush2.msra.mxu0 0.0
        %3573 = vmatprep.subr.mxu0 0.0
        %3574 = vmatpush2.msra.mxu0 0.0
        %3575 = vmatprep.subr.mxu0 0.0
        %3576 = vmatpush2.msra.mxu0 0.0
        %3577 = vmatprep.subr.mxu0 0.0
        %3578 = vmatpush2.msra.mxu0 0.0
        %3579 = vmatprep.subr.mxu0 0.0
        %3580 = vmatpush2.msra.mxu0 0.0
        %3581 = vmatprep.subr.mxu0 0.0
        %3582 = vmatpush2.msra.mxu0 0.0
        %3583 = vmatprep.subr.mxu0 0.0
        %3584 = vmatpush2.msra.mxu0 0.0
        %3585 = vmatprep.subr.mxu0 0.0
        %3586 = vmatpush2.msra.mxu0 0.0
        %3587 = vmatprep.subr.mxu0 0.0
        %3588 = vmatpush2.msra.mxu0 0.0
        %3589 = vmatprep.subr.mxu0 0.0
        %3590 = vmatpush2.msra.mxu0 0.0
        %3591 = vmatprep.subr.mxu0 0.0
        %3592 = vmatpush2.msra.mxu0 0.0
        %3593 = vmatprep.mubr.f32.mxu0 0.0
        %3594 = vmatmul.mubr.f32.gmra.mxu0 %v3527
        %v3595 = vpop.f32.mrf.mxu0
        %v3596 = vadd.f32 %v3525, %v3595
        %v3597 = vpop.f32.mrf.mxu0
        %3598 = vdwg.mxu0
        %vm3599 = vcmask 8192
        %3600 = vst.msk [vmem:[%s270] sm:$0x1] %vm3599, %v3596
        %s3601 = sand.u32 %s181, 1
        %s3602 = scalar_lea.sflag [#allocation5], %s3601
        %s3603 = sand.u32 %s181, 1
        %s3604 = scalar_lea.vmem [#allocation4], %s3603
        // Predicated region
        $region49: #{netd_forward.1} parent=47 // pred_check
          %p3605 = pneg %p191
        $region50: #{netd_forward.1} parent=47 // pred_check_branch
          %3607 = sbr.rel (%p3605) target = $region52
        $region51: #{netd_forward.1} parent=47 // pred_region
          %s3609 = ssub.s32 16, 16
          %3610 = vsyncadd %s3602, %s3609
          %s3611 = smul.addr %s21, 16
          %s3612 = scalar_lea.hbm %s7, %s3611
          %s3614 = sshll.u32 %s3604, 4
          %s3615 = int_to_ptr.vmem [resolvable:$true] %s3614
          %3617 = dma.vmem_to_hbm [thread:$0]  %s3615, 16, %s3612, %s3602
        $region52: #{netd_forward.1} parent=47 // pred_fallthru
          _
      $region48: #{netd_forward.1} parent=5 // pred_fallthru
        _
      %p3618 = scmp.le.s32.totalorder 2, %s16
      // Predicated region
      $region53: #{netd_forward.1} parent=5 // pred_check
        %p3619 = pneg %p3618
      $region54: #{netd_forward.1} parent=5 // pred_check_branch
        %3621 = sbr.rel (%p3619) target = $region56
      $region55: #{netd_forward.1} parent=5 // pred_region
        %s3622 = ssub.s32 %s16, 2
        // Predicated region
        $region57: #{netd_forward.1} parent=55 // pred_check
          %p3623 = pneg %p197
        $region58: #{netd_forward.1} parent=55 // pred_check_branch
          %3625 = sbr.rel (%p3623) target = $region60
        $region59: #{netd_forward.1} parent=55 // pred_region
          %s3626 = sand.u32 %s182, 1
          %s3627 = scalar_lea.sflag [#allocation5], %s3626
          %s3628 = sand.u32 %s182, 1
          %s3629 = scalar_lea.vmem [#allocation4], %s3628
          %3630 = dma.done %s3627, 16
        $region60: #{netd_forward.1} parent=55 // pred_fallthru
          _
      $region56: #{netd_forward.1} parent=5 // pred_fallthru
        _
    $region6: #{netd_forward.1} parent=1 // loop_footer
      %s20 = sadd.s32 1, %s16
    $region7: #{netd_forward.1} parent=1 // loop_footer_branch
      %15 = sbr.rel target = $region3
    $region8: #{netd_forward.1} parent=1 // loop_exit
      _
    %3631 = vsyncpa [#allocation5], 1
    %s3632 = scalar_lea.sflag [#allocation5], 1
    %3633 = vsyncpa %s3632, 1

</llo_original>
